<compile_context>
chip_gen: v5e
topology: v5e:2x2
jax: 0.10.0
libtpu: 0.0.40
codegen_flags: <defaults>
</compile_context>

<pallas_src>
import jax
import jax.numpy as jnp
from jax.experimental import pallas as pl
from jax.experimental.pallas import tpu as pltpu

HIDDEN = 1000          # logical hidden width (matches the PyTorch module)
HIDDEN_PAD = 1024      # padded to a multiple of 128 lanes
LABEL_PAD = 128        # output padded to a full lane width


def _round_up(x, m):
    return (x + m - 1) // m * m


# ---------------------------------------------------------------------------
# Kernel: one batch tile per grid step, all weights VMEM-resident.
# ---------------------------------------------------------------------------
def _mlp_kernel(x_ref, w1_ref, b1_ref, w2_ref, b2_ref, w3_ref, b3_ref, o_ref):
    # In-kernel bf16 cast of the activations (rides a free VPU slot; avoids a
    # separate wrapper-side cast + extra HBM pass over x).
    x = x_ref[...].astype(jnp.bfloat16)
    # fc1 + ReLU  (bf16 x bf16 -> f32 accumulate)
    h1 = jnp.dot(x, w1_ref[...], preferred_element_type=jnp.float32)
    h1 = jnp.maximum(h1 + b1_ref[...], 0.0).astype(jnp.bfloat16)
    # fc2 + ReLU
    h2 = jnp.dot(h1, w2_ref[...], preferred_element_type=jnp.float32)
    h2 = jnp.maximum(h2 + b2_ref[...], 0.0).astype(jnp.bfloat16)
    # fc3 + Sigmoid (lane-dense padded output, unmasked vst)
    logits = jnp.dot(h2, w3_ref[...], preferred_element_type=jnp.float32)
    o_ref[...] = jax.nn.sigmoid(logits + b3_ref[...])


# ---------------------------------------------------------------------------
# Parameter preparation: pad once, cast weights to bf16, keep biases f32.
# ---------------------------------------------------------------------------
def prepare_params(params):
    """Takes torch-layout params (W as (in, out), b as (1, out)) and returns
    padded/bf16 params for the kernel plus the logical num_labels."""
    w1, b1, w2, b2, w3, b3 = params
    latent = w1.shape[0]
    num_labels = w3.shape[1]
    n_pad = _round_up(num_labels, LABEL_PAD)

    def pad2(a, rows, cols):
        return jnp.pad(a, ((0, rows - a.shape[0]), (0, cols - a.shape[1])))

    w1p = pad2(w1, latent, HIDDEN_PAD).astype(jnp.bfloat16)
    b1p = pad2(b1.reshape(1, -1), 1, HIDDEN_PAD).astype(jnp.float32)
    w2p = pad2(w2, HIDDEN_PAD, HIDDEN_PAD).astype(jnp.bfloat16)
    b2p = pad2(b2.reshape(1, -1), 1, HIDDEN_PAD).astype(jnp.float32)
    w3p = pad2(w3, HIDDEN_PAD, n_pad).astype(jnp.bfloat16)
    b3p = pad2(b3.reshape(1, -1), 1, n_pad).astype(jnp.float32)
    return (w1p, b1p, w2p, b2p, w3p, b3p), num_labels


def _choose_tm(B, tile_m):
    """Pick batch tile so (a) per-step overhead is amortized, (b) padding
    waste is at most one 16-row group, (c) v7x megacore gets >= 2 steps."""
    n_tiles = pl.cdiv(B, tile_m)
    if B >= 32:
        n_tiles = max(n_tiles, 2)          # >=2 parallel steps for v7x's 2 TCs
    return _round_up(pl.cdiv(B, n_tiles), 16)


# ---------------------------------------------------------------------------
# Forward wrapper.
# ---------------------------------------------------------------------------
def classifier_forward(x, prepped, num_labels, tile_m=512):
    """x: (B, latent) float32. Returns (B, num_labels) float32 in [0, 1]."""
    w1, b1, w2, b2, w3, b3 = prepped
    B, L = x.shape
    Hp = w1.shape[1]
    Np = w3.shape[1]

    TM = _choose_tm(B, tile_m)
    Bp = _round_up(B, TM)

    # Only pad the batch when needed (padded rows are zero -> sliced away).
    xp = x if Bp == B else jnp.pad(x, ((0, Bp - B), (0, 0)))

    grid = (Bp // TM,)

    flops = 2 * Bp * (L * Hp + Hp * Hp + Hp * Np)
    bytes_accessed = (
        xp.size * 4
        + (w1.size + w2.size + w3.size) * 2
        + (b1.size + b2.size + b3.size) * 4
        + Bp * Np * 4
    )

    out = pl.pallas_call(
        _mlp_kernel,
        out_shape=jax.ShapeDtypeStruct((Bp, Np), jnp.float32),
        grid_spec=pltpu.PrefetchScalarGridSpec(
            num_scalar_prefetch=0,
            grid=grid,
            in_specs=[
                pl.BlockSpec((TM, L), lambda i: (i, 0)),   # x: tiled over batch
                pl.BlockSpec((L, Hp), lambda i: (0, 0)),   # w1: VMEM-resident
                pl.BlockSpec((1, Hp), lambda i: (0, 0)),   # b1
                pl.BlockSpec((Hp, Hp), lambda i: (0, 0)),  # w2
                pl.BlockSpec((1, Hp), lambda i: (0, 0)),   # b2
                pl.BlockSpec((Hp, Np), lambda i: (0, 0)),  # w3
                pl.BlockSpec((1, Np), lambda i: (0, 0)),   # b3
            ],
            out_specs=pl.BlockSpec((TM, Np), lambda i: (i, 0)),
        ),
        compiler_params=pltpu.CompilerParams(
            dimension_semantics=("parallel",),
            # Cover bf16 weights (double-buffered) + f32/bf16 h1/h2 scratch at
            # TM up to ~1024 on all generations (v5e default scoped is 16 MiB;
            # v7x physical is 64 MiB so 48 MiB is safe).
            vmem_limit_bytes=48 << 20,
        ),
        cost_estimate=pl.CostEstimate(
            flops=flops,
            transcendentals=Bp * Np,
            bytes_accessed=bytes_accessed,
        ),
    )(xp, w1, b1, w2, b2, w3, b3)

    return out[:B, :num_labels]


# ---------------------------------------------------------------------------
# Init (PyTorch Linear-style uniform ranges, torch layout) + fp32 reference.
# ---------------------------------------------------------------------------
def init_params(latent_size, num_labels=1, seed=0):
    keys = jax.random.split(jax.random.PRNGKey(seed), 6)

    def linear(kw, kb, fan_in, fan_out):
        bound = 1.0 / jnp.sqrt(fan_in)
        w = jax.random.uniform(kw, (fan_in, fan_out), jnp.float32, -bound, bound)
        b = jax.random.uniform(kb, (1, fan_out), jnp.float32, -bound, bound)
        return w, b

    w1, b1 = linear(keys[0], keys[1], latent_size, HIDDEN)
    w2, b2 = linear(keys[2], keys[3], HIDDEN, HIDDEN)
    w3, b3 = linear(keys[4], keys[5], HIDDEN, num_labels)
    return (w1, b1, w2, b2, w3, b3)


def _reference(x, params):
    w1, b1, w2, b2, w3, b3 = params
    h1 = jnp.maximum(x @ w1 + b1, 0.0)
    h2 = jnp.maximum(h1 @ w2 + b2, 0.0)
    return jax.nn.sigmoid(h2 @ w3 + b3)


if __name__ == "__main__":
    latent_size = 32
    num_labels = 1
    batch = 8

    params = init_params(latent_size, num_labels, seed=0)
    prepped, n_labels = prepare_params(params)

    x = jax.random.normal(jax.random.PRNGKey(0), (batch, latent_size), jnp.float32)

    out = classifier_forward(x, prepped, n_labels)
    out = jax.block_until_ready(out)

    ref = _reference(x, params)
    assert out.shape == (batch, num_labels)
    # bf16 weights/activations with f32 accumulation -> small deviation vs f32 ref.
    assert jnp.allclose(out, ref, atol=2e-2, rtol=2e-2), (out, ref)
    assert bool(jnp.all((out >= 0.0) & (out <= 1.0)))

    print("KERNEL_OK")
</pallas_src>

<mosaic_0001>
module attributes {stable_mosaic.version = 11 : i64} {
  func.func @_mlp_kernel(%arg0: i32, %arg1: memref<16x32xf32, #tpu.memory_space<vmem>>, %arg2: memref<32x1024xbf16, #tpu.memory_space<vmem>>, %arg3: memref<1x1024xf32, #tpu.memory_space<vmem>>, %arg4: memref<1024x1024xbf16, #tpu.memory_space<vmem>>, %arg5: memref<1x1024xf32, #tpu.memory_space<vmem>>, %arg6: memref<1024x128xbf16, #tpu.memory_space<vmem>>, %arg7: memref<1x128xf32, #tpu.memory_space<vmem>>, %arg8: memref<16x128xf32, #tpu.memory_space<vmem>>) attributes {dimension_semantics = [#tpu.dimension_semantics<parallel>], iteration_bounds = array<i64: 1>, scalar_prefetch = 0 : i64, scratch_operands = 0 : i64, tpu.core_type = #tpu.core_type<tc>, window_params = [{transform_indices = @transform_0, window_bounds = array<i64: 16, 32>}, {pipeline_mode = #tpu.pipeline_mode<synchronous>, transform_indices = @transform_1, window_bounds = array<i64: 32, 1024>}, {pipeline_mode = #tpu.pipeline_mode<synchronous>, transform_indices = @transform_2, window_bounds = array<i64: 1, 1024>}, {pipeline_mode = #tpu.pipeline_mode<synchronous>, transform_indices = @transform_3, window_bounds = array<i64: 1024, 1024>}, {pipeline_mode = #tpu.pipeline_mode<synchronous>, transform_indices = @transform_4, window_bounds = array<i64: 1, 1024>}, {pipeline_mode = #tpu.pipeline_mode<synchronous>, transform_indices = @transform_5, window_bounds = array<i64: 1024, 128>}, {pipeline_mode = #tpu.pipeline_mode<synchronous>, transform_indices = @transform_6, window_bounds = array<i64: 1, 128>}, {transform_indices = @transform_7, window_bounds = array<i64: 16, 128>}]} {
    %c0 = arith.constant 0 : index
    %c0_0 = arith.constant 0 : index
    %0 = vector.load %arg1[%c0, %c0_0] : memref<16x32xf32, #tpu.memory_space<vmem>>, vector<16x32xf32>
    %1 = arith.truncf %0 : vector<16x32xf32> to vector<16x32xbf16>
    %c0_1 = arith.constant 0 : index
    %c0_2 = arith.constant 0 : index
    %2 = vector.load %arg2[%c0_1, %c0_2] : memref<32x1024xbf16, #tpu.memory_space<vmem>>, vector<32x1024xbf16>
    %cst = arith.constant dense<0.000000e+00> : vector<16x1024xf32>
    %3 = tpu.matmul %1, %2, %cst {dimension_numbers = #tpu.dot_dimension_numbers<[1], [0], [0], [1], [0, 0, 1, 1], [], []>} : vector<16x32xbf16>, vector<32x1024xbf16>, vector<16x1024xf32> -> vector<16x1024xf32>
    %c0_3 = arith.constant 0 : index
    %c0_4 = arith.constant 0 : index
    %4 = vector.load %arg3[%c0_3, %c0_4] : memref<1x1024xf32, #tpu.memory_space<vmem>>, vector<1x1024xf32>
    %5 = vector.broadcast %4 : vector<1x1024xf32> to vector<16x1024xf32>
    %6 = arith.addf %3, %5 : vector<16x1024xf32>
    %cst_5 = arith.constant 0.000000e+00 : f32
    %7 = vector.broadcast %cst_5 : f32 to vector<16x1024xf32>
    %8 = arith.maximumf %6, %7 : vector<16x1024xf32>
    %9 = arith.truncf %8 : vector<16x1024xf32> to vector<16x1024xbf16>
    %c0_6 = arith.constant 0 : index
    %c0_7 = arith.constant 0 : index
    %10 = vector.load %arg4[%c0_6, %c0_7] : memref<1024x1024xbf16, #tpu.memory_space<vmem>>, vector<1024x1024xbf16>
    %cst_8 = arith.constant dense<0.000000e+00> : vector<16x1024xf32>
    %11 = tpu.matmul %9, %10, %cst_8 {dimension_numbers = #tpu.dot_dimension_numbers<[1], [0], [0], [1], [0, 0, 1, 1], [], []>} : vector<16x1024xbf16>, vector<1024x1024xbf16>, vector<16x1024xf32> -> vector<16x1024xf32>
    %c0_9 = arith.constant 0 : index
    %c0_10 = arith.constant 0 : index
    %12 = vector.load %arg5[%c0_9, %c0_10] : memref<1x1024xf32, #tpu.memory_space<vmem>>, vector<1x1024xf32>
    %13 = vector.broadcast %12 : vector<1x1024xf32> to vector<16x1024xf32>
    %14 = arith.addf %11, %13 : vector<16x1024xf32>
    %cst_11 = arith.constant 0.000000e+00 : f32
    %15 = vector.broadcast %cst_11 : f32 to vector<16x1024xf32>
    %16 = arith.maximumf %14, %15 : vector<16x1024xf32>
    %17 = arith.truncf %16 : vector<16x1024xf32> to vector<16x1024xbf16>
    %c0_12 = arith.constant 0 : index
    %c0_13 = arith.constant 0 : index
    %18 = vector.load %arg6[%c0_12, %c0_13] : memref<1024x128xbf16, #tpu.memory_space<vmem>>, vector<1024x128xbf16>
    %cst_14 = arith.constant dense<0.000000e+00> : vector<16x128xf32>
    %19 = tpu.matmul %17, %18, %cst_14 {dimension_numbers = #tpu.dot_dimension_numbers<[1], [0], [0], [1], [0, 0, 1, 1], [], []>} : vector<16x1024xbf16>, vector<1024x128xbf16>, vector<16x128xf32> -> vector<16x128xf32>
    %c0_15 = arith.constant 0 : index
    %c0_16 = arith.constant 0 : index
    %20 = vector.load %arg7[%c0_15, %c0_16] : memref<1x128xf32, #tpu.memory_space<vmem>>, vector<1x128xf32>
    %21 = vector.broadcast %20 : vector<1x128xf32> to vector<16x128xf32>
    %22 = arith.addf %19, %21 : vector<16x128xf32>
    %23 = arith.negf %22 : vector<16x128xf32>
    %24 = math.exp %23 : vector<16x128xf32>
    %cst_17 = arith.constant 1.000000e+00 : f32
    %25 = vector.broadcast %cst_17 : f32 to vector<16x128xf32>
    %26 = arith.addf %25, %24 : vector<16x128xf32>
    %27 = arith.divf %25, %26 : vector<16x128xf32>
    %c0_18 = arith.constant 0 : index
    %c0_19 = arith.constant 0 : index
    %28 = vector.load %arg8[%c0_18, %c0_19] : memref<16x128xf32, #tpu.memory_space<vmem>>, vector<16x128xf32>
    tpu.vector_store %arg8[%c0_18, %c0_19], %27 {strides = array<i32>} : memref<16x128xf32, #tpu.memory_space<vmem>>, vector<16x128xf32>,
    return
  }
  func.func @transform_0(%arg0: i32) -> (i32, i32) {
    %c0_i32 = arith.constant 0 : i32
    %c0_i32_0 = arith.constant 0 : i32
    return %arg0, %c0_i32 : i32, i32
  }
  func.func @transform_1(%arg0: i32) -> (i32, i32) {
    %c0_i32 = arith.constant 0 : i32
    %c0_i32_0 = arith.constant 0 : i32
    %c0_i32_1 = arith.constant 0 : i32
    return %c0_i32, %c0_i32_0 : i32, i32
  }
  func.func @transform_2(%arg0: i32) -> (i32, i32) {
    %c0_i32 = arith.constant 0 : i32
    %c0_i32_0 = arith.constant 0 : i32
    %c0_i32_1 = arith.constant 0 : i32
    return %c0_i32, %c0_i32_0 : i32, i32
  }
  func.func @transform_3(%arg0: i32) -> (i32, i32) {
    %c0_i32 = arith.constant 0 : i32
    %c0_i32_0 = arith.constant 0 : i32
    %c0_i32_1 = arith.constant 0 : i32
    return %c0_i32, %c0_i32_0 : i32, i32
  }
  func.func @transform_4(%arg0: i32) -> (i32, i32) {
    %c0_i32 = arith.constant 0 : i32
    %c0_i32_0 = arith.constant 0 : i32
    %c0_i32_1 = arith.constant 0 : i32
    return %c0_i32, %c0_i32_0 : i32, i32
  }
  func.func @transform_5(%arg0: i32) -> (i32, i32) {
    %c0_i32 = arith.constant 0 : i32
    %c0_i32_0 = arith.constant 0 : i32
    %c0_i32_1 = arith.constant 0 : i32
    return %c0_i32, %c0_i32_0 : i32, i32
  }
  func.func @transform_6(%arg0: i32) -> (i32, i32) {
    %c0_i32 = arith.constant 0 : i32
    %c0_i32_0 = arith.constant 0 : i32
    %c0_i32_1 = arith.constant 0 : i32
    return %c0_i32, %c0_i32_0 : i32, i32
  }
  func.func @transform_7(%arg0: i32) -> (i32, i32) {
    %c0_i32 = arith.constant 0 : i32
    %c0_i32_0 = arith.constant 0 : i32
    return %arg0, %c0_i32 : i32, i32
  }
}

</mosaic_0001>

<llo_original>
// kernel: tpu_custom_call.1
$region0: #{tpu_custom_call.1}
  #allocation0 [shape = 'u32[]', space=smem, size = 0x4, offset = 0x4, fixed_abs, tag = 'smem constant byte address 0x4 - core index']
  #allocation1 [shape = 'u32[72,128]{1,0:T(1,128)}', space=vmem, size = 0x9000, scoped, tag = 'internal scratch']
  %s0 = inlined_call_operand.hbm [shape: f32[16,32], index: 0, kind: input, shape index: {}]
  %s1 = inlined_call_operand.hbm [shape: bf16[32,1024], index: 1, kind: input, shape index: {}]
  %s2 = inlined_call_operand.hbm [shape: f32[1,1024], index: 2, kind: input, shape index: {}]
  %s3 = inlined_call_operand.hbm [shape: bf16[1024,1024], index: 3, kind: input, shape index: {}]
  %s4 = inlined_call_operand.hbm [shape: f32[1,1024], index: 4, kind: input, shape index: {}]
  %s5 = inlined_call_operand.hbm [shape: bf16[1024,128], index: 5, kind: input, shape index: {}]
  %s6 = inlined_call_operand.hbm [shape: f32[1,128], index: 6, kind: input, shape index: {}]
  %s7 = inlined_call_operand.hbm [shape: f32[16,128], index: 7, kind: output, shape index: {}]
  %s8 = sld [smem:[#allocation0]]
  $region66: #{tpu_custom_call.1} parent=0
    _
  %s10 = ssub.s32 1, %s8
  %s11 = scalar_select 0, %s10, %s8
  $region1: #{tpu_custom_call.1} parent=0
    #allocation2 [shape = 'u8[8192]{0}', space=vmem, size = 0x2000, scoped, tag = 'input window, operand 0, single buffered']
    #allocation3 [shape = 's32[1]{0}', space=sflag, size = 0x4, scoped, tag = 'scoped memory for tpu_custom_call.1']
    #allocation4 [shape = 's32[1]{0}', space=sflag, size = 0x4, scoped, tag = 'scoped memory for tpu_custom_call.1']
    #allocation5 [shape = 'u8[65536]{0}', space=vmem, size = 0x10000, scoped, tag = 'input window, operand 1, single buffered']
    #allocation6 [shape = 's32[1]{0}', space=sflag, size = 0x4, scoped, tag = 'scoped memory for tpu_custom_call.1']
    #allocation7 [shape = 'u8[4096]{0}', space=vmem, size = 0x1000, scoped, tag = 'input window, operand 2, single buffered']
    #allocation8 [shape = 'u8[2097152]{0}', space=vmem, size = 0x200000, scoped, tag = 'input window, operand 3, single buffered']
    #allocation9 [shape = 's32[1]{0}', space=sflag, size = 0x4, scoped, tag = 'scoped memory for tpu_custom_call.1']
    #allocation10 [shape = 'u8[4096]{0}', space=vmem, size = 0x1000, scoped, tag = 'input window, operand 4, single buffered']
    #allocation11 [shape = 'u8[262144]{0}', space=vmem, size = 0x40000, scoped, tag = 'input window, operand 5, single buffered']
    #allocation12 [shape = 's32[1]{0}', space=sflag, size = 0x4, scoped, tag = 'scoped memory for tpu_custom_call.1']
    #allocation13 [shape = 'u8[512]{0}', space=vmem, size = 0x400, scoped, tag = 'input window, operand 6, single buffered']
    #allocation14 [shape = 'u8[8192]{0}', space=vmem, size = 0x2000, scoped, tag = 'output window, operand 0, single buffered']
    %12 = vsyncpa [#allocation3], 0
    %13 = vsyncpa [#allocation6], 0
    %14 = vsyncpa [#allocation9], 0
    %15 = vsyncpa [#allocation12], 0
    %16 = vsyncpa [#allocation4], 0
    // Predicated region
    $region2: #{tpu_custom_call.1} parent=1 // pred_check
      _
    $region3: #{tpu_custom_call.1} parent=1 // pred_check_branch
      %18 = sbr.rel (0) target = $region5
    $region4: #{tpu_custom_call.1} parent=1 // pred_region
      %20 = vsyncadd [#allocation3], 0
      %s21 = sshll.u32 %s0, 4
      %s22 = int_to_ptr.hbm [resolvable:$true] %s21
      %s23 = sshll.u32 [#allocation2], 4
      %s24 = int_to_ptr.vmem [resolvable:$true] %s23
      %29 = dma.hbm_to_vmem [thread:$0]  %s22, 256, %s24, [#allocation3], 128, 128, 8
    $region5: #{tpu_custom_call.1} parent=1 // pred_fallthru
      _
    // Predicated region
    $region6: #{tpu_custom_call.1} parent=1 // pred_check
      _
    $region7: #{tpu_custom_call.1} parent=1 // pred_check_branch
      %31 = sbr.rel (0) target = $region9
    $region8: #{tpu_custom_call.1} parent=1 // pred_region
      %33 = vsyncadd [#allocation6], 0
      %s34 = sshll.u32 %s1, 4
      %s35 = int_to_ptr.hbm [resolvable:$true] %s34
      %s36 = sshll.u32 [#allocation5], 4
      %s37 = int_to_ptr.vmem [resolvable:$true] %s36
      %42 = dma.hbm_to_vmem [thread:$0]  %s35, 2048, %s37, [#allocation6], 512, 512, 32
    $region9: #{tpu_custom_call.1} parent=1 // pred_fallthru
      _
    // Predicated region
    $region10: #{tpu_custom_call.1} parent=1 // pred_check
      _
    $region11: #{tpu_custom_call.1} parent=1 // pred_check_branch
      %44 = sbr.rel (0) target = $region13
    $region12: #{tpu_custom_call.1} parent=1 // pred_region
      %46 = vsyncadd [#allocation6], 0
      %s48 = sshll.u32 %s2, 4
      %s49 = int_to_ptr.hbm [resolvable:$true] %s48
      %s50 = sshll.u32 [#allocation7], 4
      %s51 = int_to_ptr.vmem [resolvable:$true] %s50
      %53 = dma.hbm_to_vmem [thread:$0]  %s49, 128, %s51, [#allocation6]
    $region13: #{tpu_custom_call.1} parent=1 // pred_fallthru
      _
    // Predicated region
    $region14: #{tpu_custom_call.1} parent=1 // pred_check
      _
    $region15: #{tpu_custom_call.1} parent=1 // pred_check_branch
      %55 = sbr.rel (0) target = $region17
    $region16: #{tpu_custom_call.1} parent=1 // pred_region
      %57 = vsyncadd [#allocation9], 0
      %s58 = sshll.u32 %s3, 4
      %s59 = int_to_ptr.hbm [resolvable:$true] %s58
      %s60 = sshll.u32 [#allocation8], 4
      %s61 = int_to_ptr.vmem [resolvable:$true] %s60
      %66 = dma.hbm_to_vmem [thread:$0]  %s59, 65536, %s61, [#allocation9], 512, 512, 32
    $region17: #{tpu_custom_call.1} parent=1 // pred_fallthru
      _
    // Predicated region
    $region18: #{tpu_custom_call.1} parent=1 // pred_check
      _
    $region19: #{tpu_custom_call.1} parent=1 // pred_check_branch
      %68 = sbr.rel (0) target = $region21
    $region20: #{tpu_custom_call.1} parent=1 // pred_region
      %70 = vsyncadd [#allocation9], 0
      %s72 = sshll.u32 %s4, 4
      %s73 = int_to_ptr.hbm [resolvable:$true] %s72
      %s74 = sshll.u32 [#allocation10], 4
      %s75 = int_to_ptr.vmem [resolvable:$true] %s74
      %77 = dma.hbm_to_vmem [thread:$0]  %s73, 128, %s75, [#allocation9]
    $region21: #{tpu_custom_call.1} parent=1 // pred_fallthru
      _
    // Predicated region
    $region22: #{tpu_custom_call.1} parent=1 // pred_check
      _
    $region23: #{tpu_custom_call.1} parent=1 // pred_check_branch
      %79 = sbr.rel (0) target = $region25
    $region24: #{tpu_custom_call.1} parent=1 // pred_region
      %81 = vsyncadd [#allocation12], 0
      %s82 = sshll.u32 %s5, 4
      %s83 = int_to_ptr.hbm [resolvable:$true] %s82
      %s84 = sshll.u32 [#allocation11], 4
      %s85 = int_to_ptr.vmem [resolvable:$true] %s84
      %90 = dma.hbm_to_vmem [thread:$0]  %s83, 8192, %s85, [#allocation12], 64, 64, 4
    $region25: #{tpu_custom_call.1} parent=1 // pred_fallthru
      _
    // Predicated region
    $region26: #{tpu_custom_call.1} parent=1 // pred_check
      _
    $region27: #{tpu_custom_call.1} parent=1 // pred_check_branch
      %92 = sbr.rel (0) target = $region29
    $region28: #{tpu_custom_call.1} parent=1 // pred_region
      %94 = vsyncadd [#allocation12], 0
      %s96 = sshll.u32 %s6, 4
      %s97 = int_to_ptr.hbm [resolvable:$true] %s96
      %s98 = sshll.u32 [#allocation13], 4
      %s99 = int_to_ptr.vmem [resolvable:$true] %s98
      %101 = dma.hbm_to_vmem [thread:$0]  %s97, 16, %s99, [#allocation12]
    $region29: #{tpu_custom_call.1} parent=1 // pred_fallthru
      _
    // Predicated region
    $region30: #{tpu_custom_call.1} parent=1 // pred_check
      _
    $region31: #{tpu_custom_call.1} parent=1 // pred_check_branch
      %103 = sbr.rel (0) target = $region33
    $region32: #{tpu_custom_call.1} parent=1 // pred_region
      %105 = dma.done [#allocation3], 256
    $region33: #{tpu_custom_call.1} parent=1 // pred_fallthru
      _
    // Predicated region
    $region34: #{tpu_custom_call.1} parent=1 // pred_check
      _
    $region35: #{tpu_custom_call.1} parent=1 // pred_check_branch
      %107 = sbr.rel (0) target = $region37
    $region36: #{tpu_custom_call.1} parent=1 // pred_region
      %109 = dma.done [#allocation6], 2048
    $region37: #{tpu_custom_call.1} parent=1 // pred_fallthru
      _
    // Predicated region
    $region38: #{tpu_custom_call.1} parent=1 // pred_check
      _
    $region39: #{tpu_custom_call.1} parent=1 // pred_check_branch
      %111 = sbr.rel (0) target = $region41
    $region40: #{tpu_custom_call.1} parent=1 // pred_region
      %113 = dma.done [#allocation6], 128
    $region41: #{tpu_custom_call.1} parent=1 // pred_fallthru
      _
    // Predicated region
    $region42: #{tpu_custom_call.1} parent=1 // pred_check
      _
    $region43: #{tpu_custom_call.1} parent=1 // pred_check_branch
      %115 = sbr.rel (0) target = $region45
    $region44: #{tpu_custom_call.1} parent=1 // pred_region
      %117 = dma.done [#allocation9], 65536
    $region45: #{tpu_custom_call.1} parent=1 // pred_fallthru
      _
    // Predicated region
    $region46: #{tpu_custom_call.1} parent=1 // pred_check
      _
    $region47: #{tpu_custom_call.1} parent=1 // pred_check_branch
      %119 = sbr.rel (0) target = $region49
    $region48: #{tpu_custom_call.1} parent=1 // pred_region
      %121 = dma.done [#allocation9], 128
    $region49: #{tpu_custom_call.1} parent=1 // pred_fallthru
      _
    // Predicated region
    $region50: #{tpu_custom_call.1} parent=1 // pred_check
      _
    $region51: #{tpu_custom_call.1} parent=1 // pred_check_branch
      %123 = sbr.rel (0) target = $region53
    $region52: #{tpu_custom_call.1} parent=1 // pred_region
      %125 = dma.done [#allocation12], 8192
    $region53: #{tpu_custom_call.1} parent=1 // pred_fallthru
      _
    // Predicated region
    $region54: #{tpu_custom_call.1} parent=1 // pred_check
      _
    $region55: #{tpu_custom_call.1} parent=1 // pred_check_branch
      %127 = sbr.rel (0) target = $region57
    $region56: #{tpu_custom_call.1} parent=1 // pred_region
      %129 = dma.done [#allocation12], 16
    $region57: #{tpu_custom_call.1} parent=1 // pred_fallthru
      _
    %v131 = vld [vmem:[#allocation2] sm:$0xff]
    %v132 = vld [vmem:[#allocation2 + $0x8] sm:$0xff]
    %v133 = vpack.c.bf16 %v132, %v131
    %v134 = vld [vmem:[#allocation5] sm:$0xff]
    %v135 = vld [vmem:[#allocation5 + $0x8] sm:$0xff]
    %v136 = vld [vmem:[#allocation5 + $0x10] sm:$0xff]
    %v137 = vld [vmem:[#allocation5 + $0x18] sm:$0xff]
    %v138 = vld [vmem:[#allocation5 + $0x20] sm:$0xff]
    %v139 = vld [vmem:[#allocation5 + $0x28] sm:$0xff]
    %v140 = vld [vmem:[#allocation5 + $0x30] sm:$0xff]
    %v141 = vld [vmem:[#allocation5 + $0x38] sm:$0xff]
    %v142 = vld [vmem:[#allocation5 + $0x40] sm:$0xff]
    %v143 = vld [vmem:[#allocation5 + $0x48] sm:$0xff]
    %v144 = vld [vmem:[#allocation5 + $0x50] sm:$0xff]
    %v145 = vld [vmem:[#allocation5 + $0x58] sm:$0xff]
    %v146 = vld [vmem:[#allocation5 + $0x60] sm:$0xff]
    %v147 = vld [vmem:[#allocation5 + $0x68] sm:$0xff]
    %v148 = vld [vmem:[#allocation5 + $0x70] sm:$0xff]
    %v149 = vld [vmem:[#allocation5 + $0x78] sm:$0xff]
    %v150 = vld [vmem:[#allocation7] sm:$0xff]
    %v152 = vperm.slane %v150, 0
    %v153 = vperm.slane %v150, 1
    %v154 = vperm.slane %v150, 2
    %v155 = vperm.slane %v150, 3
    %v156 = vperm.slane %v150, 4
    %v157 = vperm.slane %v150, 5
    %v158 = vperm.slane %v150, 6
    %v159 = vperm.slane %v150, 7
    %v184 = vunpack.c.l.b16 %v134
    %v185 = vunpack.c.h.b16 %v134
    %v186 = vunpack.c.l.b16 %v135
    %v187 = vunpack.c.h.b16 %v135
    %v188 = vunpack.c.l.b16 %v136
    %v189 = vunpack.c.h.b16 %v136
    %v190 = vunpack.c.l.b16 %v137
    %v191 = vunpack.c.h.b16 %v137
    %v192 = vunpack.c.l.b16 %v138
    %v193 = vunpack.c.h.b16 %v138
    %v194 = vunpack.c.l.b16 %v139
    %v195 = vunpack.c.h.b16 %v139
    %v196 = vunpack.c.l.b16 %v140
    %v197 = vunpack.c.h.b16 %v140
    %v198 = vunpack.c.l.b16 %v141
    %v199 = vunpack.c.h.b16 %v141
    %v200 = vunpack.c.l.b16 %v142
    %v201 = vunpack.c.h.b16 %v142
    %v202 = vunpack.c.l.b16 %v143
    %v203 = vunpack.c.h.b16 %v143
    %v204 = vunpack.c.l.b16 %v144
    %v205 = vunpack.c.h.b16 %v144
    %v206 = vunpack.c.l.b16 %v145
    %v207 = vunpack.c.h.b16 %v145
    %v208 = vunpack.c.l.b16 %v146
    %v209 = vunpack.c.h.b16 %v146
    %v210 = vunpack.c.l.b16 %v147
    %v211 = vunpack.c.h.b16 %v147
    %v212 = vunpack.c.l.b16 %v148
    %v213 = vunpack.c.h.b16 %v148
    %v214 = vunpack.c.l.b16 %v149
    %v215 = vunpack.c.h.b16 %v149
    %v216 = vpack.c.b16 %v192, %v184
    %v217 = vpack.c.b16 %v193, %v185
    %v218 = vpack.c.b16 %v194, %v186
    %v219 = vpack.c.b16 %v195, %v187
    %v220 = vpack.c.b16 %v196, %v188
    %v221 = vpack.c.b16 %v197, %v189
    %v222 = vpack.c.b16 %v198, %v190
    %v223 = vpack.c.b16 %v199, %v191
    %v224 = vpack.c.b16 %v208, %v200
    %v225 = vpack.c.b16 %v209, %v201
    %v226 = vpack.c.b16 %v210, %v202
    %v227 = vpack.c.b16 %v211, %v203
    %v228 = vpack.c.b16 %v212, %v204
    %v229 = vpack.c.b16 %v213, %v205
    %v230 = vpack.c.b16 %v214, %v206
    %v231 = vpack.c.b16 %v215, %v207
    %vm248 = vcmask 261120
    %v250 = vsel %vm248, %v133, 0
    %252 = vmatpush.bf16.msra.mxu0 0
    %253 = vmatpush.bf16.msra.mxu0 0
    %254 = vmatpush.bf16.msra.mxu0 0
    %255 = vmatpush.bf16.msra.mxu0 0
    %256 = vmatpush.bf16.msra.mxu0 0
    %257 = vmatpush.bf16.msra.mxu0 0
    %258 = vmatpush.bf16.msra.mxu0 %v224
    %259 = vmatpush.bf16.msra.mxu0 %v216
    %260 = vmatmul.bf16.gmra.mxu0 %v250
    %v261 = vpop.f32.mrf.mxu0
    %v262 = vadd.f32 %v152, %v261
    %v263 = vpop.f32.mrf.mxu0
    %v264 = vadd.f32 %v152, %v263
    %265 = vdwg.mxu0
    %266 = vmatpush.bf16.msra.mxu0 0
    %267 = vmatpush.bf16.msra.mxu0 0
    %268 = vmatpush.bf16.msra.mxu0 0
    %269 = vmatpush.bf16.msra.mxu0 0
    %270 = vmatpush.bf16.msra.mxu0 0
    %271 = vmatpush.bf16.msra.mxu0 0
    %272 = vmatpush.bf16.msra.mxu0 %v225
    %273 = vmatpush.bf16.msra.mxu0 %v217
    %274 = vmatmul.bf16.gmra.mxu0 %v250
    %v275 = vpop.f32.mrf.mxu0
    %v276 = vadd.f32 %v153, %v275
    %v277 = vpop.f32.mrf.mxu0
    %v278 = vadd.f32 %v153, %v277
    %279 = vdwg.mxu0
    %280 = vmatpush.bf16.msra.mxu0 0
    %281 = vmatpush.bf16.msra.mxu0 0
    %282 = vmatpush.bf16.msra.mxu0 0
    %283 = vmatpush.bf16.msra.mxu0 0
    %284 = vmatpush.bf16.msra.mxu0 0
    %285 = vmatpush.bf16.msra.mxu0 0
    %286 = vmatpush.bf16.msra.mxu0 %v226
    %287 = vmatpush.bf16.msra.mxu0 %v218
    %288 = vmatmul.bf16.gmra.mxu0 %v250
    %v289 = vpop.f32.mrf.mxu0
    %v290 = vadd.f32 %v154, %v289
    %v291 = vpop.f32.mrf.mxu0
    %v292 = vadd.f32 %v154, %v291
    %293 = vdwg.mxu0
    %294 = vmatpush.bf16.msra.mxu0 0
    %295 = vmatpush.bf16.msra.mxu0 0
    %296 = vmatpush.bf16.msra.mxu0 0
    %297 = vmatpush.bf16.msra.mxu0 0
    %298 = vmatpush.bf16.msra.mxu0 0
    %299 = vmatpush.bf16.msra.mxu0 0
    %300 = vmatpush.bf16.msra.mxu0 %v227
    %301 = vmatpush.bf16.msra.mxu0 %v219
    %302 = vmatmul.bf16.gmra.mxu0 %v250
    %v303 = vpop.f32.mrf.mxu0
    %v304 = vadd.f32 %v155, %v303
    %v305 = vpop.f32.mrf.mxu0
    %v306 = vadd.f32 %v155, %v305
    %307 = vdwg.mxu0
    %308 = vmatpush.bf16.msra.mxu0 0
    %309 = vmatpush.bf16.msra.mxu0 0
    %310 = vmatpush.bf16.msra.mxu0 0
    %311 = vmatpush.bf16.msra.mxu0 0
    %312 = vmatpush.bf16.msra.mxu0 0
    %313 = vmatpush.bf16.msra.mxu0 0
    %314 = vmatpush.bf16.msra.mxu0 %v228
    %315 = vmatpush.bf16.msra.mxu0 %v220
    %316 = vmatmul.bf16.gmra.mxu0 %v250
    %v317 = vpop.f32.mrf.mxu0
    %v318 = vadd.f32 %v156, %v317
    %v319 = vpop.f32.mrf.mxu0
    %v320 = vadd.f32 %v156, %v319
    %321 = vdwg.mxu0
    %322 = vmatpush.bf16.msra.mxu0 0
    %323 = vmatpush.bf16.msra.mxu0 0
    %324 = vmatpush.bf16.msra.mxu0 0
    %325 = vmatpush.bf16.msra.mxu0 0
    %326 = vmatpush.bf16.msra.mxu0 0
    %327 = vmatpush.bf16.msra.mxu0 0
    %328 = vmatpush.bf16.msra.mxu0 %v229
    %329 = vmatpush.bf16.msra.mxu0 %v221
    %330 = vmatmul.bf16.gmra.mxu0 %v250
    %v331 = vpop.f32.mrf.mxu0
    %v332 = vadd.f32 %v157, %v331
    %v333 = vpop.f32.mrf.mxu0
    %v334 = vadd.f32 %v157, %v333
    %335 = vdwg.mxu0
    %336 = vmatpush.bf16.msra.mxu0 0
    %337 = vmatpush.bf16.msra.mxu0 0
    %338 = vmatpush.bf16.msra.mxu0 0
    %339 = vmatpush.bf16.msra.mxu0 0
    %340 = vmatpush.bf16.msra.mxu0 0
    %341 = vmatpush.bf16.msra.mxu0 0
    %342 = vmatpush.bf16.msra.mxu0 %v230
    %343 = vmatpush.bf16.msra.mxu0 %v222
    %344 = vmatmul.bf16.gmra.mxu0 %v250
    %v345 = vpop.f32.mrf.mxu0
    %v346 = vadd.f32 %v158, %v345
    %v347 = vpop.f32.mrf.mxu0
    %v348 = vadd.f32 %v158, %v347
    %349 = vdwg.mxu0
    %350 = vmatpush.bf16.msra.mxu0 0
    %351 = vmatpush.bf16.msra.mxu0 0
    %352 = vmatpush.bf16.msra.mxu0 0
    %353 = vmatpush.bf16.msra.mxu0 0
    %354 = vmatpush.bf16.msra.mxu0 0
    %355 = vmatpush.bf16.msra.mxu0 0
    %356 = vmatpush.bf16.msra.mxu0 %v231
    %357 = vmatpush.bf16.msra.mxu0 %v223
    %358 = vmatmul.bf16.gmra.mxu0 %v250
    %v359 = vpop.f32.mrf.mxu0
    %v360 = vadd.f32 %v159, %v359
    %v361 = vpop.f32.mrf.mxu0
    %v362 = vadd.f32 %v159, %v361
    %363 = vdwg.mxu0
    %v364 = vmax.f32 %v262, 0.0
    %v365 = vmax.f32 %v276, 0.0
    %v366 = vmax.f32 %v290, 0.0
    %v367 = vmax.f32 %v304, 0.0
    %v368 = vmax.f32 %v318, 0.0
    %v369 = vmax.f32 %v332, 0.0
    %v370 = vmax.f32 %v346, 0.0
    %v371 = vmax.f32 %v360, 0.0
    %v372 = vmax.f32 %v264, 0.0
    %v373 = vmax.f32 %v278, 0.0
    %v374 = vmax.f32 %v292, 0.0
    %v375 = vmax.f32 %v306, 0.0
    %v376 = vmax.f32 %v320, 0.0
    %v377 = vmax.f32 %v334, 0.0
    %v378 = vmax.f32 %v348, 0.0
    %v379 = vmax.f32 %v362, 0.0
    %v380 = vpack.c.bf16 %v372, %v364
    %v381 = vpack.c.bf16 %v373, %v365
    %v382 = vpack.c.bf16 %v374, %v366
    %v383 = vpack.c.bf16 %v375, %v367
    %v384 = vpack.c.bf16 %v376, %v368
    %v385 = vpack.c.bf16 %v377, %v369
    %v386 = vpack.c.bf16 %v378, %v370
    %v387 = vpack.c.bf16 %v379, %v371
    %v388 = vld [vmem:[#allocation8] sm:$0xff]
    %v389 = vld [vmem:[#allocation8 + $0x8] sm:$0xff]
    %v390 = vld [vmem:[#allocation8 + $0x10] sm:$0xff]
    %v391 = vld [vmem:[#allocation8 + $0x18] sm:$0xff]
    %v392 = vld [vmem:[#allocation8 + $0x20] sm:$0xff]
    %v393 = vld [vmem:[#allocation8 + $0x28] sm:$0xff]
    %v394 = vld [vmem:[#allocation8 + $0x30] sm:$0xff]
    %v395 = vld [vmem:[#allocation8 + $0x38] sm:$0xff]
    %v396 = vld [vmem:[#allocation8 + $0x40] sm:$0xff]
    %v397 = vld [vmem:[#allocation8 + $0x48] sm:$0xff]
    %v398 = vld [vmem:[#allocation8 + $0x50] sm:$0xff]
    %v399 = vld [vmem:[#allocation8 + $0x58] sm:$0xff]
    %v400 = vld [vmem:[#allocation8 + $0x60] sm:$0xff]
    %v401 = vld [vmem:[#allocation8 + $0x68] sm:$0xff]
    %v402 = vld [vmem:[#allocation8 + $0x70] sm:$0xff]
    %v403 = vld [vmem:[#allocation8 + $0x78] sm:$0xff]
    %v404 = vld [vmem:[#allocation8 + $0x80] sm:$0xff]
    %v405 = vld [vmem:[#allocation8 + $0x88] sm:$0xff]
    %v406 = vld [vmem:[#allocation8 + $0x90] sm:$0xff]
    %v407 = vld [vmem:[#allocation8 + $0x98] sm:$0xff]
    %v408 = vld [vmem:[#allocation8 + $0xa0] sm:$0xff]
    %v409 = vld [vmem:[#allocation8 + $0xa8] sm:$0xff]
    %v410 = vld [vmem:[#allocation8 + $0xb0] sm:$0xff]
    %v411 = vld [vmem:[#allocation8 + $0xb8] sm:$0xff]
    %v412 = vld [vmem:[#allocation8 + $0xc0] sm:$0xff]
    %v413 = vld [vmem:[#allocation8 + $0xc8] sm:$0xff]
    %v414 = vld [vmem:[#allocation8 + $0xd0] sm:$0xff]
    %v415 = vld [vmem:[#allocation8 + $0xd8] sm:$0xff]
    %v416 = vld [vmem:[#allocation8 + $0xe0] sm:$0xff]
    %v417 = vld [vmem:[#allocation8 + $0xe8] sm:$0xff]
    %v418 = vld [vmem:[#allocation8 + $0xf0] sm:$0xff]
    %v419 = vld [vmem:[#allocation8 + $0xf8] sm:$0xff]
    %v420 = vld [vmem:[#allocation8 + $0x100] sm:$0xff]
    %v421 = vld [vmem:[#allocation8 + $0x108] sm:$0xff]
    %v422 = vld [vmem:[#allocation8 + $0x110] sm:$0xff]
    %v423 = vld [vmem:[#allocation8 + $0x118] sm:$0xff]
    %v424 = vld [vmem:[#allocation8 + $0x120] sm:$0xff]
    %v425 = vld [vmem:[#allocation8 + $0x128] sm:$0xff]
    %v426 = vld [vmem:[#allocation8 + $0x130] sm:$0xff]
    %v427 = vld [vmem:[#allocation8 + $0x138] sm:$0xff]
    %v428 = vld [vmem:[#allocation8 + $0x140] sm:$0xff]
    %v429 = vld [vmem:[#allocation8 + $0x148] sm:$0xff]
    %v430 = vld [vmem:[#allocation8 + $0x150] sm:$0xff]
    %v431 = vld [vmem:[#allocation8 + $0x158] sm:$0xff]
    %v432 = vld [vmem:[#allocation8 + $0x160] sm:$0xff]
    %v433 = vld [vmem:[#allocation8 + $0x168] sm:$0xff]
    %v434 = vld [vmem:[#allocation8 + $0x170] sm:$0xff]
    %v435 = vld [vmem:[#allocation8 + $0x178] sm:$0xff]
    %v436 = vld [vmem:[#allocation8 + $0x180] sm:$0xff]
    %v437 = vld [vmem:[#allocation8 + $0x188] sm:$0xff]
    %v438 = vld [vmem:[#allocation8 + $0x190] sm:$0xff]
    %v439 = vld [vmem:[#allocation8 + $0x198] sm:$0xff]
    %v440 = vld [vmem:[#allocation8 + $0x1a0] sm:$0xff]
    %v441 = vld [vmem:[#allocation8 + $0x1a8] sm:$0xff]
    %v442 = vld [vmem:[#allocation8 + $0x1b0] sm:$0xff]
    %v443 = vld [vmem:[#allocation8 + $0x1b8] sm:$0xff]
    %v444 = vld [vmem:[#allocation8 + $0x1c0] sm:$0xff]
    %v445 = vld [vmem:[#allocation8 + $0x1c8] sm:$0xff]
    %v446 = vld [vmem:[#allocation8 + $0x1d0] sm:$0xff]
    %v447 = vld [vmem:[#allocation8 + $0x1d8] sm:$0xff]
    %v448 = vld [vmem:[#allocation8 + $0x1e0] sm:$0xff]
    %v449 = vld [vmem:[#allocation8 + $0x1e8] sm:$0xff]
    %v450 = vld [vmem:[#allocation8 + $0x1f0] sm:$0xff]
    %v451 = vld [vmem:[#allocation8 + $0x1f8] sm:$0xff]
    %v452 = vld [vmem:[#allocation8 + $0x200] sm:$0xff]
    %v453 = vld [vmem:[#allocation8 + $0x208] sm:$0xff]
    %v454 = vld [vmem:[#allocation8 + $0x210] sm:$0xff]
    %v455 = vld [vmem:[#allocation8 + $0x218] sm:$0xff]
    %v456 = vld [vmem:[#allocation8 + $0x220] sm:$0xff]
    %v457 = vld [vmem:[#allocation8 + $0x228] sm:$0xff]
    %v458 = vld [vmem:[#allocation8 + $0x230] sm:$0xff]
    %v459 = vld [vmem:[#allocation8 + $0x238] sm:$0xff]
    %v460 = vld [vmem:[#allocation8 + $0x240] sm:$0xff]
    %v461 = vld [vmem:[#allocation8 + $0x248] sm:$0xff]
    %v462 = vld [vmem:[#allocation8 + $0x250] sm:$0xff]
    %v463 = vld [vmem:[#allocation8 + $0x258] sm:$0xff]
    %v464 = vld [vmem:[#allocation8 + $0x260] sm:$0xff]
    %v465 = vld [vmem:[#allocation8 + $0x268] sm:$0xff]
    %v466 = vld [vmem:[#allocation8 + $0x270] sm:$0xff]
    %v467 = vld [vmem:[#allocation8 + $0x278] sm:$0xff]
    %v468 = vld [vmem:[#allocation8 + $0x280] sm:$0xff]
    %v469 = vld [vmem:[#allocation8 + $0x288] sm:$0xff]
    %v470 = vld [vmem:[#allocation8 + $0x290] sm:$0xff]
    %v471 = vld [vmem:[#allocation8 + $0x298] sm:$0xff]
    %v472 = vld [vmem:[#allocation8 + $0x2a0] sm:$0xff]
    %v473 = vld [vmem:[#allocation8 + $0x2a8] sm:$0xff]
    %v474 = vld [vmem:[#allocation8 + $0x2b0] sm:$0xff]
    %v475 = vld [vmem:[#allocation8 + $0x2b8] sm:$0xff]
    %v476 = vld [vmem:[#allocation8 + $0x2c0] sm:$0xff]
    %v477 = vld [vmem:[#allocation8 + $0x2c8] sm:$0xff]
    %v478 = vld [vmem:[#allocation8 + $0x2d0] sm:$0xff]
    %v479 = vld [vmem:[#allocation8 + $0x2d8] sm:$0xff]
    %v480 = vld [vmem:[#allocation8 + $0x2e0] sm:$0xff]
    %v481 = vld [vmem:[#allocation8 + $0x2e8] sm:$0xff]
    %v482 = vld [vmem:[#allocation8 + $0x2f0] sm:$0xff]
    %v483 = vld [vmem:[#allocation8 + $0x2f8] sm:$0xff]
    %v484 = vld [vmem:[#allocation8 + $0x300] sm:$0xff]
    %v485 = vld [vmem:[#allocation8 + $0x308] sm:$0xff]
    %v486 = vld [vmem:[#allocation8 + $0x310] sm:$0xff]
    %v487 = vld [vmem:[#allocation8 + $0x318] sm:$0xff]
    %v488 = vld [vmem:[#allocation8 + $0x320] sm:$0xff]
    %v489 = vld [vmem:[#allocation8 + $0x328] sm:$0xff]
    %v490 = vld [vmem:[#allocation8 + $0x330] sm:$0xff]
    %v491 = vld [vmem:[#allocation8 + $0x338] sm:$0xff]
    %v492 = vld [vmem:[#allocation8 + $0x340] sm:$0xff]
    %v493 = vld [vmem:[#allocation8 + $0x348] sm:$0xff]
    %v494 = vld [vmem:[#allocation8 + $0x350] sm:$0xff]
    %v495 = vld [vmem:[#allocation8 + $0x358] sm:$0xff]
    %v496 = vld [vmem:[#allocation8 + $0x360] sm:$0xff]
    %v497 = vld [vmem:[#allocation8 + $0x368] sm:$0xff]
    %v498 = vld [vmem:[#allocation8 + $0x370] sm:$0xff]
    %v499 = vld [vmem:[#allocation8 + $0x378] sm:$0xff]
    %v500 = vld [vmem:[#allocation8 + $0x380] sm:$0xff]
    %v501 = vld [vmem:[#allocation8 + $0x388] sm:$0xff]
    %v502 = vld [vmem:[#allocation8 + $0x390] sm:$0xff]
    %v503 = vld [vmem:[#allocation8 + $0x398] sm:$0xff]
    %v504 = vld [vmem:[#allocation8 + $0x3a0] sm:$0xff]
    %v505 = vld [vmem:[#allocation8 + $0x3a8] sm:$0xff]
    %v506 = vld [vmem:[#allocation8 + $0x3b0] sm:$0xff]
    %v507 = vld [vmem:[#allocation8 + $0x3b8] sm:$0xff]
    %v508 = vld [vmem:[#allocation8 + $0x3c0] sm:$0xff]
    %v509 = vld [vmem:[#allocation8 + $0x3c8] sm:$0xff]
    %v510 = vld [vmem:[#allocation8 + $0x3d0] sm:$0xff]
    %v511 = vld [vmem:[#allocation8 + $0x3d8] sm:$0xff]
    %v512 = vld [vmem:[#allocation8 + $0x3e0] sm:$0xff]
    %v513 = vld [vmem:[#allocation8 + $0x3e8] sm:$0xff]
    %v514 = vld [vmem:[#allocation8 + $0x3f0] sm:$0xff]
    %v515 = vld [vmem:[#allocation8 + $0x3f8] sm:$0xff]
    %v516 = vld [vmem:[#allocation8 + $0x400] sm:$0xff]
    %v517 = vld [vmem:[#allocation8 + $0x408] sm:$0xff]
    %v518 = vld [vmem:[#allocation8 + $0x410] sm:$0xff]
    %v519 = vld [vmem:[#allocation8 + $0x418] sm:$0xff]
    %v520 = vld [vmem:[#allocation8 + $0x420] sm:$0xff]
    %v521 = vld [vmem:[#allocation8 + $0x428] sm:$0xff]
    %v522 = vld [vmem:[#allocation8 + $0x430] sm:$0xff]
    %v523 = vld [vmem:[#allocation8 + $0x438] sm:$0xff]
    %v524 = vld [vmem:[#allocation8 + $0x440] sm:$0xff]
    %v525 = vld [vmem:[#allocation8 + $0x448] sm:$0xff]
    %v526 = vld [vmem:[#allocation8 + $0x450] sm:$0xff]
    %v527 = vld [vmem:[#allocation8 + $0x458] sm:$0xff]
    %v528 = vld [vmem:[#allocation8 + $0x460] sm:$0xff]
    %v529 = vld [vmem:[#allocation8 + $0x468] sm:$0xff]
    %v530 = vld [vmem:[#allocation8 + $0x470] sm:$0xff]
    %v531 = vld [vmem:[#allocation8 + $0x478] sm:$0xff]
    %v532 = vld [vmem:[#allocation8 + $0x480] sm:$0xff]
    %v533 = vld [vmem:[#allocation8 + $0x488] sm:$0xff]
    %v534 = vld [vmem:[#allocation8 + $0x490] sm:$0xff]
    %v535 = vld [vmem:[#allocation8 + $0x498] sm:$0xff]
    %v536 = vld [vmem:[#allocation8 + $0x4a0] sm:$0xff]
    %v537 = vld [vmem:[#allocation8 + $0x4a8] sm:$0xff]
    %v538 = vld [vmem:[#allocation8 + $0x4b0] sm:$0xff]
    %v539 = vld [vmem:[#allocation8 + $0x4b8] sm:$0xff]
    %v540 = vld [vmem:[#allocation8 + $0x4c0] sm:$0xff]
    %v541 = vld [vmem:[#allocation8 + $0x4c8] sm:$0xff]
    %v542 = vld [vmem:[#allocation8 + $0x4d0] sm:$0xff]
    %v543 = vld [vmem:[#allocation8 + $0x4d8] sm:$0xff]
    %v544 = vld [vmem:[#allocation8 + $0x4e0] sm:$0xff]
    %v545 = vld [vmem:[#allocation8 + $0x4e8] sm:$0xff]
    %v546 = vld [vmem:[#allocation8 + $0x4f0] sm:$0xff]
    %v547 = vld [vmem:[#allocation8 + $0x4f8] sm:$0xff]
    %v548 = vld [vmem:[#allocation8 + $0x500] sm:$0xff]
    %v549 = vld [vmem:[#allocation8 + $0x508] sm:$0xff]
    %v550 = vld [vmem:[#allocation8 + $0x510] sm:$0xff]
    %v551 = vld [vmem:[#allocation8 + $0x518] sm:$0xff]
    %v552 = vld [vmem:[#allocation8 + $0x520] sm:$0xff]
    %v553 = vld [vmem:[#allocation8 + $0x528] sm:$0xff]
    %v554 = vld [vmem:[#allocation8 + $0x530] sm:$0xff]
    %v555 = vld [vmem:[#allocation8 + $0x538] sm:$0xff]
    %v556 = vld [vmem:[#allocation8 + $0x540] sm:$0xff]
    %v557 = vld [vmem:[#allocation8 + $0x548] sm:$0xff]
    %v558 = vld [vmem:[#allocation8 + $0x550] sm:$0xff]
    %v559 = vld [vmem:[#allocation8 + $0x558] sm:$0xff]
    %v560 = vld [vmem:[#allocation8 + $0x560] sm:$0xff]
    %v561 = vld [vmem:[#allocation8 + $0x568] sm:$0xff]
    %v562 = vld [vmem:[#allocation8 + $0x570] sm:$0xff]
    %v563 = vld [vmem:[#allocation8 + $0x578] sm:$0xff]
    %v564 = vld [vmem:[#allocation8 + $0x580] sm:$0xff]
    %v565 = vld [vmem:[#allocation8 + $0x588] sm:$0xff]
    %v566 = vld [vmem:[#allocation8 + $0x590] sm:$0xff]
    %v567 = vld [vmem:[#allocation8 + $0x598] sm:$0xff]
    %v568 = vld [vmem:[#allocation8 + $0x5a0] sm:$0xff]
    %v569 = vld [vmem:[#allocation8 + $0x5a8] sm:$0xff]
    %v570 = vld [vmem:[#allocation8 + $0x5b0] sm:$0xff]
    %v571 = vld [vmem:[#allocation8 + $0x5b8] sm:$0xff]
    %v572 = vld [vmem:[#allocation8 + $0x5c0] sm:$0xff]
    %v573 = vld [vmem:[#allocation8 + $0x5c8] sm:$0xff]
    %v574 = vld [vmem:[#allocation8 + $0x5d0] sm:$0xff]
    %v575 = vld [vmem:[#allocation8 + $0x5d8] sm:$0xff]
    %v576 = vld [vmem:[#allocation8 + $0x5e0] sm:$0xff]
    %v577 = vld [vmem:[#allocation8 + $0x5e8] sm:$0xff]
    %v578 = vld [vmem:[#allocation8 + $0x5f0] sm:$0xff]
    %v579 = vld [vmem:[#allocation8 + $0x5f8] sm:$0xff]
    %v580 = vld [vmem:[#allocation8 + $0x600] sm:$0xff]
    %v581 = vld [vmem:[#allocation8 + $0x608] sm:$0xff]
    %v582 = vld [vmem:[#allocation8 + $0x610] sm:$0xff]
    %v583 = vld [vmem:[#allocation8 + $0x618] sm:$0xff]
    %v584 = vld [vmem:[#allocation8 + $0x620] sm:$0xff]
    %v585 = vld [vmem:[#allocation8 + $0x628] sm:$0xff]
    %v586 = vld [vmem:[#allocation8 + $0x630] sm:$0xff]
    %v587 = vld [vmem:[#allocation8 + $0x638] sm:$0xff]
    %v588 = vld [vmem:[#allocation8 + $0x640] sm:$0xff]
    %v589 = vld [vmem:[#allocation8 + $0x648] sm:$0xff]
    %v590 = vld [vmem:[#allocation8 + $0x650] sm:$0xff]
    %v591 = vld [vmem:[#allocation8 + $0x658] sm:$0xff]
    %v592 = vld [vmem:[#allocation8 + $0x660] sm:$0xff]
    %v593 = vld [vmem:[#allocation8 + $0x668] sm:$0xff]
    %v594 = vld [vmem:[#allocation8 + $0x670] sm:$0xff]
    %v595 = vld [vmem:[#allocation8 + $0x678] sm:$0xff]
    %v596 = vld [vmem:[#allocation8 + $0x680] sm:$0xff]
    %v597 = vld [vmem:[#allocation8 + $0x688] sm:$0xff]
    %v598 = vld [vmem:[#allocation8 + $0x690] sm:$0xff]
    %v599 = vld [vmem:[#allocation8 + $0x698] sm:$0xff]
    %v600 = vld [vmem:[#allocation8 + $0x6a0] sm:$0xff]
    %v601 = vld [vmem:[#allocation8 + $0x6a8] sm:$0xff]
    %v602 = vld [vmem:[#allocation8 + $0x6b0] sm:$0xff]
    %v603 = vld [vmem:[#allocation8 + $0x6b8] sm:$0xff]
    %v604 = vld [vmem:[#allocation8 + $0x6c0] sm:$0xff]
    %v605 = vld [vmem:[#allocation8 + $0x6c8] sm:$0xff]
    %v606 = vld [vmem:[#allocation8 + $0x6d0] sm:$0xff]
    %v607 = vld [vmem:[#allocation8 + $0x6d8] sm:$0xff]
    %v608 = vld [vmem:[#allocation8 + $0x6e0] sm:$0xff]
    %v609 = vld [vmem:[#allocation8 + $0x6e8] sm:$0xff]
    %v610 = vld [vmem:[#allocation8 + $0x6f0] sm:$0xff]
    %v611 = vld [vmem:[#allocation8 + $0x6f8] sm:$0xff]
    %v612 = vld [vmem:[#allocation8 + $0x700] sm:$0xff]
    %v613 = vld [vmem:[#allocation8 + $0x708] sm:$0xff]
    %v614 = vld [vmem:[#allocation8 + $0x710] sm:$0xff]
    %v615 = vld [vmem:[#allocation8 + $0x718] sm:$0xff]
    %v616 = vld [vmem:[#allocation8 + $0x720] sm:$0xff]
    %v617 = vld [vmem:[#allocation8 + $0x728] sm:$0xff]
    %v618 = vld [vmem:[#allocation8 + $0x730] sm:$0xff]
    %v619 = vld [vmem:[#allocation8 + $0x738] sm:$0xff]
    %v620 = vld [vmem:[#allocation8 + $0x740] sm:$0xff]
    %v621 = vld [vmem:[#allocation8 + $0x748] sm:$0xff]
    %v622 = vld [vmem:[#allocation8 + $0x750] sm:$0xff]
    %v623 = vld [vmem:[#allocation8 + $0x758] sm:$0xff]
    %v624 = vld [vmem:[#allocation8 + $0x760] sm:$0xff]
    %v625 = vld [vmem:[#allocation8 + $0x768] sm:$0xff]
    %v626 = vld [vmem:[#allocation8 + $0x770] sm:$0xff]
    %v627 = vld [vmem:[#allocation8 + $0x778] sm:$0xff]
    %v628 = vld [vmem:[#allocation8 + $0x780] sm:$0xff]
    %v629 = vld [vmem:[#allocation8 + $0x788] sm:$0xff]
    %v630 = vld [vmem:[#allocation8 + $0x790] sm:$0xff]
    %v631 = vld [vmem:[#allocation8 + $0x798] sm:$0xff]
    %v632 = vld [vmem:[#allocation8 + $0x7a0] sm:$0xff]
    %v633 = vld [vmem:[#allocation8 + $0x7a8] sm:$0xff]
    %v634 = vld [vmem:[#allocation8 + $0x7b0] sm:$0xff]
    %v635 = vld [vmem:[#allocation8 + $0x7b8] sm:$0xff]
    %v636 = vld [vmem:[#allocation8 + $0x7c0] sm:$0xff]
    %v637 = vld [vmem:[#allocation8 + $0x7c8] sm:$0xff]
    %v638 = vld [vmem:[#allocation8 + $0x7d0] sm:$0xff]
    %v639 = vld [vmem:[#allocation8 + $0x7d8] sm:$0xff]
    %v640 = vld [vmem:[#allocation8 + $0x7e0] sm:$0xff]
    %v641 = vld [vmem:[#allocation8 + $0x7e8] sm:$0xff]
    %v642 = vld [vmem:[#allocation8 + $0x7f0] sm:$0xff]
    %v643 = vld [vmem:[#allocation8 + $0x7f8] sm:$0xff]
    %v644 = vld [vmem:[#allocation8 + $0x800] sm:$0xff]
    %v645 = vld [vmem:[#allocation8 + $0x808] sm:$0xff]
    %v646 = vld [vmem:[#allocation8 + $0x810] sm:$0xff]
    %v647 = vld [vmem:[#allocation8 + $0x818] sm:$0xff]
    %v648 = vld [vmem:[#allocation8 + $0x820] sm:$0xff]
    %v649 = vld [vmem:[#allocation8 + $0x828] sm:$0xff]
    %v650 = vld [vmem:[#allocation8 + $0x830] sm:$0xff]
    %v651 = vld [vmem:[#allocation8 + $0x838] sm:$0xff]
    %v652 = vld [vmem:[#allocation8 + $0x840] sm:$0xff]
    %v653 = vld [vmem:[#allocation8 + $0x848] sm:$0xff]
    %v654 = vld [vmem:[#allocation8 + $0x850] sm:$0xff]
    %v655 = vld [vmem:[#allocation8 + $0x858] sm:$0xff]
    %v656 = vld [vmem:[#allocation8 + $0x860] sm:$0xff]
    %v657 = vld [vmem:[#allocation8 + $0x868] sm:$0xff]
    %v658 = vld [vmem:[#allocation8 + $0x870] sm:$0xff]
    %v659 = vld [vmem:[#allocation8 + $0x878] sm:$0xff]
    %v660 = vld [vmem:[#allocation8 + $0x880] sm:$0xff]
    %v661 = vld [vmem:[#allocation8 + $0x888] sm:$0xff]
    %v662 = vld [vmem:[#allocation8 + $0x890] sm:$0xff]
    %v663 = vld [vmem:[#allocation8 + $0x898] sm:$0xff]
    %v664 = vld [vmem:[#allocation8 + $0x8a0] sm:$0xff]
    %v665 = vld [vmem:[#allocation8 + $0x8a8] sm:$0xff]
    %v666 = vld [vmem:[#allocation8 + $0x8b0] sm:$0xff]
    %v667 = vld [vmem:[#allocation8 + $0x8b8] sm:$0xff]
    %v668 = vld [vmem:[#allocation8 + $0x8c0] sm:$0xff]
    %v669 = vld [vmem:[#allocation8 + $0x8c8] sm:$0xff]
    %v670 = vld [vmem:[#allocation8 + $0x8d0] sm:$0xff]
    %v671 = vld [vmem:[#allocation8 + $0x8d8] sm:$0xff]
    %v672 = vld [vmem:[#allocation8 + $0x8e0] sm:$0xff]
    %v673 = vld [vmem:[#allocation8 + $0x8e8] sm:$0xff]
    %v674 = vld [vmem:[#allocation8 + $0x8f0] sm:$0xff]
    %v675 = vld [vmem:[#allocation8 + $0x8f8] sm:$0xff]
    %v676 = vld [vmem:[#allocation8 + $0x900] sm:$0xff]
    %v677 = vld [vmem:[#allocation8 + $0x908] sm:$0xff]
    %v678 = vld [vmem:[#allocation8 + $0x910] sm:$0xff]
    %v679 = vld [vmem:[#allocation8 + $0x918] sm:$0xff]
    %v680 = vld [vmem:[#allocation8 + $0x920] sm:$0xff]
    %v681 = vld [vmem:[#allocation8 + $0x928] sm:$0xff]
    %v682 = vld [vmem:[#allocation8 + $0x930] sm:$0xff]
    %v683 = vld [vmem:[#allocation8 + $0x938] sm:$0xff]
    %v684 = vld [vmem:[#allocation8 + $0x940] sm:$0xff]
    %v685 = vld [vmem:[#allocation8 + $0x948] sm:$0xff]
    %v686 = vld [vmem:[#allocation8 + $0x950] sm:$0xff]
    %v687 = vld [vmem:[#allocation8 + $0x958] sm:$0xff]
    %v688 = vld [vmem:[#allocation8 + $0x960] sm:$0xff]
    %v689 = vld [vmem:[#allocation8 + $0x968] sm:$0xff]
    %v690 = vld [vmem:[#allocation8 + $0x970] sm:$0xff]
    %v691 = vld [vmem:[#allocation8 + $0x978] sm:$0xff]
    %v692 = vld [vmem:[#allocation8 + $0x980] sm:$0xff]
    %v693 = vld [vmem:[#allocation8 + $0x988] sm:$0xff]
    %v694 = vld [vmem:[#allocation8 + $0x990] sm:$0xff]
    %v695 = vld [vmem:[#allocation8 + $0x998] sm:$0xff]
    %v696 = vld [vmem:[#allocation8 + $0x9a0] sm:$0xff]
    %v697 = vld [vmem:[#allocation8 + $0x9a8] sm:$0xff]
    %v698 = vld [vmem:[#allocation8 + $0x9b0] sm:$0xff]
    %v699 = vld [vmem:[#allocation8 + $0x9b8] sm:$0xff]
    %v700 = vld [vmem:[#allocation8 + $0x9c0] sm:$0xff]
    %v701 = vld [vmem:[#allocation8 + $0x9c8] sm:$0xff]
    %v702 = vld [vmem:[#allocation8 + $0x9d0] sm:$0xff]
    %v703 = vld [vmem:[#allocation8 + $0x9d8] sm:$0xff]
    %v704 = vld [vmem:[#allocation8 + $0x9e0] sm:$0xff]
    %v705 = vld [vmem:[#allocation8 + $0x9e8] sm:$0xff]
    %v706 = vld [vmem:[#allocation8 + $0x9f0] sm:$0xff]
    %v707 = vld [vmem:[#allocation8 + $0x9f8] sm:$0xff]
    %v708 = vld [vmem:[#allocation8 + $0xa00] sm:$0xff]
    %v709 = vld [vmem:[#allocation8 + $0xa08] sm:$0xff]
    %v710 = vld [vmem:[#allocation8 + $0xa10] sm:$0xff]
    %v711 = vld [vmem:[#allocation8 + $0xa18] sm:$0xff]
    %v712 = vld [vmem:[#allocation8 + $0xa20] sm:$0xff]
    %v713 = vld [vmem:[#allocation8 + $0xa28] sm:$0xff]
    %v714 = vld [vmem:[#allocation8 + $0xa30] sm:$0xff]
    %v715 = vld [vmem:[#allocation8 + $0xa38] sm:$0xff]
    %v716 = vld [vmem:[#allocation8 + $0xa40] sm:$0xff]
    %v717 = vld [vmem:[#allocation8 + $0xa48] sm:$0xff]
    %v718 = vld [vmem:[#allocation8 + $0xa50] sm:$0xff]
    %v719 = vld [vmem:[#allocation8 + $0xa58] sm:$0xff]
    %v720 = vld [vmem:[#allocation8 + $0xa60] sm:$0xff]
    %v721 = vld [vmem:[#allocation8 + $0xa68] sm:$0xff]
    %v722 = vld [vmem:[#allocation8 + $0xa70] sm:$0xff]
    %v723 = vld [vmem:[#allocation8 + $0xa78] sm:$0xff]
    %v724 = vld [vmem:[#allocation8 + $0xa80] sm:$0xff]
    %v725 = vld [vmem:[#allocation8 + $0xa88] sm:$0xff]
    %v726 = vld [vmem:[#allocation8 + $0xa90] sm:$0xff]
    %v727 = vld [vmem:[#allocation8 + $0xa98] sm:$0xff]
    %v728 = vld [vmem:[#allocation8 + $0xaa0] sm:$0xff]
    %v729 = vld [vmem:[#allocation8 + $0xaa8] sm:$0xff]
    %v730 = vld [vmem:[#allocation8 + $0xab0] sm:$0xff]
    %v731 = vld [vmem:[#allocation8 + $0xab8] sm:$0xff]
    %v732 = vld [vmem:[#allocation8 + $0xac0] sm:$0xff]
    %v733 = vld [vmem:[#allocation8 + $0xac8] sm:$0xff]
    %v734 = vld [vmem:[#allocation8 + $0xad0] sm:$0xff]
    %v735 = vld [vmem:[#allocation8 + $0xad8] sm:$0xff]
    %v736 = vld [vmem:[#allocation8 + $0xae0] sm:$0xff]
    %v737 = vld [vmem:[#allocation8 + $0xae8] sm:$0xff]
    %v738 = vld [vmem:[#allocation8 + $0xaf0] sm:$0xff]
    %v739 = vld [vmem:[#allocation8 + $0xaf8] sm:$0xff]
    %v740 = vld [vmem:[#allocation8 + $0xb00] sm:$0xff]
    %v741 = vld [vmem:[#allocation8 + $0xb08] sm:$0xff]
    %v742 = vld [vmem:[#allocation8 + $0xb10] sm:$0xff]
    %v743 = vld [vmem:[#allocation8 + $0xb18] sm:$0xff]
    %v744 = vld [vmem:[#allocation8 + $0xb20] sm:$0xff]
    %v745 = vld [vmem:[#allocation8 + $0xb28] sm:$0xff]
    %v746 = vld [vmem:[#allocation8 + $0xb30] sm:$0xff]
    %v747 = vld [vmem:[#allocation8 + $0xb38] sm:$0xff]
    %v748 = vld [vmem:[#allocation8 + $0xb40] sm:$0xff]
    %v749 = vld [vmem:[#allocation8 + $0xb48] sm:$0xff]
    %v750 = vld [vmem:[#allocation8 + $0xb50] sm:$0xff]
    %v751 = vld [vmem:[#allocation8 + $0xb58] sm:$0xff]
    %v752 = vld [vmem:[#allocation8 + $0xb60] sm:$0xff]
    %v753 = vld [vmem:[#allocation8 + $0xb68] sm:$0xff]
    %v754 = vld [vmem:[#allocation8 + $0xb70] sm:$0xff]
    %v755 = vld [vmem:[#allocation8 + $0xb78] sm:$0xff]
    %v756 = vld [vmem:[#allocation8 + $0xb80] sm:$0xff]
    %v757 = vld [vmem:[#allocation8 + $0xb88] sm:$0xff]
    %v758 = vld [vmem:[#allocation8 + $0xb90] sm:$0xff]
    %v759 = vld [vmem:[#allocation8 + $0xb98] sm:$0xff]
    %v760 = vld [vmem:[#allocation8 + $0xba0] sm:$0xff]
    %v761 = vld [vmem:[#allocation8 + $0xba8] sm:$0xff]
    %v762 = vld [vmem:[#allocation8 + $0xbb0] sm:$0xff]
    %v763 = vld [vmem:[#allocation8 + $0xbb8] sm:$0xff]
    %v764 = vld [vmem:[#allocation8 + $0xbc0] sm:$0xff]
    %v765 = vld [vmem:[#allocation8 + $0xbc8] sm:$0xff]
    %v766 = vld [vmem:[#allocation8 + $0xbd0] sm:$0xff]
    %v767 = vld [vmem:[#allocation8 + $0xbd8] sm:$0xff]
    %v768 = vld [vmem:[#allocation8 + $0xbe0] sm:$0xff]
    %v769 = vld [vmem:[#allocation8 + $0xbe8] sm:$0xff]
    %v770 = vld [vmem:[#allocation8 + $0xbf0] sm:$0xff]
    %v771 = vld [vmem:[#allocation8 + $0xbf8] sm:$0xff]
    %v772 = vld [vmem:[#allocation8 + $0xc00] sm:$0xff]
    %v773 = vld [vmem:[#allocation8 + $0xc08] sm:$0xff]
    %v774 = vld [vmem:[#allocation8 + $0xc10] sm:$0xff]
    %v775 = vld [vmem:[#allocation8 + $0xc18] sm:$0xff]
    %v776 = vld [vmem:[#allocation8 + $0xc20] sm:$0xff]
    %v777 = vld [vmem:[#allocation8 + $0xc28] sm:$0xff]
    %v778 = vld [vmem:[#allocation8 + $0xc30] sm:$0xff]
    %v779 = vld [vmem:[#allocation8 + $0xc38] sm:$0xff]
    %v780 = vld [vmem:[#allocation8 + $0xc40] sm:$0xff]
    %v781 = vld [vmem:[#allocation8 + $0xc48] sm:$0xff]
    %v782 = vld [vmem:[#allocation8 + $0xc50] sm:$0xff]
    %v783 = vld [vmem:[#allocation8 + $0xc58] sm:$0xff]
    %v784 = vld [vmem:[#allocation8 + $0xc60] sm:$0xff]
    %v785 = vld [vmem:[#allocation8 + $0xc68] sm:$0xff]
    %v786 = vld [vmem:[#allocation8 + $0xc70] sm:$0xff]
    %v787 = vld [vmem:[#allocation8 + $0xc78] sm:$0xff]
    %v788 = vld [vmem:[#allocation8 + $0xc80] sm:$0xff]
    %v789 = vld [vmem:[#allocation8 + $0xc88] sm:$0xff]
    %v790 = vld [vmem:[#allocation8 + $0xc90] sm:$0xff]
    %v791 = vld [vmem:[#allocation8 + $0xc98] sm:$0xff]
    %v792 = vld [vmem:[#allocation8 + $0xca0] sm:$0xff]
    %v793 = vld [vmem:[#allocation8 + $0xca8] sm:$0xff]
    %v794 = vld [vmem:[#allocation8 + $0xcb0] sm:$0xff]
    %v795 = vld [vmem:[#allocation8 + $0xcb8] sm:$0xff]
    %v796 = vld [vmem:[#allocation8 + $0xcc0] sm:$0xff]
    %v797 = vld [vmem:[#allocation8 + $0xcc8] sm:$0xff]
    %v798 = vld [vmem:[#allocation8 + $0xcd0] sm:$0xff]
    %v799 = vld [vmem:[#allocation8 + $0xcd8] sm:$0xff]
    %v800 = vld [vmem:[#allocation8 + $0xce0] sm:$0xff]
    %v801 = vld [vmem:[#allocation8 + $0xce8] sm:$0xff]
    %v802 = vld [vmem:[#allocation8 + $0xcf0] sm:$0xff]
    %v803 = vld [vmem:[#allocation8 + $0xcf8] sm:$0xff]
    %v804 = vld [vmem:[#allocation8 + $0xd00] sm:$0xff]
    %v805 = vld [vmem:[#allocation8 + $0xd08] sm:$0xff]
    %v806 = vld [vmem:[#allocation8 + $0xd10] sm:$0xff]
    %v807 = vld [vmem:[#allocation8 + $0xd18] sm:$0xff]
    %v808 = vld [vmem:[#allocation8 + $0xd20] sm:$0xff]
    %v809 = vld [vmem:[#allocation8 + $0xd28] sm:$0xff]
    %v810 = vld [vmem:[#allocation8 + $0xd30] sm:$0xff]
    %v811 = vld [vmem:[#allocation8 + $0xd38] sm:$0xff]
    %v812 = vld [vmem:[#allocation8 + $0xd40] sm:$0xff]
    %v813 = vld [vmem:[#allocation8 + $0xd48] sm:$0xff]
    %v814 = vld [vmem:[#allocation8 + $0xd50] sm:$0xff]
    %v815 = vld [vmem:[#allocation8 + $0xd58] sm:$0xff]
    %v816 = vld [vmem:[#allocation8 + $0xd60] sm:$0xff]
    %v817 = vld [vmem:[#allocation8 + $0xd68] sm:$0xff]
    %v818 = vld [vmem:[#allocation8 + $0xd70] sm:$0xff]
    %v819 = vld [vmem:[#allocation8 + $0xd78] sm:$0xff]
    %v820 = vld [vmem:[#allocation8 + $0xd80] sm:$0xff]
    %v821 = vld [vmem:[#allocation8 + $0xd88] sm:$0xff]
    %v822 = vld [vmem:[#allocation8 + $0xd90] sm:$0xff]
    %v823 = vld [vmem:[#allocation8 + $0xd98] sm:$0xff]
    %v824 = vld [vmem:[#allocation8 + $0xda0] sm:$0xff]
    %v825 = vld [vmem:[#allocation8 + $0xda8] sm:$0xff]
    %v826 = vld [vmem:[#allocation8 + $0xdb0] sm:$0xff]
    %v827 = vld [vmem:[#allocation8 + $0xdb8] sm:$0xff]
    %v828 = vld [vmem:[#allocation8 + $0xdc0] sm:$0xff]
    %v829 = vld [vmem:[#allocation8 + $0xdc8] sm:$0xff]
    %v830 = vld [vmem:[#allocation8 + $0xdd0] sm:$0xff]
    %v831 = vld [vmem:[#allocation8 + $0xdd8] sm:$0xff]
    %v832 = vld [vmem:[#allocation8 + $0xde0] sm:$0xff]
    %v833 = vld [vmem:[#allocation8 + $0xde8] sm:$0xff]
    %v834 = vld [vmem:[#allocation8 + $0xdf0] sm:$0xff]
    %v835 = vld [vmem:[#allocation8 + $0xdf8] sm:$0xff]
    %v836 = vld [vmem:[#allocation8 + $0xe00] sm:$0xff]
    %v837 = vld [vmem:[#allocation8 + $0xe08] sm:$0xff]
    %v838 = vld [vmem:[#allocation8 + $0xe10] sm:$0xff]
    %v839 = vld [vmem:[#allocation8 + $0xe18] sm:$0xff]
    %v840 = vld [vmem:[#allocation8 + $0xe20] sm:$0xff]
    %v841 = vld [vmem:[#allocation8 + $0xe28] sm:$0xff]
    %v842 = vld [vmem:[#allocation8 + $0xe30] sm:$0xff]
    %v843 = vld [vmem:[#allocation8 + $0xe38] sm:$0xff]
    %v844 = vld [vmem:[#allocation8 + $0xe40] sm:$0xff]
    %v845 = vld [vmem:[#allocation8 + $0xe48] sm:$0xff]
    %v846 = vld [vmem:[#allocation8 + $0xe50] sm:$0xff]
    %v847 = vld [vmem:[#allocation8 + $0xe58] sm:$0xff]
    %v848 = vld [vmem:[#allocation8 + $0xe60] sm:$0xff]
    %v849 = vld [vmem:[#allocation8 + $0xe68] sm:$0xff]
    %v850 = vld [vmem:[#allocation8 + $0xe70] sm:$0xff]
    %v851 = vld [vmem:[#allocation8 + $0xe78] sm:$0xff]
    %v852 = vld [vmem:[#allocation8 + $0xe80] sm:$0xff]
    %v853 = vld [vmem:[#allocation8 + $0xe88] sm:$0xff]
    %v854 = vld [vmem:[#allocation8 + $0xe90] sm:$0xff]
    %v855 = vld [vmem:[#allocation8 + $0xe98] sm:$0xff]
    %v856 = vld [vmem:[#allocation8 + $0xea0] sm:$0xff]
    %v857 = vld [vmem:[#allocation8 + $0xea8] sm:$0xff]
    %v858 = vld [vmem:[#allocation8 + $0xeb0] sm:$0xff]
    %v859 = vld [vmem:[#allocation8 + $0xeb8] sm:$0xff]
    %v860 = vld [vmem:[#allocation8 + $0xec0] sm:$0xff]
    %v861 = vld [vmem:[#allocation8 + $0xec8] sm:$0xff]
    %v862 = vld [vmem:[#allocation8 + $0xed0] sm:$0xff]
    %v863 = vld [vmem:[#allocation8 + $0xed8] sm:$0xff]
    %v864 = vld [vmem:[#allocation8 + $0xee0] sm:$0xff]
    %v865 = vld [vmem:[#allocation8 + $0xee8] sm:$0xff]
    %v866 = vld [vmem:[#allocation8 + $0xef0] sm:$0xff]
    %v867 = vld [vmem:[#allocation8 + $0xef8] sm:$0xff]
    %v868 = vld [vmem:[#allocation8 + $0xf00] sm:$0xff]
    %v869 = vld [vmem:[#allocation8 + $0xf08] sm:$0xff]
    %v870 = vld [vmem:[#allocation8 + $0xf10] sm:$0xff]
    %v871 = vld [vmem:[#allocation8 + $0xf18] sm:$0xff]
    %v872 = vld [vmem:[#allocation8 + $0xf20] sm:$0xff]
    %v873 = vld [vmem:[#allocation8 + $0xf28] sm:$0xff]
    %v874 = vld [vmem:[#allocation8 + $0xf30] sm:$0xff]
    %v875 = vld [vmem:[#allocation8 + $0xf38] sm:$0xff]
    %v876 = vld [vmem:[#allocation8 + $0xf40] sm:$0xff]
    %v877 = vld [vmem:[#allocation8 + $0xf48] sm:$0xff]
    %v878 = vld [vmem:[#allocation8 + $0xf50] sm:$0xff]
    %v879 = vld [vmem:[#allocation8 + $0xf58] sm:$0xff]
    %v880 = vld [vmem:[#allocation8 + $0xf60] sm:$0xff]
    %v881 = vld [vmem:[#allocation8 + $0xf68] sm:$0xff]
    %v882 = vld [vmem:[#allocation8 + $0xf70] sm:$0xff]
    %v883 = vld [vmem:[#allocation8 + $0xf78] sm:$0xff]
    %v884 = vld [vmem:[#allocation8 + $0xf80] sm:$0xff]
    %v885 = vld [vmem:[#allocation8 + $0xf88] sm:$0xff]
    %v886 = vld [vmem:[#allocation8 + $0xf90] sm:$0xff]
    %v887 = vld [vmem:[#allocation8 + $0xf98] sm:$0xff]
    %v888 = vld [vmem:[#allocation8 + $0xfa0] sm:$0xff]
    %v889 = vld [vmem:[#allocation8 + $0xfa8] sm:$0xff]
    %v890 = vld [vmem:[#allocation8 + $0xfb0] sm:$0xff]
    %v891 = vld [vmem:[#allocation8 + $0xfb8] sm:$0xff]
    %v892 = vld [vmem:[#allocation8 + $0xfc0] sm:$0xff]
    %v893 = vld [vmem:[#allocation8 + $0xfc8] sm:$0xff]
    %v894 = vld [vmem:[#allocation8 + $0xfd0] sm:$0xff]
    %v895 = vld [vmem:[#allocation8 + $0xfd8] sm:$0xff]
    %v896 = vld [vmem:[#allocation8 + $0xfe0] sm:$0xff]
    %v897 = vld [vmem:[#allocation8 + $0xfe8] sm:$0xff]
    %v898 = vld [vmem:[#allocation8 + $0xff0] sm:$0xff]
    %v899 = vld [vmem:[#allocation8 + $0xff8] sm:$0xff]
    %v900 = vld [vmem:[#allocation10] sm:$0xff]
    %v902 = vperm.slane %v900, 0
    %v903 = vperm.slane %v900, 1
    %v904 = vperm.slane %v900, 2
    %v905 = vperm.slane %v900, 3
    %v906 = vperm.slane %v900, 4
    %v907 = vperm.slane %v900, 5
    %v908 = vperm.slane %v900, 6
    %v909 = vperm.slane %v900, 7
    %v1430 = vunpack.c.l.b16 %v388
    %v1431 = vunpack.c.h.b16 %v388
    %v1432 = vunpack.c.l.b16 %v389
    %v1433 = vunpack.c.h.b16 %v389
    %v1434 = vunpack.c.l.b16 %v390
    %v1435 = vunpack.c.h.b16 %v390
    %v1436 = vunpack.c.l.b16 %v391
    %v1437 = vunpack.c.h.b16 %v391
    %v1438 = vunpack.c.l.b16 %v392
    %v1439 = vunpack.c.h.b16 %v392
    %v1440 = vunpack.c.l.b16 %v393
    %v1441 = vunpack.c.h.b16 %v393
    %v1442 = vunpack.c.l.b16 %v394
    %v1443 = vunpack.c.h.b16 %v394
    %v1444 = vunpack.c.l.b16 %v395
    %v1445 = vunpack.c.h.b16 %v395
    %v1446 = vunpack.c.l.b16 %v396
    %v1447 = vunpack.c.h.b16 %v396
    %v1448 = vunpack.c.l.b16 %v397
    %v1449 = vunpack.c.h.b16 %v397
    %v1450 = vunpack.c.l.b16 %v398
    %v1451 = vunpack.c.h.b16 %v398
    %v1452 = vunpack.c.l.b16 %v399
    %v1453 = vunpack.c.h.b16 %v399
    %v1454 = vunpack.c.l.b16 %v400
    %v1455 = vunpack.c.h.b16 %v400
    %v1456 = vunpack.c.l.b16 %v401
    %v1457 = vunpack.c.h.b16 %v401
    %v1458 = vunpack.c.l.b16 %v402
    %v1459 = vunpack.c.h.b16 %v402
    %v1460 = vunpack.c.l.b16 %v403
    %v1461 = vunpack.c.h.b16 %v403
    %v1462 = vunpack.c.l.b16 %v404
    %v1463 = vunpack.c.h.b16 %v404
    %v1464 = vunpack.c.l.b16 %v405
    %v1465 = vunpack.c.h.b16 %v405
    %v1466 = vunpack.c.l.b16 %v406
    %v1467 = vunpack.c.h.b16 %v406
    %v1468 = vunpack.c.l.b16 %v407
    %v1469 = vunpack.c.h.b16 %v407
    %v1470 = vunpack.c.l.b16 %v408
    %v1471 = vunpack.c.h.b16 %v408
    %v1472 = vunpack.c.l.b16 %v409
    %v1473 = vunpack.c.h.b16 %v409
    %v1474 = vunpack.c.l.b16 %v410
    %v1475 = vunpack.c.h.b16 %v410
    %v1476 = vunpack.c.l.b16 %v411
    %v1477 = vunpack.c.h.b16 %v411
    %v1478 = vunpack.c.l.b16 %v412
    %v1479 = vunpack.c.h.b16 %v412
    %v1480 = vunpack.c.l.b16 %v413
    %v1481 = vunpack.c.h.b16 %v413
    %v1482 = vunpack.c.l.b16 %v414
    %v1483 = vunpack.c.h.b16 %v414
    %v1484 = vunpack.c.l.b16 %v415
    %v1485 = vunpack.c.h.b16 %v415
    %v1486 = vunpack.c.l.b16 %v416
    %v1487 = vunpack.c.h.b16 %v416
    %v1488 = vunpack.c.l.b16 %v417
    %v1489 = vunpack.c.h.b16 %v417
    %v1490 = vunpack.c.l.b16 %v418
    %v1491 = vunpack.c.h.b16 %v418
    %v1492 = vunpack.c.l.b16 %v419
    %v1493 = vunpack.c.h.b16 %v419
    %v1494 = vunpack.c.l.b16 %v420
    %v1495 = vunpack.c.h.b16 %v420
    %v1496 = vunpack.c.l.b16 %v421
    %v1497 = vunpack.c.h.b16 %v421
    %v1498 = vunpack.c.l.b16 %v422
    %v1499 = vunpack.c.h.b16 %v422
    %v1500 = vunpack.c.l.b16 %v423
    %v1501 = vunpack.c.h.b16 %v423
    %v1502 = vunpack.c.l.b16 %v424
    %v1503 = vunpack.c.h.b16 %v424
    %v1504 = vunpack.c.l.b16 %v425
    %v1505 = vunpack.c.h.b16 %v425
    %v1506 = vunpack.c.l.b16 %v426
    %v1507 = vunpack.c.h.b16 %v426
    %v1508 = vunpack.c.l.b16 %v427
    %v1509 = vunpack.c.h.b16 %v427
    %v1510 = vunpack.c.l.b16 %v428
    %v1511 = vunpack.c.h.b16 %v428
    %v1512 = vunpack.c.l.b16 %v429
    %v1513 = vunpack.c.h.b16 %v429
    %v1514 = vunpack.c.l.b16 %v430
    %v1515 = vunpack.c.h.b16 %v430
    %v1516 = vunpack.c.l.b16 %v431
    %v1517 = vunpack.c.h.b16 %v431
    %v1518 = vunpack.c.l.b16 %v432
    %v1519 = vunpack.c.h.b16 %v432
    %v1520 = vunpack.c.l.b16 %v433
    %v1521 = vunpack.c.h.b16 %v433
    %v1522 = vunpack.c.l.b16 %v434
    %v1523 = vunpack.c.h.b16 %v434
    %v1524 = vunpack.c.l.b16 %v435
    %v1525 = vunpack.c.h.b16 %v435
    %v1526 = vunpack.c.l.b16 %v436
    %v1527 = vunpack.c.h.b16 %v436
    %v1528 = vunpack.c.l.b16 %v437
    %v1529 = vunpack.c.h.b16 %v437
    %v1530 = vunpack.c.l.b16 %v438
    %v1531 = vunpack.c.h.b16 %v438
    %v1532 = vunpack.c.l.b16 %v439
    %v1533 = vunpack.c.h.b16 %v439
    %v1534 = vunpack.c.l.b16 %v440
    %v1535 = vunpack.c.h.b16 %v440
    %v1536 = vunpack.c.l.b16 %v441
    %v1537 = vunpack.c.h.b16 %v441
    %v1538 = vunpack.c.l.b16 %v442
    %v1539 = vunpack.c.h.b16 %v442
    %v1540 = vunpack.c.l.b16 %v443
    %v1541 = vunpack.c.h.b16 %v443
    %v1542 = vunpack.c.l.b16 %v444
    %v1543 = vunpack.c.h.b16 %v444
    %v1544 = vunpack.c.l.b16 %v445
    %v1545 = vunpack.c.h.b16 %v445
    %v1546 = vunpack.c.l.b16 %v446
    %v1547 = vunpack.c.h.b16 %v446
    %v1548 = vunpack.c.l.b16 %v447
    %v1549 = vunpack.c.h.b16 %v447
    %v1550 = vunpack.c.l.b16 %v448
    %v1551 = vunpack.c.h.b16 %v448
    %v1552 = vunpack.c.l.b16 %v449
    %v1553 = vunpack.c.h.b16 %v449
    %v1554 = vunpack.c.l.b16 %v450
    %v1555 = vunpack.c.h.b16 %v450
    %v1556 = vunpack.c.l.b16 %v451
    %v1557 = vunpack.c.h.b16 %v451
    %v1558 = vunpack.c.l.b16 %v452
    %v1559 = vunpack.c.h.b16 %v452
    %v1560 = vunpack.c.l.b16 %v453
    %v1561 = vunpack.c.h.b16 %v453
    %v1562 = vunpack.c.l.b16 %v454
    %v1563 = vunpack.c.h.b16 %v454
    %v1564 = vunpack.c.l.b16 %v455
    %v1565 = vunpack.c.h.b16 %v455
    %v1566 = vunpack.c.l.b16 %v456
    %v1567 = vunpack.c.h.b16 %v456
    %v1568 = vunpack.c.l.b16 %v457
    %v1569 = vunpack.c.h.b16 %v457
    %v1570 = vunpack.c.l.b16 %v458
    %v1571 = vunpack.c.h.b16 %v458
    %v1572 = vunpack.c.l.b16 %v459
    %v1573 = vunpack.c.h.b16 %v459
    %v1574 = vunpack.c.l.b16 %v460
    %v1575 = vunpack.c.h.b16 %v460
    %v1576 = vunpack.c.l.b16 %v461
    %v1577 = vunpack.c.h.b16 %v461
    %v1578 = vunpack.c.l.b16 %v462
    %v1579 = vunpack.c.h.b16 %v462
    %v1580 = vunpack.c.l.b16 %v463
    %v1581 = vunpack.c.h.b16 %v463
    %v1582 = vunpack.c.l.b16 %v464
    %v1583 = vunpack.c.h.b16 %v464
    %v1584 = vunpack.c.l.b16 %v465
    %v1585 = vunpack.c.h.b16 %v465
    %v1586 = vunpack.c.l.b16 %v466
    %v1587 = vunpack.c.h.b16 %v466
    %v1588 = vunpack.c.l.b16 %v467
    %v1589 = vunpack.c.h.b16 %v467
    %v1590 = vunpack.c.l.b16 %v468
    %v1591 = vunpack.c.h.b16 %v468
    %v1592 = vunpack.c.l.b16 %v469
    %v1593 = vunpack.c.h.b16 %v469
    %v1594 = vunpack.c.l.b16 %v470
    %v1595 = vunpack.c.h.b16 %v470
    %v1596 = vunpack.c.l.b16 %v471
    %v1597 = vunpack.c.h.b16 %v471
    %v1598 = vunpack.c.l.b16 %v472
    %v1599 = vunpack.c.h.b16 %v472
    %v1600 = vunpack.c.l.b16 %v473
    %v1601 = vunpack.c.h.b16 %v473
    %v1602 = vunpack.c.l.b16 %v474
    %v1603 = vunpack.c.h.b16 %v474
    %v1604 = vunpack.c.l.b16 %v475
    %v1605 = vunpack.c.h.b16 %v475
    %v1606 = vunpack.c.l.b16 %v476
    %v1607 = vunpack.c.h.b16 %v476
    %v1608 = vunpack.c.l.b16 %v477
    %v1609 = vunpack.c.h.b16 %v477
    %v1610 = vunpack.c.l.b16 %v478
    %v1611 = vunpack.c.h.b16 %v478
    %v1612 = vunpack.c.l.b16 %v479
    %v1613 = vunpack.c.h.b16 %v479
    %v1614 = vunpack.c.l.b16 %v480
    %v1615 = vunpack.c.h.b16 %v480
    %v1616 = vunpack.c.l.b16 %v481
    %v1617 = vunpack.c.h.b16 %v481
    %v1618 = vunpack.c.l.b16 %v482
    %v1619 = vunpack.c.h.b16 %v482
    %v1620 = vunpack.c.l.b16 %v483
    %v1621 = vunpack.c.h.b16 %v483
    %v1622 = vunpack.c.l.b16 %v484
    %v1623 = vunpack.c.h.b16 %v484
    %v1624 = vunpack.c.l.b16 %v485
    %v1625 = vunpack.c.h.b16 %v485
    %v1626 = vunpack.c.l.b16 %v486
    %v1627 = vunpack.c.h.b16 %v486
    %v1628 = vunpack.c.l.b16 %v487
    %v1629 = vunpack.c.h.b16 %v487
    %v1630 = vunpack.c.l.b16 %v488
    %v1631 = vunpack.c.h.b16 %v488
    %v1632 = vunpack.c.l.b16 %v489
    %v1633 = vunpack.c.h.b16 %v489
    %v1634 = vunpack.c.l.b16 %v490
    %v1635 = vunpack.c.h.b16 %v490
    %v1636 = vunpack.c.l.b16 %v491
    %v1637 = vunpack.c.h.b16 %v491
    %v1638 = vunpack.c.l.b16 %v492
    %v1639 = vunpack.c.h.b16 %v492
    %v1640 = vunpack.c.l.b16 %v493
    %v1641 = vunpack.c.h.b16 %v493
    %v1642 = vunpack.c.l.b16 %v494
    %v1643 = vunpack.c.h.b16 %v494
    %v1644 = vunpack.c.l.b16 %v495
    %v1645 = vunpack.c.h.b16 %v495
    %v1646 = vunpack.c.l.b16 %v496
    %v1647 = vunpack.c.h.b16 %v496
    %v1648 = vunpack.c.l.b16 %v497
    %v1649 = vunpack.c.h.b16 %v497
    %v1650 = vunpack.c.l.b16 %v498
    %v1651 = vunpack.c.h.b16 %v498
    %v1652 = vunpack.c.l.b16 %v499
    %v1653 = vunpack.c.h.b16 %v499
    %v1654 = vunpack.c.l.b16 %v500
    %v1655 = vunpack.c.h.b16 %v500
    %v1656 = vunpack.c.l.b16 %v501
    %v1657 = vunpack.c.h.b16 %v501
    %v1658 = vunpack.c.l.b16 %v502
    %v1659 = vunpack.c.h.b16 %v502
    %v1660 = vunpack.c.l.b16 %v503
    %v1661 = vunpack.c.h.b16 %v503
    %v1662 = vunpack.c.l.b16 %v504
    %v1663 = vunpack.c.h.b16 %v504
    %v1664 = vunpack.c.l.b16 %v505
    %v1665 = vunpack.c.h.b16 %v505
    %v1666 = vunpack.c.l.b16 %v506
    %v1667 = vunpack.c.h.b16 %v506
    %v1668 = vunpack.c.l.b16 %v507
    %v1669 = vunpack.c.h.b16 %v507
    %v1670 = vunpack.c.l.b16 %v508
    %v1671 = vunpack.c.h.b16 %v508
    %v1672 = vunpack.c.l.b16 %v509
    %v1673 = vunpack.c.h.b16 %v509
    %v1674 = vunpack.c.l.b16 %v510
    %v1675 = vunpack.c.h.b16 %v510
    %v1676 = vunpack.c.l.b16 %v511
    %v1677 = vunpack.c.h.b16 %v511
    %v1678 = vunpack.c.l.b16 %v512
    %v1679 = vunpack.c.h.b16 %v512
    %v1680 = vunpack.c.l.b16 %v513
    %v1681 = vunpack.c.h.b16 %v513
    %v1682 = vunpack.c.l.b16 %v514
    %v1683 = vunpack.c.h.b16 %v514
    %v1684 = vunpack.c.l.b16 %v515
    %v1685 = vunpack.c.h.b16 %v515
    %v1686 = vunpack.c.l.b16 %v516
    %v1687 = vunpack.c.h.b16 %v516
    %v1688 = vunpack.c.l.b16 %v517
    %v1689 = vunpack.c.h.b16 %v517
    %v1690 = vunpack.c.l.b16 %v518
    %v1691 = vunpack.c.h.b16 %v518
    %v1692 = vunpack.c.l.b16 %v519
    %v1693 = vunpack.c.h.b16 %v519
    %v1694 = vunpack.c.l.b16 %v520
    %v1695 = vunpack.c.h.b16 %v520
    %v1696 = vunpack.c.l.b16 %v521
    %v1697 = vunpack.c.h.b16 %v521
    %v1698 = vunpack.c.l.b16 %v522
    %v1699 = vunpack.c.h.b16 %v522
    %v1700 = vunpack.c.l.b16 %v523
    %v1701 = vunpack.c.h.b16 %v523
    %v1702 = vunpack.c.l.b16 %v524
    %v1703 = vunpack.c.h.b16 %v524
    %v1704 = vunpack.c.l.b16 %v525
    %v1705 = vunpack.c.h.b16 %v525
    %v1706 = vunpack.c.l.b16 %v526
    %v1707 = vunpack.c.h.b16 %v526
    %v1708 = vunpack.c.l.b16 %v527
    %v1709 = vunpack.c.h.b16 %v527
    %v1710 = vunpack.c.l.b16 %v528
    %v1711 = vunpack.c.h.b16 %v528
    %v1712 = vunpack.c.l.b16 %v529
    %v1713 = vunpack.c.h.b16 %v529
    %v1714 = vunpack.c.l.b16 %v530
    %v1715 = vunpack.c.h.b16 %v530
    %v1716 = vunpack.c.l.b16 %v531
    %v1717 = vunpack.c.h.b16 %v531
    %v1718 = vunpack.c.l.b16 %v532
    %v1719 = vunpack.c.h.b16 %v532
    %v1720 = vunpack.c.l.b16 %v533
    %v1721 = vunpack.c.h.b16 %v533
    %v1722 = vunpack.c.l.b16 %v534
    %v1723 = vunpack.c.h.b16 %v534
    %v1724 = vunpack.c.l.b16 %v535
    %v1725 = vunpack.c.h.b16 %v535
    %v1726 = vunpack.c.l.b16 %v536
    %v1727 = vunpack.c.h.b16 %v536
    %v1728 = vunpack.c.l.b16 %v537
    %v1729 = vunpack.c.h.b16 %v537
    %v1730 = vunpack.c.l.b16 %v538
    %v1731 = vunpack.c.h.b16 %v538
    %v1732 = vunpack.c.l.b16 %v539
    %v1733 = vunpack.c.h.b16 %v539
    %v1734 = vunpack.c.l.b16 %v540
    %v1735 = vunpack.c.h.b16 %v540
    %v1736 = vunpack.c.l.b16 %v541
    %v1737 = vunpack.c.h.b16 %v541
    %v1738 = vunpack.c.l.b16 %v542
    %v1739 = vunpack.c.h.b16 %v542
    %v1740 = vunpack.c.l.b16 %v543
    %v1741 = vunpack.c.h.b16 %v543
    %v1742 = vunpack.c.l.b16 %v544
    %v1743 = vunpack.c.h.b16 %v544
    %v1744 = vunpack.c.l.b16 %v545
    %v1745 = vunpack.c.h.b16 %v545
    %v1746 = vunpack.c.l.b16 %v546
    %v1747 = vunpack.c.h.b16 %v546
    %v1748 = vunpack.c.l.b16 %v547
    %v1749 = vunpack.c.h.b16 %v547
    %v1750 = vunpack.c.l.b16 %v548
    %v1751 = vunpack.c.h.b16 %v548
    %v1752 = vunpack.c.l.b16 %v549
    %v1753 = vunpack.c.h.b16 %v549
    %v1754 = vunpack.c.l.b16 %v550
    %v1755 = vunpack.c.h.b16 %v550
    %v1756 = vunpack.c.l.b16 %v551
    %v1757 = vunpack.c.h.b16 %v551
    %v1758 = vunpack.c.l.b16 %v552
    %v1759 = vunpack.c.h.b16 %v552
    %v1760 = vunpack.c.l.b16 %v553
    %v1761 = vunpack.c.h.b16 %v553
    %v1762 = vunpack.c.l.b16 %v554
    %v1763 = vunpack.c.h.b16 %v554
    %v1764 = vunpack.c.l.b16 %v555
    %v1765 = vunpack.c.h.b16 %v555
    %v1766 = vunpack.c.l.b16 %v556
    %v1767 = vunpack.c.h.b16 %v556
    %v1768 = vunpack.c.l.b16 %v557
    %v1769 = vunpack.c.h.b16 %v557
    %v1770 = vunpack.c.l.b16 %v558
    %v1771 = vunpack.c.h.b16 %v558
    %v1772 = vunpack.c.l.b16 %v559
    %v1773 = vunpack.c.h.b16 %v559
    %v1774 = vunpack.c.l.b16 %v560
    %v1775 = vunpack.c.h.b16 %v560
    %v1776 = vunpack.c.l.b16 %v561
    %v1777 = vunpack.c.h.b16 %v561
    %v1778 = vunpack.c.l.b16 %v562
    %v1779 = vunpack.c.h.b16 %v562
    %v1780 = vunpack.c.l.b16 %v563
    %v1781 = vunpack.c.h.b16 %v563
    %v1782 = vunpack.c.l.b16 %v564
    %v1783 = vunpack.c.h.b16 %v564
    %v1784 = vunpack.c.l.b16 %v565
    %v1785 = vunpack.c.h.b16 %v565
    %v1786 = vunpack.c.l.b16 %v566
    %v1787 = vunpack.c.h.b16 %v566
    %v1788 = vunpack.c.l.b16 %v567
    %v1789 = vunpack.c.h.b16 %v567
    %v1790 = vunpack.c.l.b16 %v568
    %v1791 = vunpack.c.h.b16 %v568
    %v1792 = vunpack.c.l.b16 %v569
    %v1793 = vunpack.c.h.b16 %v569
    %v1794 = vunpack.c.l.b16 %v570
    %v1795 = vunpack.c.h.b16 %v570
    %v1796 = vunpack.c.l.b16 %v571
    %v1797 = vunpack.c.h.b16 %v571
    %v1798 = vunpack.c.l.b16 %v572
    %v1799 = vunpack.c.h.b16 %v572
    %v1800 = vunpack.c.l.b16 %v573
    %v1801 = vunpack.c.h.b16 %v573
    %v1802 = vunpack.c.l.b16 %v574
    %v1803 = vunpack.c.h.b16 %v574
    %v1804 = vunpack.c.l.b16 %v575
    %v1805 = vunpack.c.h.b16 %v575
    %v1806 = vunpack.c.l.b16 %v576
    %v1807 = vunpack.c.h.b16 %v576
    %v1808 = vunpack.c.l.b16 %v577
    %v1809 = vunpack.c.h.b16 %v577
    %v1810 = vunpack.c.l.b16 %v578
    %v1811 = vunpack.c.h.b16 %v578
    %v1812 = vunpack.c.l.b16 %v579
    %v1813 = vunpack.c.h.b16 %v579
    %v1814 = vunpack.c.l.b16 %v580
    %v1815 = vunpack.c.h.b16 %v580
    %v1816 = vunpack.c.l.b16 %v581
    %v1817 = vunpack.c.h.b16 %v581
    %v1818 = vunpack.c.l.b16 %v582
    %v1819 = vunpack.c.h.b16 %v582
    %v1820 = vunpack.c.l.b16 %v583
    %v1821 = vunpack.c.h.b16 %v583
    %v1822 = vunpack.c.l.b16 %v584
    %v1823 = vunpack.c.h.b16 %v584
    %v1824 = vunpack.c.l.b16 %v585
    %v1825 = vunpack.c.h.b16 %v585
    %v1826 = vunpack.c.l.b16 %v586
    %v1827 = vunpack.c.h.b16 %v586
    %v1828 = vunpack.c.l.b16 %v587
    %v1829 = vunpack.c.h.b16 %v587
    %v1830 = vunpack.c.l.b16 %v588
    %v1831 = vunpack.c.h.b16 %v588
    %v1832 = vunpack.c.l.b16 %v589
    %v1833 = vunpack.c.h.b16 %v589
    %v1834 = vunpack.c.l.b16 %v590
    %v1835 = vunpack.c.h.b16 %v590
    %v1836 = vunpack.c.l.b16 %v591
    %v1837 = vunpack.c.h.b16 %v591
    %v1838 = vunpack.c.l.b16 %v592
    %v1839 = vunpack.c.h.b16 %v592
    %v1840 = vunpack.c.l.b16 %v593
    %v1841 = vunpack.c.h.b16 %v593
    %v1842 = vunpack.c.l.b16 %v594
    %v1843 = vunpack.c.h.b16 %v594
    %v1844 = vunpack.c.l.b16 %v595
    %v1845 = vunpack.c.h.b16 %v595
    %v1846 = vunpack.c.l.b16 %v596
    %v1847 = vunpack.c.h.b16 %v596
    %v1848 = vunpack.c.l.b16 %v597
    %v1849 = vunpack.c.h.b16 %v597
    %v1850 = vunpack.c.l.b16 %v598
    %v1851 = vunpack.c.h.b16 %v598
    %v1852 = vunpack.c.l.b16 %v599
    %v1853 = vunpack.c.h.b16 %v599
    %v1854 = vunpack.c.l.b16 %v600
    %v1855 = vunpack.c.h.b16 %v600
    %v1856 = vunpack.c.l.b16 %v601
    %v1857 = vunpack.c.h.b16 %v601
    %v1858 = vunpack.c.l.b16 %v602
    %v1859 = vunpack.c.h.b16 %v602
    %v1860 = vunpack.c.l.b16 %v603
    %v1861 = vunpack.c.h.b16 %v603
    %v1862 = vunpack.c.l.b16 %v604
    %v1863 = vunpack.c.h.b16 %v604
    %v1864 = vunpack.c.l.b16 %v605
    %v1865 = vunpack.c.h.b16 %v605
    %v1866 = vunpack.c.l.b16 %v606
    %v1867 = vunpack.c.h.b16 %v606
    %v1868 = vunpack.c.l.b16 %v607
    %v1869 = vunpack.c.h.b16 %v607
    %v1870 = vunpack.c.l.b16 %v608
    %v1871 = vunpack.c.h.b16 %v608
    %v1872 = vunpack.c.l.b16 %v609
    %v1873 = vunpack.c.h.b16 %v609
    %v1874 = vunpack.c.l.b16 %v610
    %v1875 = vunpack.c.h.b16 %v610
    %v1876 = vunpack.c.l.b16 %v611
    %v1877 = vunpack.c.h.b16 %v611
    %v1878 = vunpack.c.l.b16 %v612
    %v1879 = vunpack.c.h.b16 %v612
    %v1880 = vunpack.c.l.b16 %v613
    %v1881 = vunpack.c.h.b16 %v613
    %v1882 = vunpack.c.l.b16 %v614
    %v1883 = vunpack.c.h.b16 %v614
    %v1884 = vunpack.c.l.b16 %v615
    %v1885 = vunpack.c.h.b16 %v615
    %v1886 = vunpack.c.l.b16 %v616
    %v1887 = vunpack.c.h.b16 %v616
    %v1888 = vunpack.c.l.b16 %v617
    %v1889 = vunpack.c.h.b16 %v617
    %v1890 = vunpack.c.l.b16 %v618
    %v1891 = vunpack.c.h.b16 %v618
    %v1892 = vunpack.c.l.b16 %v619
    %v1893 = vunpack.c.h.b16 %v619
    %v1894 = vunpack.c.l.b16 %v620
    %v1895 = vunpack.c.h.b16 %v620
    %v1896 = vunpack.c.l.b16 %v621
    %v1897 = vunpack.c.h.b16 %v621
    %v1898 = vunpack.c.l.b16 %v622
    %v1899 = vunpack.c.h.b16 %v622
    %v1900 = vunpack.c.l.b16 %v623
    %v1901 = vunpack.c.h.b16 %v623
    %v1902 = vunpack.c.l.b16 %v624
    %v1903 = vunpack.c.h.b16 %v624
    %v1904 = vunpack.c.l.b16 %v625
    %v1905 = vunpack.c.h.b16 %v625
    %v1906 = vunpack.c.l.b16 %v626
    %v1907 = vunpack.c.h.b16 %v626
    %v1908 = vunpack.c.l.b16 %v627
    %v1909 = vunpack.c.h.b16 %v627
    %v1910 = vunpack.c.l.b16 %v628
    %v1911 = vunpack.c.h.b16 %v628
    %v1912 = vunpack.c.l.b16 %v629
    %v1913 = vunpack.c.h.b16 %v629
    %v1914 = vunpack.c.l.b16 %v630
    %v1915 = vunpack.c.h.b16 %v630
    %v1916 = vunpack.c.l.b16 %v631
    %v1917 = vunpack.c.h.b16 %v631
    %v1918 = vunpack.c.l.b16 %v632
    %v1919 = vunpack.c.h.b16 %v632
    %v1920 = vunpack.c.l.b16 %v633
    %v1921 = vunpack.c.h.b16 %v633
    %v1922 = vunpack.c.l.b16 %v634
    %v1923 = vunpack.c.h.b16 %v634
    %v1924 = vunpack.c.l.b16 %v635
    %v1925 = vunpack.c.h.b16 %v635
    %v1926 = vunpack.c.l.b16 %v636
    %v1927 = vunpack.c.h.b16 %v636
    %v1928 = vunpack.c.l.b16 %v637
    %v1929 = vunpack.c.h.b16 %v637
    %v1930 = vunpack.c.l.b16 %v638
    %v1931 = vunpack.c.h.b16 %v638
    %v1932 = vunpack.c.l.b16 %v639
    %v1933 = vunpack.c.h.b16 %v639
    %v1934 = vunpack.c.l.b16 %v640
    %v1935 = vunpack.c.h.b16 %v640
    %v1936 = vunpack.c.l.b16 %v641
    %v1937 = vunpack.c.h.b16 %v641
    %v1938 = vunpack.c.l.b16 %v642
    %v1939 = vunpack.c.h.b16 %v642
    %v1940 = vunpack.c.l.b16 %v643
    %v1941 = vunpack.c.h.b16 %v643
    %v1942 = vunpack.c.l.b16 %v644
    %v1943 = vunpack.c.h.b16 %v644
    %v1944 = vunpack.c.l.b16 %v645
    %v1945 = vunpack.c.h.b16 %v645
    %v1946 = vunpack.c.l.b16 %v646
    %v1947 = vunpack.c.h.b16 %v646
    %v1948 = vunpack.c.l.b16 %v647
    %v1949 = vunpack.c.h.b16 %v647
    %v1950 = vunpack.c.l.b16 %v648
    %v1951 = vunpack.c.h.b16 %v648
    %v1952 = vunpack.c.l.b16 %v649
    %v1953 = vunpack.c.h.b16 %v649
    %v1954 = vunpack.c.l.b16 %v650
    %v1955 = vunpack.c.h.b16 %v650
    %v1956 = vunpack.c.l.b16 %v651
    %v1957 = vunpack.c.h.b16 %v651
    %v1958 = vunpack.c.l.b16 %v652
    %v1959 = vunpack.c.h.b16 %v652
    %v1960 = vunpack.c.l.b16 %v653
    %v1961 = vunpack.c.h.b16 %v653
    %v1962 = vunpack.c.l.b16 %v654
    %v1963 = vunpack.c.h.b16 %v654
    %v1964 = vunpack.c.l.b16 %v655
    %v1965 = vunpack.c.h.b16 %v655
    %v1966 = vunpack.c.l.b16 %v656
    %v1967 = vunpack.c.h.b16 %v656
    %v1968 = vunpack.c.l.b16 %v657
    %v1969 = vunpack.c.h.b16 %v657
    %v1970 = vunpack.c.l.b16 %v658
    %v1971 = vunpack.c.h.b16 %v658
    %v1972 = vunpack.c.l.b16 %v659
    %v1973 = vunpack.c.h.b16 %v659
    %v1974 = vunpack.c.l.b16 %v660
    %v1975 = vunpack.c.h.b16 %v660
    %v1976 = vunpack.c.l.b16 %v661
    %v1977 = vunpack.c.h.b16 %v661
    %v1978 = vunpack.c.l.b16 %v662
    %v1979 = vunpack.c.h.b16 %v662
    %v1980 = vunpack.c.l.b16 %v663
    %v1981 = vunpack.c.h.b16 %v663
    %v1982 = vunpack.c.l.b16 %v664
    %v1983 = vunpack.c.h.b16 %v664
    %v1984 = vunpack.c.l.b16 %v665
    %v1985 = vunpack.c.h.b16 %v665
    %v1986 = vunpack.c.l.b16 %v666
    %v1987 = vunpack.c.h.b16 %v666
    %v1988 = vunpack.c.l.b16 %v667
    %v1989 = vunpack.c.h.b16 %v667
    %v1990 = vunpack.c.l.b16 %v668
    %v1991 = vunpack.c.h.b16 %v668
    %v1992 = vunpack.c.l.b16 %v669
    %v1993 = vunpack.c.h.b16 %v669
    %v1994 = vunpack.c.l.b16 %v670
    %v1995 = vunpack.c.h.b16 %v670
    %v1996 = vunpack.c.l.b16 %v671
    %v1997 = vunpack.c.h.b16 %v671
    %v1998 = vunpack.c.l.b16 %v672
    %v1999 = vunpack.c.h.b16 %v672
    %v2000 = vunpack.c.l.b16 %v673
    %v2001 = vunpack.c.h.b16 %v673
    %v2002 = vunpack.c.l.b16 %v674
    %v2003 = vunpack.c.h.b16 %v674
    %v2004 = vunpack.c.l.b16 %v675
    %v2005 = vunpack.c.h.b16 %v675
    %v2006 = vunpack.c.l.b16 %v676
    %v2007 = vunpack.c.h.b16 %v676
    %v2008 = vunpack.c.l.b16 %v677
    %v2009 = vunpack.c.h.b16 %v677
    %v2010 = vunpack.c.l.b16 %v678
    %v2011 = vunpack.c.h.b16 %v678
    %v2012 = vunpack.c.l.b16 %v679
    %v2013 = vunpack.c.h.b16 %v679
    %v2014 = vunpack.c.l.b16 %v680
    %v2015 = vunpack.c.h.b16 %v680
    %v2016 = vunpack.c.l.b16 %v681
    %v2017 = vunpack.c.h.b16 %v681
    %v2018 = vunpack.c.l.b16 %v682
    %v2019 = vunpack.c.h.b16 %v682
    %v2020 = vunpack.c.l.b16 %v683
    %v2021 = vunpack.c.h.b16 %v683
    %v2022 = vunpack.c.l.b16 %v684
    %v2023 = vunpack.c.h.b16 %v684
    %v2024 = vunpack.c.l.b16 %v685
    %v2025 = vunpack.c.h.b16 %v685
    %v2026 = vunpack.c.l.b16 %v686
    %v2027 = vunpack.c.h.b16 %v686
    %v2028 = vunpack.c.l.b16 %v687
    %v2029 = vunpack.c.h.b16 %v687
    %v2030 = vunpack.c.l.b16 %v688
    %v2031 = vunpack.c.h.b16 %v688
    %v2032 = vunpack.c.l.b16 %v689
    %v2033 = vunpack.c.h.b16 %v689
    %v2034 = vunpack.c.l.b16 %v690
    %v2035 = vunpack.c.h.b16 %v690
    %v2036 = vunpack.c.l.b16 %v691
    %v2037 = vunpack.c.h.b16 %v691
    %v2038 = vunpack.c.l.b16 %v692
    %v2039 = vunpack.c.h.b16 %v692
    %v2040 = vunpack.c.l.b16 %v693
    %v2041 = vunpack.c.h.b16 %v693
    %v2042 = vunpack.c.l.b16 %v694
    %v2043 = vunpack.c.h.b16 %v694
    %v2044 = vunpack.c.l.b16 %v695
    %v2045 = vunpack.c.h.b16 %v695
    %v2046 = vunpack.c.l.b16 %v696
    %v2047 = vunpack.c.h.b16 %v696
    %v2048 = vunpack.c.l.b16 %v697
    %v2049 = vunpack.c.h.b16 %v697
    %v2050 = vunpack.c.l.b16 %v698
    %v2051 = vunpack.c.h.b16 %v698
    %v2052 = vunpack.c.l.b16 %v699
    %v2053 = vunpack.c.h.b16 %v699
    %v2054 = vunpack.c.l.b16 %v700
    %v2055 = vunpack.c.h.b16 %v700
    %v2056 = vunpack.c.l.b16 %v701
    %v2057 = vunpack.c.h.b16 %v701
    %v2058 = vunpack.c.l.b16 %v702
    %v2059 = vunpack.c.h.b16 %v702
    %v2060 = vunpack.c.l.b16 %v703
    %v2061 = vunpack.c.h.b16 %v703
    %v2062 = vunpack.c.l.b16 %v704
    %v2063 = vunpack.c.h.b16 %v704
    %v2064 = vunpack.c.l.b16 %v705
    %v2065 = vunpack.c.h.b16 %v705
    %v2066 = vunpack.c.l.b16 %v706
    %v2067 = vunpack.c.h.b16 %v706
    %v2068 = vunpack.c.l.b16 %v707
    %v2069 = vunpack.c.h.b16 %v707
    %v2070 = vunpack.c.l.b16 %v708
    %v2071 = vunpack.c.h.b16 %v708
    %v2072 = vunpack.c.l.b16 %v709
    %v2073 = vunpack.c.h.b16 %v709
    %v2074 = vunpack.c.l.b16 %v710
    %v2075 = vunpack.c.h.b16 %v710
    %v2076 = vunpack.c.l.b16 %v711
    %v2077 = vunpack.c.h.b16 %v711
    %v2078 = vunpack.c.l.b16 %v712
    %v2079 = vunpack.c.h.b16 %v712
    %v2080 = vunpack.c.l.b16 %v713
    %v2081 = vunpack.c.h.b16 %v713
    %v2082 = vunpack.c.l.b16 %v714
    %v2083 = vunpack.c.h.b16 %v714
    %v2084 = vunpack.c.l.b16 %v715
    %v2085 = vunpack.c.h.b16 %v715
    %v2086 = vunpack.c.l.b16 %v716
    %v2087 = vunpack.c.h.b16 %v716
    %v2088 = vunpack.c.l.b16 %v717
    %v2089 = vunpack.c.h.b16 %v717
    %v2090 = vunpack.c.l.b16 %v718
    %v2091 = vunpack.c.h.b16 %v718
    %v2092 = vunpack.c.l.b16 %v719
    %v2093 = vunpack.c.h.b16 %v719
    %v2094 = vunpack.c.l.b16 %v720
    %v2095 = vunpack.c.h.b16 %v720
    %v2096 = vunpack.c.l.b16 %v721
    %v2097 = vunpack.c.h.b16 %v721
    %v2098 = vunpack.c.l.b16 %v722
    %v2099 = vunpack.c.h.b16 %v722
    %v2100 = vunpack.c.l.b16 %v723
    %v2101 = vunpack.c.h.b16 %v723
    %v2102 = vunpack.c.l.b16 %v724
    %v2103 = vunpack.c.h.b16 %v724
    %v2104 = vunpack.c.l.b16 %v725
    %v2105 = vunpack.c.h.b16 %v725
    %v2106 = vunpack.c.l.b16 %v726
    %v2107 = vunpack.c.h.b16 %v726
    %v2108 = vunpack.c.l.b16 %v727
    %v2109 = vunpack.c.h.b16 %v727
    %v2110 = vunpack.c.l.b16 %v728
    %v2111 = vunpack.c.h.b16 %v728
    %v2112 = vunpack.c.l.b16 %v729
    %v2113 = vunpack.c.h.b16 %v729
    %v2114 = vunpack.c.l.b16 %v730
    %v2115 = vunpack.c.h.b16 %v730
    %v2116 = vunpack.c.l.b16 %v731
    %v2117 = vunpack.c.h.b16 %v731
    %v2118 = vunpack.c.l.b16 %v732
    %v2119 = vunpack.c.h.b16 %v732
    %v2120 = vunpack.c.l.b16 %v733
    %v2121 = vunpack.c.h.b16 %v733
    %v2122 = vunpack.c.l.b16 %v734
    %v2123 = vunpack.c.h.b16 %v734
    %v2124 = vunpack.c.l.b16 %v735
    %v2125 = vunpack.c.h.b16 %v735
    %v2126 = vunpack.c.l.b16 %v736
    %v2127 = vunpack.c.h.b16 %v736
    %v2128 = vunpack.c.l.b16 %v737
    %v2129 = vunpack.c.h.b16 %v737
    %v2130 = vunpack.c.l.b16 %v738
    %v2131 = vunpack.c.h.b16 %v738
    %v2132 = vunpack.c.l.b16 %v739
    %v2133 = vunpack.c.h.b16 %v739
    %v2134 = vunpack.c.l.b16 %v740
    %v2135 = vunpack.c.h.b16 %v740
    %v2136 = vunpack.c.l.b16 %v741
    %v2137 = vunpack.c.h.b16 %v741
    %v2138 = vunpack.c.l.b16 %v742
    %v2139 = vunpack.c.h.b16 %v742
    %v2140 = vunpack.c.l.b16 %v743
    %v2141 = vunpack.c.h.b16 %v743
    %v2142 = vunpack.c.l.b16 %v744
    %v2143 = vunpack.c.h.b16 %v744
    %v2144 = vunpack.c.l.b16 %v745
    %v2145 = vunpack.c.h.b16 %v745
    %v2146 = vunpack.c.l.b16 %v746
    %v2147 = vunpack.c.h.b16 %v746
    %v2148 = vunpack.c.l.b16 %v747
    %v2149 = vunpack.c.h.b16 %v747
    %v2150 = vunpack.c.l.b16 %v748
    %v2151 = vunpack.c.h.b16 %v748
    %v2152 = vunpack.c.l.b16 %v749
    %v2153 = vunpack.c.h.b16 %v749
    %v2154 = vunpack.c.l.b16 %v750
    %v2155 = vunpack.c.h.b16 %v750
    %v2156 = vunpack.c.l.b16 %v751
    %v2157 = vunpack.c.h.b16 %v751
    %v2158 = vunpack.c.l.b16 %v752
    %v2159 = vunpack.c.h.b16 %v752
    %v2160 = vunpack.c.l.b16 %v753
    %v2161 = vunpack.c.h.b16 %v753
    %v2162 = vunpack.c.l.b16 %v754
    %v2163 = vunpack.c.h.b16 %v754
    %v2164 = vunpack.c.l.b16 %v755
    %v2165 = vunpack.c.h.b16 %v755
    %v2166 = vunpack.c.l.b16 %v756
    %v2167 = vunpack.c.h.b16 %v756
    %v2168 = vunpack.c.l.b16 %v757
    %v2169 = vunpack.c.h.b16 %v757
    %v2170 = vunpack.c.l.b16 %v758
    %v2171 = vunpack.c.h.b16 %v758
    %v2172 = vunpack.c.l.b16 %v759
    %v2173 = vunpack.c.h.b16 %v759
    %v2174 = vunpack.c.l.b16 %v760
    %v2175 = vunpack.c.h.b16 %v760
    %v2176 = vunpack.c.l.b16 %v761
    %v2177 = vunpack.c.h.b16 %v761
    %v2178 = vunpack.c.l.b16 %v762
    %v2179 = vunpack.c.h.b16 %v762
    %v2180 = vunpack.c.l.b16 %v763
    %v2181 = vunpack.c.h.b16 %v763
    %v2182 = vunpack.c.l.b16 %v764
    %v2183 = vunpack.c.h.b16 %v764
    %v2184 = vunpack.c.l.b16 %v765
    %v2185 = vunpack.c.h.b16 %v765
    %v2186 = vunpack.c.l.b16 %v766
    %v2187 = vunpack.c.h.b16 %v766
    %v2188 = vunpack.c.l.b16 %v767
    %v2189 = vunpack.c.h.b16 %v767
    %v2190 = vunpack.c.l.b16 %v768
    %v2191 = vunpack.c.h.b16 %v768
    %v2192 = vunpack.c.l.b16 %v769
    %v2193 = vunpack.c.h.b16 %v769
    %v2194 = vunpack.c.l.b16 %v770
    %v2195 = vunpack.c.h.b16 %v770
    %v2196 = vunpack.c.l.b16 %v771
    %v2197 = vunpack.c.h.b16 %v771
    %v2198 = vunpack.c.l.b16 %v772
    %v2199 = vunpack.c.h.b16 %v772
    %v2200 = vunpack.c.l.b16 %v773
    %v2201 = vunpack.c.h.b16 %v773
    %v2202 = vunpack.c.l.b16 %v774
    %v2203 = vunpack.c.h.b16 %v774
    %v2204 = vunpack.c.l.b16 %v775
    %v2205 = vunpack.c.h.b16 %v775
    %v2206 = vunpack.c.l.b16 %v776
    %v2207 = vunpack.c.h.b16 %v776
    %v2208 = vunpack.c.l.b16 %v777
    %v2209 = vunpack.c.h.b16 %v777
    %v2210 = vunpack.c.l.b16 %v778
    %v2211 = vunpack.c.h.b16 %v778
    %v2212 = vunpack.c.l.b16 %v779
    %v2213 = vunpack.c.h.b16 %v779
    %v2214 = vunpack.c.l.b16 %v780
    %v2215 = vunpack.c.h.b16 %v780
    %v2216 = vunpack.c.l.b16 %v781
    %v2217 = vunpack.c.h.b16 %v781
    %v2218 = vunpack.c.l.b16 %v782
    %v2219 = vunpack.c.h.b16 %v782
    %v2220 = vunpack.c.l.b16 %v783
    %v2221 = vunpack.c.h.b16 %v783
    %v2222 = vunpack.c.l.b16 %v784
    %v2223 = vunpack.c.h.b16 %v784
    %v2224 = vunpack.c.l.b16 %v785
    %v2225 = vunpack.c.h.b16 %v785
    %v2226 = vunpack.c.l.b16 %v786
    %v2227 = vunpack.c.h.b16 %v786
    %v2228 = vunpack.c.l.b16 %v787
    %v2229 = vunpack.c.h.b16 %v787
    %v2230 = vunpack.c.l.b16 %v788
    %v2231 = vunpack.c.h.b16 %v788
    %v2232 = vunpack.c.l.b16 %v789
    %v2233 = vunpack.c.h.b16 %v789
    %v2234 = vunpack.c.l.b16 %v790
    %v2235 = vunpack.c.h.b16 %v790
    %v2236 = vunpack.c.l.b16 %v791
    %v2237 = vunpack.c.h.b16 %v791
    %v2238 = vunpack.c.l.b16 %v792
    %v2239 = vunpack.c.h.b16 %v792
    %v2240 = vunpack.c.l.b16 %v793
    %v2241 = vunpack.c.h.b16 %v793
    %v2242 = vunpack.c.l.b16 %v794
    %v2243 = vunpack.c.h.b16 %v794
    %v2244 = vunpack.c.l.b16 %v795
    %v2245 = vunpack.c.h.b16 %v795
    %v2246 = vunpack.c.l.b16 %v796
    %v2247 = vunpack.c.h.b16 %v796
    %v2248 = vunpack.c.l.b16 %v797
    %v2249 = vunpack.c.h.b16 %v797
    %v2250 = vunpack.c.l.b16 %v798
    %v2251 = vunpack.c.h.b16 %v798
    %v2252 = vunpack.c.l.b16 %v799
    %v2253 = vunpack.c.h.b16 %v799
    %v2254 = vunpack.c.l.b16 %v800
    %v2255 = vunpack.c.h.b16 %v800
    %v2256 = vunpack.c.l.b16 %v801
    %v2257 = vunpack.c.h.b16 %v801
    %v2258 = vunpack.c.l.b16 %v802
    %v2259 = vunpack.c.h.b16 %v802
    %v2260 = vunpack.c.l.b16 %v803
    %v2261 = vunpack.c.h.b16 %v803
    %v2262 = vunpack.c.l.b16 %v804
    %v2263 = vunpack.c.h.b16 %v804
    %v2264 = vunpack.c.l.b16 %v805
    %v2265 = vunpack.c.h.b16 %v805
    %v2266 = vunpack.c.l.b16 %v806
    %v2267 = vunpack.c.h.b16 %v806
    %v2268 = vunpack.c.l.b16 %v807
    %v2269 = vunpack.c.h.b16 %v807
    %v2270 = vunpack.c.l.b16 %v808
    %v2271 = vunpack.c.h.b16 %v808
    %v2272 = vunpack.c.l.b16 %v809
    %v2273 = vunpack.c.h.b16 %v809
    %v2274 = vunpack.c.l.b16 %v810
    %v2275 = vunpack.c.h.b16 %v810
    %v2276 = vunpack.c.l.b16 %v811
    %v2277 = vunpack.c.h.b16 %v811
    %v2278 = vunpack.c.l.b16 %v812
    %v2279 = vunpack.c.h.b16 %v812
    %v2280 = vunpack.c.l.b16 %v813
    %v2281 = vunpack.c.h.b16 %v813
    %v2282 = vunpack.c.l.b16 %v814
    %v2283 = vunpack.c.h.b16 %v814
    %v2284 = vunpack.c.l.b16 %v815
    %v2285 = vunpack.c.h.b16 %v815
    %v2286 = vunpack.c.l.b16 %v816
    %v2287 = vunpack.c.h.b16 %v816
    %v2288 = vunpack.c.l.b16 %v817
    %v2289 = vunpack.c.h.b16 %v817
    %v2290 = vunpack.c.l.b16 %v818
    %v2291 = vunpack.c.h.b16 %v818
    %v2292 = vunpack.c.l.b16 %v819
    %v2293 = vunpack.c.h.b16 %v819
    %v2294 = vunpack.c.l.b16 %v820
    %v2295 = vunpack.c.h.b16 %v820
    %v2296 = vunpack.c.l.b16 %v821
    %v2297 = vunpack.c.h.b16 %v821
    %v2298 = vunpack.c.l.b16 %v822
    %v2299 = vunpack.c.h.b16 %v822
    %v2300 = vunpack.c.l.b16 %v823
    %v2301 = vunpack.c.h.b16 %v823
    %v2302 = vunpack.c.l.b16 %v824
    %v2303 = vunpack.c.h.b16 %v824
    %v2304 = vunpack.c.l.b16 %v825
    %v2305 = vunpack.c.h.b16 %v825
    %v2306 = vunpack.c.l.b16 %v826
    %v2307 = vunpack.c.h.b16 %v826
    %v2308 = vunpack.c.l.b16 %v827
    %v2309 = vunpack.c.h.b16 %v827
    %v2310 = vunpack.c.l.b16 %v828
    %v2311 = vunpack.c.h.b16 %v828
    %v2312 = vunpack.c.l.b16 %v829
    %v2313 = vunpack.c.h.b16 %v829
    %v2314 = vunpack.c.l.b16 %v830
    %v2315 = vunpack.c.h.b16 %v830
    %v2316 = vunpack.c.l.b16 %v831
    %v2317 = vunpack.c.h.b16 %v831
    %v2318 = vunpack.c.l.b16 %v832
    %v2319 = vunpack.c.h.b16 %v832
    %v2320 = vunpack.c.l.b16 %v833
    %v2321 = vunpack.c.h.b16 %v833
    %v2322 = vunpack.c.l.b16 %v834
    %v2323 = vunpack.c.h.b16 %v834
    %v2324 = vunpack.c.l.b16 %v835
    %v2325 = vunpack.c.h.b16 %v835
    %v2326 = vunpack.c.l.b16 %v836
    %v2327 = vunpack.c.h.b16 %v836
    %v2328 = vunpack.c.l.b16 %v837
    %v2329 = vunpack.c.h.b16 %v837
    %v2330 = vunpack.c.l.b16 %v838
    %v2331 = vunpack.c.h.b16 %v838
    %v2332 = vunpack.c.l.b16 %v839
    %v2333 = vunpack.c.h.b16 %v839
    %v2334 = vunpack.c.l.b16 %v840
    %v2335 = vunpack.c.h.b16 %v840
    %v2336 = vunpack.c.l.b16 %v841
    %v2337 = vunpack.c.h.b16 %v841
    %v2338 = vunpack.c.l.b16 %v842
    %v2339 = vunpack.c.h.b16 %v842
    %v2340 = vunpack.c.l.b16 %v843
    %v2341 = vunpack.c.h.b16 %v843
    %v2342 = vunpack.c.l.b16 %v844
    %v2343 = vunpack.c.h.b16 %v844
    %v2344 = vunpack.c.l.b16 %v845
    %v2345 = vunpack.c.h.b16 %v845
    %v2346 = vunpack.c.l.b16 %v846
    %v2347 = vunpack.c.h.b16 %v846
    %v2348 = vunpack.c.l.b16 %v847
    %v2349 = vunpack.c.h.b16 %v847
    %v2350 = vunpack.c.l.b16 %v848
    %v2351 = vunpack.c.h.b16 %v848
    %v2352 = vunpack.c.l.b16 %v849
    %v2353 = vunpack.c.h.b16 %v849
    %v2354 = vunpack.c.l.b16 %v850
    %v2355 = vunpack.c.h.b16 %v850
    %v2356 = vunpack.c.l.b16 %v851
    %v2357 = vunpack.c.h.b16 %v851
    %v2358 = vunpack.c.l.b16 %v852
    %v2359 = vunpack.c.h.b16 %v852
    %v2360 = vunpack.c.l.b16 %v853
    %v2361 = vunpack.c.h.b16 %v853
    %v2362 = vunpack.c.l.b16 %v854
    %v2363 = vunpack.c.h.b16 %v854
    %v2364 = vunpack.c.l.b16 %v855
    %v2365 = vunpack.c.h.b16 %v855
    %v2366 = vunpack.c.l.b16 %v856
    %v2367 = vunpack.c.h.b16 %v856
    %v2368 = vunpack.c.l.b16 %v857
    %v2369 = vunpack.c.h.b16 %v857
    %v2370 = vunpack.c.l.b16 %v858
    %v2371 = vunpack.c.h.b16 %v858
    %v2372 = vunpack.c.l.b16 %v859
    %v2373 = vunpack.c.h.b16 %v859
    %v2374 = vunpack.c.l.b16 %v860
    %v2375 = vunpack.c.h.b16 %v860
    %v2376 = vunpack.c.l.b16 %v861
    %v2377 = vunpack.c.h.b16 %v861
    %v2378 = vunpack.c.l.b16 %v862
    %v2379 = vunpack.c.h.b16 %v862
    %v2380 = vunpack.c.l.b16 %v863
    %v2381 = vunpack.c.h.b16 %v863
    %v2382 = vunpack.c.l.b16 %v864
    %v2383 = vunpack.c.h.b16 %v864
    %v2384 = vunpack.c.l.b16 %v865
    %v2385 = vunpack.c.h.b16 %v865
    %v2386 = vunpack.c.l.b16 %v866
    %v2387 = vunpack.c.h.b16 %v866
    %v2388 = vunpack.c.l.b16 %v867
    %v2389 = vunpack.c.h.b16 %v867
    %v2390 = vunpack.c.l.b16 %v868
    %v2391 = vunpack.c.h.b16 %v868
    %v2392 = vunpack.c.l.b16 %v869
    %v2393 = vunpack.c.h.b16 %v869
    %v2394 = vunpack.c.l.b16 %v870
    %v2395 = vunpack.c.h.b16 %v870
    %v2396 = vunpack.c.l.b16 %v871
    %v2397 = vunpack.c.h.b16 %v871
    %v2398 = vunpack.c.l.b16 %v872
    %v2399 = vunpack.c.h.b16 %v872
    %v2400 = vunpack.c.l.b16 %v873
    %v2401 = vunpack.c.h.b16 %v873
    %v2402 = vunpack.c.l.b16 %v874
    %v2403 = vunpack.c.h.b16 %v874
    %v2404 = vunpack.c.l.b16 %v875
    %v2405 = vunpack.c.h.b16 %v875
    %v2406 = vunpack.c.l.b16 %v876
    %v2407 = vunpack.c.h.b16 %v876
    %v2408 = vunpack.c.l.b16 %v877
    %v2409 = vunpack.c.h.b16 %v877
    %v2410 = vunpack.c.l.b16 %v878
    %v2411 = vunpack.c.h.b16 %v878
    %v2412 = vunpack.c.l.b16 %v879
    %v2413 = vunpack.c.h.b16 %v879
    %v2414 = vunpack.c.l.b16 %v880
    %v2415 = vunpack.c.h.b16 %v880
    %v2416 = vunpack.c.l.b16 %v881
    %v2417 = vunpack.c.h.b16 %v881
    %v2418 = vunpack.c.l.b16 %v882
    %v2419 = vunpack.c.h.b16 %v882
    %v2420 = vunpack.c.l.b16 %v883
    %v2421 = vunpack.c.h.b16 %v883
    %v2422 = vunpack.c.l.b16 %v884
    %v2423 = vunpack.c.h.b16 %v884
    %v2424 = vunpack.c.l.b16 %v885
    %v2425 = vunpack.c.h.b16 %v885
    %v2426 = vunpack.c.l.b16 %v886
    %v2427 = vunpack.c.h.b16 %v886
    %v2428 = vunpack.c.l.b16 %v887
    %v2429 = vunpack.c.h.b16 %v887
    %v2430 = vunpack.c.l.b16 %v888
    %v2431 = vunpack.c.h.b16 %v888
    %v2432 = vunpack.c.l.b16 %v889
    %v2433 = vunpack.c.h.b16 %v889
    %v2434 = vunpack.c.l.b16 %v890
    %v2435 = vunpack.c.h.b16 %v890
    %v2436 = vunpack.c.l.b16 %v891
    %v2437 = vunpack.c.h.b16 %v891
    %v2438 = vunpack.c.l.b16 %v892
    %v2439 = vunpack.c.h.b16 %v892
    %v2440 = vunpack.c.l.b16 %v893
    %v2441 = vunpack.c.h.b16 %v893
    %v2442 = vunpack.c.l.b16 %v894
    %v2443 = vunpack.c.h.b16 %v894
    %v2444 = vunpack.c.l.b16 %v895
    %v2445 = vunpack.c.h.b16 %v895
    %v2446 = vunpack.c.l.b16 %v896
    %v2447 = vunpack.c.h.b16 %v896
    %v2448 = vunpack.c.l.b16 %v897
    %v2449 = vunpack.c.h.b16 %v897
    %v2450 = vunpack.c.l.b16 %v898
    %v2451 = vunpack.c.h.b16 %v898
    %v2452 = vunpack.c.l.b16 %v899
    %v2453 = vunpack.c.h.b16 %v899
    %v2454 = vpack.c.b16 %v1438, %v1430
    %v2455 = vpack.c.b16 %v1439, %v1431
    %v2456 = vpack.c.b16 %v1440, %v1432
    %v2457 = vpack.c.b16 %v1441, %v1433
    %v2458 = vpack.c.b16 %v1442, %v1434
    %v2459 = vpack.c.b16 %v1443, %v1435
    %v2460 = vpack.c.b16 %v1444, %v1436
    %v2461 = vpack.c.b16 %v1445, %v1437
    %v2462 = vpack.c.b16 %v1454, %v1446
    %v2463 = vpack.c.b16 %v1455, %v1447
    %v2464 = vpack.c.b16 %v1456, %v1448
    %v2465 = vpack.c.b16 %v1457, %v1449
    %v2466 = vpack.c.b16 %v1458, %v1450
    %v2467 = vpack.c.b16 %v1459, %v1451
    %v2468 = vpack.c.b16 %v1460, %v1452
    %v2469 = vpack.c.b16 %v1461, %v1453
    %v2470 = vpack.c.b16 %v1470, %v1462
    %v2471 = vpack.c.b16 %v1471, %v1463
    %v2472 = vpack.c.b16 %v1472, %v1464
    %v2473 = vpack.c.b16 %v1473, %v1465
    %v2474 = vpack.c.b16 %v1474, %v1466
    %v2475 = vpack.c.b16 %v1475, %v1467
    %v2476 = vpack.c.b16 %v1476, %v1468
    %v2477 = vpack.c.b16 %v1477, %v1469
    %v2478 = vpack.c.b16 %v1486, %v1478
    %v2479 = vpack.c.b16 %v1487, %v1479
    %v2480 = vpack.c.b16 %v1488, %v1480
    %v2481 = vpack.c.b16 %v1489, %v1481
    %v2482 = vpack.c.b16 %v1490, %v1482
    %v2483 = vpack.c.b16 %v1491, %v1483
    %v2484 = vpack.c.b16 %v1492, %v1484
    %v2485 = vpack.c.b16 %v1493, %v1485
    %v2486 = vpack.c.b16 %v1502, %v1494
    %v2487 = vpack.c.b16 %v1503, %v1495
    %v2488 = vpack.c.b16 %v1504, %v1496
    %v2489 = vpack.c.b16 %v1505, %v1497
    %v2490 = vpack.c.b16 %v1506, %v1498
    %v2491 = vpack.c.b16 %v1507, %v1499
    %v2492 = vpack.c.b16 %v1508, %v1500
    %v2493 = vpack.c.b16 %v1509, %v1501
    %v2494 = vpack.c.b16 %v1518, %v1510
    %v2495 = vpack.c.b16 %v1519, %v1511
    %v2496 = vpack.c.b16 %v1520, %v1512
    %v2497 = vpack.c.b16 %v1521, %v1513
    %v2498 = vpack.c.b16 %v1522, %v1514
    %v2499 = vpack.c.b16 %v1523, %v1515
    %v2500 = vpack.c.b16 %v1524, %v1516
    %v2501 = vpack.c.b16 %v1525, %v1517
    %v2502 = vpack.c.b16 %v1534, %v1526
    %v2503 = vpack.c.b16 %v1535, %v1527
    %v2504 = vpack.c.b16 %v1536, %v1528
    %v2505 = vpack.c.b16 %v1537, %v1529
    %v2506 = vpack.c.b16 %v1538, %v1530
    %v2507 = vpack.c.b16 %v1539, %v1531
    %v2508 = vpack.c.b16 %v1540, %v1532
    %v2509 = vpack.c.b16 %v1541, %v1533
    %v2510 = vpack.c.b16 %v1550, %v1542
    %v2511 = vpack.c.b16 %v1551, %v1543
    %v2512 = vpack.c.b16 %v1552, %v1544
    %v2513 = vpack.c.b16 %v1553, %v1545
    %v2514 = vpack.c.b16 %v1554, %v1546
    %v2515 = vpack.c.b16 %v1555, %v1547
    %v2516 = vpack.c.b16 %v1556, %v1548
    %v2517 = vpack.c.b16 %v1557, %v1549
    %v2518 = vpack.c.b16 %v1566, %v1558
    %v2519 = vpack.c.b16 %v1567, %v1559
    %v2520 = vpack.c.b16 %v1568, %v1560
    %v2521 = vpack.c.b16 %v1569, %v1561
    %v2522 = vpack.c.b16 %v1570, %v1562
    %v2523 = vpack.c.b16 %v1571, %v1563
    %v2524 = vpack.c.b16 %v1572, %v1564
    %v2525 = vpack.c.b16 %v1573, %v1565
    %v2526 = vpack.c.b16 %v1582, %v1574
    %v2527 = vpack.c.b16 %v1583, %v1575
    %v2528 = vpack.c.b16 %v1584, %v1576
    %v2529 = vpack.c.b16 %v1585, %v1577
    %v2530 = vpack.c.b16 %v1586, %v1578
    %v2531 = vpack.c.b16 %v1587, %v1579
    %v2532 = vpack.c.b16 %v1588, %v1580
    %v2533 = vpack.c.b16 %v1589, %v1581
    %v2534 = vpack.c.b16 %v1598, %v1590
    %v2535 = vpack.c.b16 %v1599, %v1591
    %v2536 = vpack.c.b16 %v1600, %v1592
    %v2537 = vpack.c.b16 %v1601, %v1593
    %v2538 = vpack.c.b16 %v1602, %v1594
    %v2539 = vpack.c.b16 %v1603, %v1595
    %v2540 = vpack.c.b16 %v1604, %v1596
    %v2541 = vpack.c.b16 %v1605, %v1597
    %v2542 = vpack.c.b16 %v1614, %v1606
    %v2543 = vpack.c.b16 %v1615, %v1607
    %v2544 = vpack.c.b16 %v1616, %v1608
    %v2545 = vpack.c.b16 %v1617, %v1609
    %v2546 = vpack.c.b16 %v1618, %v1610
    %v2547 = vpack.c.b16 %v1619, %v1611
    %v2548 = vpack.c.b16 %v1620, %v1612
    %v2549 = vpack.c.b16 %v1621, %v1613
    %v2550 = vpack.c.b16 %v1630, %v1622
    %v2551 = vpack.c.b16 %v1631, %v1623
    %v2552 = vpack.c.b16 %v1632, %v1624
    %v2553 = vpack.c.b16 %v1633, %v1625
    %v2554 = vpack.c.b16 %v1634, %v1626
    %v2555 = vpack.c.b16 %v1635, %v1627
    %v2556 = vpack.c.b16 %v1636, %v1628
    %v2557 = vpack.c.b16 %v1637, %v1629
    %v2558 = vpack.c.b16 %v1646, %v1638
    %v2559 = vpack.c.b16 %v1647, %v1639
    %v2560 = vpack.c.b16 %v1648, %v1640
    %v2561 = vpack.c.b16 %v1649, %v1641
    %v2562 = vpack.c.b16 %v1650, %v1642
    %v2563 = vpack.c.b16 %v1651, %v1643
    %v2564 = vpack.c.b16 %v1652, %v1644
    %v2565 = vpack.c.b16 %v1653, %v1645
    %v2566 = vpack.c.b16 %v1662, %v1654
    %v2567 = vpack.c.b16 %v1663, %v1655
    %v2568 = vpack.c.b16 %v1664, %v1656
    %v2569 = vpack.c.b16 %v1665, %v1657
    %v2570 = vpack.c.b16 %v1666, %v1658
    %v2571 = vpack.c.b16 %v1667, %v1659
    %v2572 = vpack.c.b16 %v1668, %v1660
    %v2573 = vpack.c.b16 %v1669, %v1661
    %v2574 = vpack.c.b16 %v1678, %v1670
    %v2575 = vpack.c.b16 %v1679, %v1671
    %v2576 = vpack.c.b16 %v1680, %v1672
    %v2577 = vpack.c.b16 %v1681, %v1673
    %v2578 = vpack.c.b16 %v1682, %v1674
    %v2579 = vpack.c.b16 %v1683, %v1675
    %v2580 = vpack.c.b16 %v1684, %v1676
    %v2581 = vpack.c.b16 %v1685, %v1677
    %v2582 = vpack.c.b16 %v1694, %v1686
    %v2583 = vpack.c.b16 %v1695, %v1687
    %v2584 = vpack.c.b16 %v1696, %v1688
    %v2585 = vpack.c.b16 %v1697, %v1689
    %v2586 = vpack.c.b16 %v1698, %v1690
    %v2587 = vpack.c.b16 %v1699, %v1691
    %v2588 = vpack.c.b16 %v1700, %v1692
    %v2589 = vpack.c.b16 %v1701, %v1693
    %v2590 = vpack.c.b16 %v1710, %v1702
    %v2591 = vpack.c.b16 %v1711, %v1703
    %v2592 = vpack.c.b16 %v1712, %v1704
    %v2593 = vpack.c.b16 %v1713, %v1705
    %v2594 = vpack.c.b16 %v1714, %v1706
    %v2595 = vpack.c.b16 %v1715, %v1707
    %v2596 = vpack.c.b16 %v1716, %v1708
    %v2597 = vpack.c.b16 %v1717, %v1709
    %v2598 = vpack.c.b16 %v1726, %v1718
    %v2599 = vpack.c.b16 %v1727, %v1719
    %v2600 = vpack.c.b16 %v1728, %v1720
    %v2601 = vpack.c.b16 %v1729, %v1721
    %v2602 = vpack.c.b16 %v1730, %v1722
    %v2603 = vpack.c.b16 %v1731, %v1723
    %v2604 = vpack.c.b16 %v1732, %v1724
    %v2605 = vpack.c.b16 %v1733, %v1725
    %v2606 = vpack.c.b16 %v1742, %v1734
    %v2607 = vpack.c.b16 %v1743, %v1735
    %v2608 = vpack.c.b16 %v1744, %v1736
    %v2609 = vpack.c.b16 %v1745, %v1737
    %v2610 = vpack.c.b16 %v1746, %v1738
    %v2611 = vpack.c.b16 %v1747, %v1739
    %v2612 = vpack.c.b16 %v1748, %v1740
    %v2613 = vpack.c.b16 %v1749, %v1741
    %v2614 = vpack.c.b16 %v1758, %v1750
    %v2615 = vpack.c.b16 %v1759, %v1751
    %v2616 = vpack.c.b16 %v1760, %v1752
    %v2617 = vpack.c.b16 %v1761, %v1753
    %v2618 = vpack.c.b16 %v1762, %v1754
    %v2619 = vpack.c.b16 %v1763, %v1755
    %v2620 = vpack.c.b16 %v1764, %v1756
    %v2621 = vpack.c.b16 %v1765, %v1757
    %v2622 = vpack.c.b16 %v1774, %v1766
    %v2623 = vpack.c.b16 %v1775, %v1767
    %v2624 = vpack.c.b16 %v1776, %v1768
    %v2625 = vpack.c.b16 %v1777, %v1769
    %v2626 = vpack.c.b16 %v1778, %v1770
    %v2627 = vpack.c.b16 %v1779, %v1771
    %v2628 = vpack.c.b16 %v1780, %v1772
    %v2629 = vpack.c.b16 %v1781, %v1773
    %v2630 = vpack.c.b16 %v1790, %v1782
    %v2631 = vpack.c.b16 %v1791, %v1783
    %v2632 = vpack.c.b16 %v1792, %v1784
    %v2633 = vpack.c.b16 %v1793, %v1785
    %v2634 = vpack.c.b16 %v1794, %v1786
    %v2635 = vpack.c.b16 %v1795, %v1787
    %v2636 = vpack.c.b16 %v1796, %v1788
    %v2637 = vpack.c.b16 %v1797, %v1789
    %v2638 = vpack.c.b16 %v1806, %v1798
    %v2639 = vpack.c.b16 %v1807, %v1799
    %v2640 = vpack.c.b16 %v1808, %v1800
    %v2641 = vpack.c.b16 %v1809, %v1801
    %v2642 = vpack.c.b16 %v1810, %v1802
    %v2643 = vpack.c.b16 %v1811, %v1803
    %v2644 = vpack.c.b16 %v1812, %v1804
    %v2645 = vpack.c.b16 %v1813, %v1805
    %v2646 = vpack.c.b16 %v1822, %v1814
    %v2647 = vpack.c.b16 %v1823, %v1815
    %v2648 = vpack.c.b16 %v1824, %v1816
    %v2649 = vpack.c.b16 %v1825, %v1817
    %v2650 = vpack.c.b16 %v1826, %v1818
    %v2651 = vpack.c.b16 %v1827, %v1819
    %v2652 = vpack.c.b16 %v1828, %v1820
    %v2653 = vpack.c.b16 %v1829, %v1821
    %v2654 = vpack.c.b16 %v1838, %v1830
    %v2655 = vpack.c.b16 %v1839, %v1831
    %v2656 = vpack.c.b16 %v1840, %v1832
    %v2657 = vpack.c.b16 %v1841, %v1833
    %v2658 = vpack.c.b16 %v1842, %v1834
    %v2659 = vpack.c.b16 %v1843, %v1835
    %v2660 = vpack.c.b16 %v1844, %v1836
    %v2661 = vpack.c.b16 %v1845, %v1837
    %v2662 = vpack.c.b16 %v1854, %v1846
    %v2663 = vpack.c.b16 %v1855, %v1847
    %v2664 = vpack.c.b16 %v1856, %v1848
    %v2665 = vpack.c.b16 %v1857, %v1849
    %v2666 = vpack.c.b16 %v1858, %v1850
    %v2667 = vpack.c.b16 %v1859, %v1851
    %v2668 = vpack.c.b16 %v1860, %v1852
    %v2669 = vpack.c.b16 %v1861, %v1853
    %v2670 = vpack.c.b16 %v1870, %v1862
    %v2671 = vpack.c.b16 %v1871, %v1863
    %v2672 = vpack.c.b16 %v1872, %v1864
    %v2673 = vpack.c.b16 %v1873, %v1865
    %v2674 = vpack.c.b16 %v1874, %v1866
    %v2675 = vpack.c.b16 %v1875, %v1867
    %v2676 = vpack.c.b16 %v1876, %v1868
    %v2677 = vpack.c.b16 %v1877, %v1869
    %v2678 = vpack.c.b16 %v1886, %v1878
    %v2679 = vpack.c.b16 %v1887, %v1879
    %v2680 = vpack.c.b16 %v1888, %v1880
    %v2681 = vpack.c.b16 %v1889, %v1881
    %v2682 = vpack.c.b16 %v1890, %v1882
    %v2683 = vpack.c.b16 %v1891, %v1883
    %v2684 = vpack.c.b16 %v1892, %v1884
    %v2685 = vpack.c.b16 %v1893, %v1885
    %v2686 = vpack.c.b16 %v1902, %v1894
    %v2687 = vpack.c.b16 %v1903, %v1895
    %v2688 = vpack.c.b16 %v1904, %v1896
    %v2689 = vpack.c.b16 %v1905, %v1897
    %v2690 = vpack.c.b16 %v1906, %v1898
    %v2691 = vpack.c.b16 %v1907, %v1899
    %v2692 = vpack.c.b16 %v1908, %v1900
    %v2693 = vpack.c.b16 %v1909, %v1901
    %v2694 = vpack.c.b16 %v1918, %v1910
    %v2695 = vpack.c.b16 %v1919, %v1911
    %v2696 = vpack.c.b16 %v1920, %v1912
    %v2697 = vpack.c.b16 %v1921, %v1913
    %v2698 = vpack.c.b16 %v1922, %v1914
    %v2699 = vpack.c.b16 %v1923, %v1915
    %v2700 = vpack.c.b16 %v1924, %v1916
    %v2701 = vpack.c.b16 %v1925, %v1917
    %v2702 = vpack.c.b16 %v1934, %v1926
    %v2703 = vpack.c.b16 %v1935, %v1927
    %v2704 = vpack.c.b16 %v1936, %v1928
    %v2705 = vpack.c.b16 %v1937, %v1929
    %v2706 = vpack.c.b16 %v1938, %v1930
    %v2707 = vpack.c.b16 %v1939, %v1931
    %v2708 = vpack.c.b16 %v1940, %v1932
    %v2709 = vpack.c.b16 %v1941, %v1933
    %v2710 = vpack.c.b16 %v1950, %v1942
    %v2711 = vpack.c.b16 %v1951, %v1943
    %v2712 = vpack.c.b16 %v1952, %v1944
    %v2713 = vpack.c.b16 %v1953, %v1945
    %v2714 = vpack.c.b16 %v1954, %v1946
    %v2715 = vpack.c.b16 %v1955, %v1947
    %v2716 = vpack.c.b16 %v1956, %v1948
    %v2717 = vpack.c.b16 %v1957, %v1949
    %v2718 = vpack.c.b16 %v1966, %v1958
    %v2719 = vpack.c.b16 %v1967, %v1959
    %v2720 = vpack.c.b16 %v1968, %v1960
    %v2721 = vpack.c.b16 %v1969, %v1961
    %v2722 = vpack.c.b16 %v1970, %v1962
    %v2723 = vpack.c.b16 %v1971, %v1963
    %v2724 = vpack.c.b16 %v1972, %v1964
    %v2725 = vpack.c.b16 %v1973, %v1965
    %v2726 = vpack.c.b16 %v1982, %v1974
    %v2727 = vpack.c.b16 %v1983, %v1975
    %v2728 = vpack.c.b16 %v1984, %v1976
    %v2729 = vpack.c.b16 %v1985, %v1977
    %v2730 = vpack.c.b16 %v1986, %v1978
    %v2731 = vpack.c.b16 %v1987, %v1979
    %v2732 = vpack.c.b16 %v1988, %v1980
    %v2733 = vpack.c.b16 %v1989, %v1981
    %v2734 = vpack.c.b16 %v1998, %v1990
    %v2735 = vpack.c.b16 %v1999, %v1991
    %v2736 = vpack.c.b16 %v2000, %v1992
    %v2737 = vpack.c.b16 %v2001, %v1993
    %v2738 = vpack.c.b16 %v2002, %v1994
    %v2739 = vpack.c.b16 %v2003, %v1995
    %v2740 = vpack.c.b16 %v2004, %v1996
    %v2741 = vpack.c.b16 %v2005, %v1997
    %v2742 = vpack.c.b16 %v2014, %v2006
    %v2743 = vpack.c.b16 %v2015, %v2007
    %v2744 = vpack.c.b16 %v2016, %v2008
    %v2745 = vpack.c.b16 %v2017, %v2009
    %v2746 = vpack.c.b16 %v2018, %v2010
    %v2747 = vpack.c.b16 %v2019, %v2011
    %v2748 = vpack.c.b16 %v2020, %v2012
    %v2749 = vpack.c.b16 %v2021, %v2013
    %v2750 = vpack.c.b16 %v2030, %v2022
    %v2751 = vpack.c.b16 %v2031, %v2023
    %v2752 = vpack.c.b16 %v2032, %v2024
    %v2753 = vpack.c.b16 %v2033, %v2025
    %v2754 = vpack.c.b16 %v2034, %v2026
    %v2755 = vpack.c.b16 %v2035, %v2027
    %v2756 = vpack.c.b16 %v2036, %v2028
    %v2757 = vpack.c.b16 %v2037, %v2029
    %v2758 = vpack.c.b16 %v2046, %v2038
    %v2759 = vpack.c.b16 %v2047, %v2039
    %v2760 = vpack.c.b16 %v2048, %v2040
    %v2761 = vpack.c.b16 %v2049, %v2041
    %v2762 = vpack.c.b16 %v2050, %v2042
    %v2763 = vpack.c.b16 %v2051, %v2043
    %v2764 = vpack.c.b16 %v2052, %v2044
    %v2765 = vpack.c.b16 %v2053, %v2045
    %v2766 = vpack.c.b16 %v2062, %v2054
    %v2767 = vpack.c.b16 %v2063, %v2055
    %v2768 = vpack.c.b16 %v2064, %v2056
    %v2769 = vpack.c.b16 %v2065, %v2057
    %v2770 = vpack.c.b16 %v2066, %v2058
    %v2771 = vpack.c.b16 %v2067, %v2059
    %v2772 = vpack.c.b16 %v2068, %v2060
    %v2773 = vpack.c.b16 %v2069, %v2061
    %v2774 = vpack.c.b16 %v2078, %v2070
    %v2775 = vpack.c.b16 %v2079, %v2071
    %v2776 = vpack.c.b16 %v2080, %v2072
    %v2777 = vpack.c.b16 %v2081, %v2073
    %v2778 = vpack.c.b16 %v2082, %v2074
    %v2779 = vpack.c.b16 %v2083, %v2075
    %v2780 = vpack.c.b16 %v2084, %v2076
    %v2781 = vpack.c.b16 %v2085, %v2077
    %v2782 = vpack.c.b16 %v2094, %v2086
    %v2783 = vpack.c.b16 %v2095, %v2087
    %v2784 = vpack.c.b16 %v2096, %v2088
    %v2785 = vpack.c.b16 %v2097, %v2089
    %v2786 = vpack.c.b16 %v2098, %v2090
    %v2787 = vpack.c.b16 %v2099, %v2091
    %v2788 = vpack.c.b16 %v2100, %v2092
    %v2789 = vpack.c.b16 %v2101, %v2093
    %v2790 = vpack.c.b16 %v2110, %v2102
    %v2791 = vpack.c.b16 %v2111, %v2103
    %v2792 = vpack.c.b16 %v2112, %v2104
    %v2793 = vpack.c.b16 %v2113, %v2105
    %v2794 = vpack.c.b16 %v2114, %v2106
    %v2795 = vpack.c.b16 %v2115, %v2107
    %v2796 = vpack.c.b16 %v2116, %v2108
    %v2797 = vpack.c.b16 %v2117, %v2109
    %v2798 = vpack.c.b16 %v2126, %v2118
    %v2799 = vpack.c.b16 %v2127, %v2119
    %v2800 = vpack.c.b16 %v2128, %v2120
    %v2801 = vpack.c.b16 %v2129, %v2121
    %v2802 = vpack.c.b16 %v2130, %v2122
    %v2803 = vpack.c.b16 %v2131, %v2123
    %v2804 = vpack.c.b16 %v2132, %v2124
    %v2805 = vpack.c.b16 %v2133, %v2125
    %v2806 = vpack.c.b16 %v2142, %v2134
    %v2807 = vpack.c.b16 %v2143, %v2135
    %v2808 = vpack.c.b16 %v2144, %v2136
    %v2809 = vpack.c.b16 %v2145, %v2137
    %v2810 = vpack.c.b16 %v2146, %v2138
    %v2811 = vpack.c.b16 %v2147, %v2139
    %v2812 = vpack.c.b16 %v2148, %v2140
    %v2813 = vpack.c.b16 %v2149, %v2141
    %v2814 = vpack.c.b16 %v2158, %v2150
    %v2815 = vpack.c.b16 %v2159, %v2151
    %v2816 = vpack.c.b16 %v2160, %v2152
    %v2817 = vpack.c.b16 %v2161, %v2153
    %v2818 = vpack.c.b16 %v2162, %v2154
    %v2819 = vpack.c.b16 %v2163, %v2155
    %v2820 = vpack.c.b16 %v2164, %v2156
    %v2821 = vpack.c.b16 %v2165, %v2157
    %v2822 = vpack.c.b16 %v2174, %v2166
    %v2823 = vpack.c.b16 %v2175, %v2167
    %v2824 = vpack.c.b16 %v2176, %v2168
    %v2825 = vpack.c.b16 %v2177, %v2169
    %v2826 = vpack.c.b16 %v2178, %v2170
    %v2827 = vpack.c.b16 %v2179, %v2171
    %v2828 = vpack.c.b16 %v2180, %v2172
    %v2829 = vpack.c.b16 %v2181, %v2173
    %v2830 = vpack.c.b16 %v2190, %v2182
    %v2831 = vpack.c.b16 %v2191, %v2183
    %v2832 = vpack.c.b16 %v2192, %v2184
    %v2833 = vpack.c.b16 %v2193, %v2185
    %v2834 = vpack.c.b16 %v2194, %v2186
    %v2835 = vpack.c.b16 %v2195, %v2187
    %v2836 = vpack.c.b16 %v2196, %v2188
    %v2837 = vpack.c.b16 %v2197, %v2189
    %v2838 = vpack.c.b16 %v2206, %v2198
    %v2839 = vpack.c.b16 %v2207, %v2199
    %v2840 = vpack.c.b16 %v2208, %v2200
    %v2841 = vpack.c.b16 %v2209, %v2201
    %v2842 = vpack.c.b16 %v2210, %v2202
    %v2843 = vpack.c.b16 %v2211, %v2203
    %v2844 = vpack.c.b16 %v2212, %v2204
    %v2845 = vpack.c.b16 %v2213, %v2205
    %v2846 = vpack.c.b16 %v2222, %v2214
    %v2847 = vpack.c.b16 %v2223, %v2215
    %v2848 = vpack.c.b16 %v2224, %v2216
    %v2849 = vpack.c.b16 %v2225, %v2217
    %v2850 = vpack.c.b16 %v2226, %v2218
    %v2851 = vpack.c.b16 %v2227, %v2219
    %v2852 = vpack.c.b16 %v2228, %v2220
    %v2853 = vpack.c.b16 %v2229, %v2221
    %v2854 = vpack.c.b16 %v2238, %v2230
    %v2855 = vpack.c.b16 %v2239, %v2231
    %v2856 = vpack.c.b16 %v2240, %v2232
    %v2857 = vpack.c.b16 %v2241, %v2233
    %v2858 = vpack.c.b16 %v2242, %v2234
    %v2859 = vpack.c.b16 %v2243, %v2235
    %v2860 = vpack.c.b16 %v2244, %v2236
    %v2861 = vpack.c.b16 %v2245, %v2237
    %v2862 = vpack.c.b16 %v2254, %v2246
    %v2863 = vpack.c.b16 %v2255, %v2247
    %v2864 = vpack.c.b16 %v2256, %v2248
    %v2865 = vpack.c.b16 %v2257, %v2249
    %v2866 = vpack.c.b16 %v2258, %v2250
    %v2867 = vpack.c.b16 %v2259, %v2251
    %v2868 = vpack.c.b16 %v2260, %v2252
    %v2869 = vpack.c.b16 %v2261, %v2253
    %v2870 = vpack.c.b16 %v2270, %v2262
    %v2871 = vpack.c.b16 %v2271, %v2263
    %v2872 = vpack.c.b16 %v2272, %v2264
    %v2873 = vpack.c.b16 %v2273, %v2265
    %v2874 = vpack.c.b16 %v2274, %v2266
    %v2875 = vpack.c.b16 %v2275, %v2267
    %v2876 = vpack.c.b16 %v2276, %v2268
    %v2877 = vpack.c.b16 %v2277, %v2269
    %v2878 = vpack.c.b16 %v2286, %v2278
    %v2879 = vpack.c.b16 %v2287, %v2279
    %v2880 = vpack.c.b16 %v2288, %v2280
    %v2881 = vpack.c.b16 %v2289, %v2281
    %v2882 = vpack.c.b16 %v2290, %v2282
    %v2883 = vpack.c.b16 %v2291, %v2283
    %v2884 = vpack.c.b16 %v2292, %v2284
    %v2885 = vpack.c.b16 %v2293, %v2285
    %v2886 = vpack.c.b16 %v2302, %v2294
    %v2887 = vpack.c.b16 %v2303, %v2295
    %v2888 = vpack.c.b16 %v2304, %v2296
    %v2889 = vpack.c.b16 %v2305, %v2297
    %v2890 = vpack.c.b16 %v2306, %v2298
    %v2891 = vpack.c.b16 %v2307, %v2299
    %v2892 = vpack.c.b16 %v2308, %v2300
    %v2893 = vpack.c.b16 %v2309, %v2301
    %v2894 = vpack.c.b16 %v2318, %v2310
    %v2895 = vpack.c.b16 %v2319, %v2311
    %v2896 = vpack.c.b16 %v2320, %v2312
    %v2897 = vpack.c.b16 %v2321, %v2313
    %v2898 = vpack.c.b16 %v2322, %v2314
    %v2899 = vpack.c.b16 %v2323, %v2315
    %v2900 = vpack.c.b16 %v2324, %v2316
    %v2901 = vpack.c.b16 %v2325, %v2317
    %v2902 = vpack.c.b16 %v2334, %v2326
    %v2903 = vpack.c.b16 %v2335, %v2327
    %v2904 = vpack.c.b16 %v2336, %v2328
    %v2905 = vpack.c.b16 %v2337, %v2329
    %v2906 = vpack.c.b16 %v2338, %v2330
    %v2907 = vpack.c.b16 %v2339, %v2331
    %v2908 = vpack.c.b16 %v2340, %v2332
    %v2909 = vpack.c.b16 %v2341, %v2333
    %v2910 = vpack.c.b16 %v2350, %v2342
    %v2911 = vpack.c.b16 %v2351, %v2343
    %v2912 = vpack.c.b16 %v2352, %v2344
    %v2913 = vpack.c.b16 %v2353, %v2345
    %v2914 = vpack.c.b16 %v2354, %v2346
    %v2915 = vpack.c.b16 %v2355, %v2347
    %v2916 = vpack.c.b16 %v2356, %v2348
    %v2917 = vpack.c.b16 %v2357, %v2349
    %v2918 = vpack.c.b16 %v2366, %v2358
    %v2919 = vpack.c.b16 %v2367, %v2359
    %v2920 = vpack.c.b16 %v2368, %v2360
    %v2921 = vpack.c.b16 %v2369, %v2361
    %v2922 = vpack.c.b16 %v2370, %v2362
    %v2923 = vpack.c.b16 %v2371, %v2363
    %v2924 = vpack.c.b16 %v2372, %v2364
    %v2925 = vpack.c.b16 %v2373, %v2365
    %v2926 = vpack.c.b16 %v2382, %v2374
    %v2927 = vpack.c.b16 %v2383, %v2375
    %v2928 = vpack.c.b16 %v2384, %v2376
    %v2929 = vpack.c.b16 %v2385, %v2377
    %v2930 = vpack.c.b16 %v2386, %v2378
    %v2931 = vpack.c.b16 %v2387, %v2379
    %v2932 = vpack.c.b16 %v2388, %v2380
    %v2933 = vpack.c.b16 %v2389, %v2381
    %v2934 = vpack.c.b16 %v2398, %v2390
    %v2935 = vpack.c.b16 %v2399, %v2391
    %v2936 = vpack.c.b16 %v2400, %v2392
    %v2937 = vpack.c.b16 %v2401, %v2393
    %v2938 = vpack.c.b16 %v2402, %v2394
    %v2939 = vpack.c.b16 %v2403, %v2395
    %v2940 = vpack.c.b16 %v2404, %v2396
    %v2941 = vpack.c.b16 %v2405, %v2397
    %v2942 = vpack.c.b16 %v2414, %v2406
    %v2943 = vpack.c.b16 %v2415, %v2407
    %v2944 = vpack.c.b16 %v2416, %v2408
    %v2945 = vpack.c.b16 %v2417, %v2409
    %v2946 = vpack.c.b16 %v2418, %v2410
    %v2947 = vpack.c.b16 %v2419, %v2411
    %v2948 = vpack.c.b16 %v2420, %v2412
    %v2949 = vpack.c.b16 %v2421, %v2413
    %v2950 = vpack.c.b16 %v2430, %v2422
    %v2951 = vpack.c.b16 %v2431, %v2423
    %v2952 = vpack.c.b16 %v2432, %v2424
    %v2953 = vpack.c.b16 %v2433, %v2425
    %v2954 = vpack.c.b16 %v2434, %v2426
    %v2955 = vpack.c.b16 %v2435, %v2427
    %v2956 = vpack.c.b16 %v2436, %v2428
    %v2957 = vpack.c.b16 %v2437, %v2429
    %v2958 = vpack.c.b16 %v2446, %v2438
    %v2959 = vpack.c.b16 %v2447, %v2439
    %v2960 = vpack.c.b16 %v2448, %v2440
    %v2961 = vpack.c.b16 %v2449, %v2441
    %v2962 = vpack.c.b16 %v2450, %v2442
    %v2963 = vpack.c.b16 %v2451, %v2443
    %v2964 = vpack.c.b16 %v2452, %v2444
    %v2965 = vpack.c.b16 %v2453, %v2445
    %3478 = vmatpush.bf16.msra.mxu0 %v2510
    %3479 = vmatpush.bf16.msra.mxu0 %v2502
    %3480 = vmatpush.bf16.msra.mxu0 %v2494
    %3481 = vmatpush.bf16.msra.mxu0 %v2486
    %3482 = vmatpush.bf16.msra.mxu0 %v2478
    %3483 = vmatpush.bf16.msra.mxu0 %v2470
    %3484 = vmatpush.bf16.msra.mxu0 %v2462
    %3485 = vmatpush.bf16.msra.mxu0 %v2454
    %3486 = vmatmul.bf16.gmra.mxu0 %v380
    %v3487 = vpop.f32.mrf.mxu0
    %v3488 = vadd.f32 %v902, %v3487
    %v3489 = vpop.f32.mrf.mxu0
    %v3490 = vadd.f32 %v902, %v3489
    %3491 = vdwg.mxu0
    %3492 = vmatpush.bf16.msra.mxu0 %v2574
    %3493 = vmatpush.bf16.msra.mxu0 %v2566
    %3494 = vmatpush.bf16.msra.mxu0 %v2558
    %3495 = vmatpush.bf16.msra.mxu0 %v2550
    %3496 = vmatpush.bf16.msra.mxu0 %v2542
    %3497 = vmatpush.bf16.msra.mxu0 %v2534
    %3498 = vmatpush.bf16.msra.mxu0 %v2526
    %3499 = vmatpush.bf16.msra.mxu0 %v2518
    %3500 = vmatmul.bf16.gmra.mxu0 %v381
    %v3501 = vpop.f32.mrf.mxu0
    %v3502 = vadd.f32 %v3488, %v3501
    %v3503 = vpop.f32.mrf.mxu0
    %v3504 = vadd.f32 %v3490, %v3503
    %3505 = vdwg.mxu0
    %3506 = vmatpush.bf16.msra.mxu0 %v2638
    %3507 = vmatpush.bf16.msra.mxu0 %v2630
    %3508 = vmatpush.bf16.msra.mxu0 %v2622
    %3509 = vmatpush.bf16.msra.mxu0 %v2614
    %3510 = vmatpush.bf16.msra.mxu0 %v2606
    %3511 = vmatpush.bf16.msra.mxu0 %v2598
    %3512 = vmatpush.bf16.msra.mxu0 %v2590
    %3513 = vmatpush.bf16.msra.mxu0 %v2582
    %3514 = vmatmul.bf16.gmra.mxu0 %v382
    %v3515 = vpop.f32.mrf.mxu0
    %v3516 = vadd.f32 %v3502, %v3515
    %v3517 = vpop.f32.mrf.mxu0
    %v3518 = vadd.f32 %v3504, %v3517
    %3519 = vdwg.mxu0
    %3520 = vmatpush.bf16.msra.mxu0 %v2702
    %3521 = vmatpush.bf16.msra.mxu0 %v2694
    %3522 = vmatpush.bf16.msra.mxu0 %v2686
    %3523 = vmatpush.bf16.msra.mxu0 %v2678
    %3524 = vmatpush.bf16.msra.mxu0 %v2670
    %3525 = vmatpush.bf16.msra.mxu0 %v2662
    %3526 = vmatpush.bf16.msra.mxu0 %v2654
    %3527 = vmatpush.bf16.msra.mxu0 %v2646
    %3528 = vmatmul.bf16.gmra.mxu0 %v383
    %v3529 = vpop.f32.mrf.mxu0
    %v3530 = vadd.f32 %v3516, %v3529
    %v3531 = vpop.f32.mrf.mxu0
    %v3532 = vadd.f32 %v3518, %v3531
    %3533 = vdwg.mxu0
    %3534 = vmatpush.bf16.msra.mxu0 %v2766
    %3535 = vmatpush.bf16.msra.mxu0 %v2758
    %3536 = vmatpush.bf16.msra.mxu0 %v2750
    %3537 = vmatpush.bf16.msra.mxu0 %v2742
    %3538 = vmatpush.bf16.msra.mxu0 %v2734
    %3539 = vmatpush.bf16.msra.mxu0 %v2726
    %3540 = vmatpush.bf16.msra.mxu0 %v2718
    %3541 = vmatpush.bf16.msra.mxu0 %v2710
    %3542 = vmatmul.bf16.gmra.mxu0 %v384
    %v3543 = vpop.f32.mrf.mxu0
    %v3544 = vadd.f32 %v3530, %v3543
    %v3545 = vpop.f32.mrf.mxu0
    %v3546 = vadd.f32 %v3532, %v3545
    %3547 = vdwg.mxu0
    %3548 = vmatpush.bf16.msra.mxu0 %v2830
    %3549 = vmatpush.bf16.msra.mxu0 %v2822
    %3550 = vmatpush.bf16.msra.mxu0 %v2814
    %3551 = vmatpush.bf16.msra.mxu0 %v2806
    %3552 = vmatpush.bf16.msra.mxu0 %v2798
    %3553 = vmatpush.bf16.msra.mxu0 %v2790
    %3554 = vmatpush.bf16.msra.mxu0 %v2782
    %3555 = vmatpush.bf16.msra.mxu0 %v2774
    %3556 = vmatmul.bf16.gmra.mxu0 %v385
    %v3557 = vpop.f32.mrf.mxu0
    %v3558 = vadd.f32 %v3544, %v3557
    %v3559 = vpop.f32.mrf.mxu0
    %v3560 = vadd.f32 %v3546, %v3559
    %3561 = vdwg.mxu0
    %3562 = vmatpush.bf16.msra.mxu0 %v2894
    %3563 = vmatpush.bf16.msra.mxu0 %v2886
    %3564 = vmatpush.bf16.msra.mxu0 %v2878
    %3565 = vmatpush.bf16.msra.mxu0 %v2870
    %3566 = vmatpush.bf16.msra.mxu0 %v2862
    %3567 = vmatpush.bf16.msra.mxu0 %v2854
    %3568 = vmatpush.bf16.msra.mxu0 %v2846
    %3569 = vmatpush.bf16.msra.mxu0 %v2838
    %3570 = vmatmul.bf16.gmra.mxu0 %v386
    %v3571 = vpop.f32.mrf.mxu0
    %v3572 = vadd.f32 %v3558, %v3571
    %v3573 = vpop.f32.mrf.mxu0
    %v3574 = vadd.f32 %v3560, %v3573
    %3575 = vdwg.mxu0
    %3576 = vmatpush.bf16.msra.mxu0 %v2958
    %3577 = vmatpush.bf16.msra.mxu0 %v2950
    %3578 = vmatpush.bf16.msra.mxu0 %v2942
    %3579 = vmatpush.bf16.msra.mxu0 %v2934
    %3580 = vmatpush.bf16.msra.mxu0 %v2926
    %3581 = vmatpush.bf16.msra.mxu0 %v2918
    %3582 = vmatpush.bf16.msra.mxu0 %v2910
    %3583 = vmatpush.bf16.msra.mxu0 %v2902
    %3584 = vmatmul.bf16.gmra.mxu0 %v387
    %v3585 = vpop.f32.mrf.mxu0
    %v3586 = vadd.f32 %v3572, %v3585
    %v3587 = vpop.f32.mrf.mxu0
    %v3588 = vadd.f32 %v3574, %v3587
    %3589 = vdwg.mxu0
    %3590 = vmatpush.bf16.msra.mxu0 %v2511
    %3591 = vmatpush.bf16.msra.mxu0 %v2503
    %3592 = vmatpush.bf16.msra.mxu0 %v2495
    %3593 = vmatpush.bf16.msra.mxu0 %v2487
    %3594 = vmatpush.bf16.msra.mxu0 %v2479
    %3595 = vmatpush.bf16.msra.mxu0 %v2471
    %3596 = vmatpush.bf16.msra.mxu0 %v2463
    %3597 = vmatpush.bf16.msra.mxu0 %v2455
    %3598 = vmatmul.bf16.gmra.mxu0 %v380
    %v3599 = vpop.f32.mrf.mxu0
    %v3600 = vadd.f32 %v903, %v3599
    %v3601 = vpop.f32.mrf.mxu0
    %v3602 = vadd.f32 %v903, %v3601
    %3603 = vdwg.mxu0
    %3604 = vmatpush.bf16.msra.mxu0 %v2575
    %3605 = vmatpush.bf16.msra.mxu0 %v2567
    %3606 = vmatpush.bf16.msra.mxu0 %v2559
    %3607 = vmatpush.bf16.msra.mxu0 %v2551
    %3608 = vmatpush.bf16.msra.mxu0 %v2543
    %3609 = vmatpush.bf16.msra.mxu0 %v2535
    %3610 = vmatpush.bf16.msra.mxu0 %v2527
    %3611 = vmatpush.bf16.msra.mxu0 %v2519
    %3612 = vmatmul.bf16.gmra.mxu0 %v381
    %v3613 = vpop.f32.mrf.mxu0
    %v3614 = vadd.f32 %v3600, %v3613
    %v3615 = vpop.f32.mrf.mxu0
    %v3616 = vadd.f32 %v3602, %v3615
    %3617 = vdwg.mxu0
    %3618 = vmatpush.bf16.msra.mxu0 %v2639
    %3619 = vmatpush.bf16.msra.mxu0 %v2631
    %3620 = vmatpush.bf16.msra.mxu0 %v2623
    %3621 = vmatpush.bf16.msra.mxu0 %v2615
    %3622 = vmatpush.bf16.msra.mxu0 %v2607
    %3623 = vmatpush.bf16.msra.mxu0 %v2599
    %3624 = vmatpush.bf16.msra.mxu0 %v2591
    %3625 = vmatpush.bf16.msra.mxu0 %v2583
    %3626 = vmatmul.bf16.gmra.mxu0 %v382
    %v3627 = vpop.f32.mrf.mxu0
    %v3628 = vadd.f32 %v3614, %v3627
    %v3629 = vpop.f32.mrf.mxu0
    %v3630 = vadd.f32 %v3616, %v3629
    %3631 = vdwg.mxu0
    %3632 = vmatpush.bf16.msra.mxu0 %v2703
    %3633 = vmatpush.bf16.msra.mxu0 %v2695
    %3634 = vmatpush.bf16.msra.mxu0 %v2687
    %3635 = vmatpush.bf16.msra.mxu0 %v2679
    %3636 = vmatpush.bf16.msra.mxu0 %v2671
    %3637 = vmatpush.bf16.msra.mxu0 %v2663
    %3638 = vmatpush.bf16.msra.mxu0 %v2655
    %3639 = vmatpush.bf16.msra.mxu0 %v2647
    %3640 = vmatmul.bf16.gmra.mxu0 %v383
    %v3641 = vpop.f32.mrf.mxu0
    %v3642 = vadd.f32 %v3628, %v3641
    %v3643 = vpop.f32.mrf.mxu0
    %v3644 = vadd.f32 %v3630, %v3643
    %3645 = vdwg.mxu0
    %3646 = vmatpush.bf16.msra.mxu0 %v2767
    %3647 = vmatpush.bf16.msra.mxu0 %v2759
    %3648 = vmatpush.bf16.msra.mxu0 %v2751
    %3649 = vmatpush.bf16.msra.mxu0 %v2743
    %3650 = vmatpush.bf16.msra.mxu0 %v2735
    %3651 = vmatpush.bf16.msra.mxu0 %v2727
    %3652 = vmatpush.bf16.msra.mxu0 %v2719
    %3653 = vmatpush.bf16.msra.mxu0 %v2711
    %3654 = vmatmul.bf16.gmra.mxu0 %v384
    %v3655 = vpop.f32.mrf.mxu0
    %v3656 = vadd.f32 %v3642, %v3655
    %v3657 = vpop.f32.mrf.mxu0
    %v3658 = vadd.f32 %v3644, %v3657
    %3659 = vdwg.mxu0
    %3660 = vmatpush.bf16.msra.mxu0 %v2831
    %3661 = vmatpush.bf16.msra.mxu0 %v2823
    %3662 = vmatpush.bf16.msra.mxu0 %v2815
    %3663 = vmatpush.bf16.msra.mxu0 %v2807
    %3664 = vmatpush.bf16.msra.mxu0 %v2799
    %3665 = vmatpush.bf16.msra.mxu0 %v2791
    %3666 = vmatpush.bf16.msra.mxu0 %v2783
    %3667 = vmatpush.bf16.msra.mxu0 %v2775
    %3668 = vmatmul.bf16.gmra.mxu0 %v385
    %v3669 = vpop.f32.mrf.mxu0
    %v3670 = vadd.f32 %v3656, %v3669
    %v3671 = vpop.f32.mrf.mxu0
    %v3672 = vadd.f32 %v3658, %v3671
    %3673 = vdwg.mxu0
    %3674 = vmatpush.bf16.msra.mxu0 %v2895
    %3675 = vmatpush.bf16.msra.mxu0 %v2887
    %3676 = vmatpush.bf16.msra.mxu0 %v2879
    %3677 = vmatpush.bf16.msra.mxu0 %v2871
    %3678 = vmatpush.bf16.msra.mxu0 %v2863
    %3679 = vmatpush.bf16.msra.mxu0 %v2855
    %3680 = vmatpush.bf16.msra.mxu0 %v2847
    %3681 = vmatpush.bf16.msra.mxu0 %v2839
    %3682 = vmatmul.bf16.gmra.mxu0 %v386
    %v3683 = vpop.f32.mrf.mxu0
    %v3684 = vadd.f32 %v3670, %v3683
    %v3685 = vpop.f32.mrf.mxu0
    %v3686 = vadd.f32 %v3672, %v3685
    %3687 = vdwg.mxu0
    %3688 = vmatpush.bf16.msra.mxu0 %v2959
    %3689 = vmatpush.bf16.msra.mxu0 %v2951
    %3690 = vmatpush.bf16.msra.mxu0 %v2943
    %3691 = vmatpush.bf16.msra.mxu0 %v2935
    %3692 = vmatpush.bf16.msra.mxu0 %v2927
    %3693 = vmatpush.bf16.msra.mxu0 %v2919
    %3694 = vmatpush.bf16.msra.mxu0 %v2911
    %3695 = vmatpush.bf16.msra.mxu0 %v2903
    %3696 = vmatmul.bf16.gmra.mxu0 %v387
    %v3697 = vpop.f32.mrf.mxu0
    %v3698 = vadd.f32 %v3684, %v3697
    %v3699 = vpop.f32.mrf.mxu0
    %v3700 = vadd.f32 %v3686, %v3699
    %3701 = vdwg.mxu0
    %3702 = vmatpush.bf16.msra.mxu0 %v2512
    %3703 = vmatpush.bf16.msra.mxu0 %v2504
    %3704 = vmatpush.bf16.msra.mxu0 %v2496
    %3705 = vmatpush.bf16.msra.mxu0 %v2488
    %3706 = vmatpush.bf16.msra.mxu0 %v2480
    %3707 = vmatpush.bf16.msra.mxu0 %v2472
    %3708 = vmatpush.bf16.msra.mxu0 %v2464
    %3709 = vmatpush.bf16.msra.mxu0 %v2456
    %3710 = vmatmul.bf16.gmra.mxu0 %v380
    %v3711 = vpop.f32.mrf.mxu0
    %v3712 = vadd.f32 %v904, %v3711
    %v3713 = vpop.f32.mrf.mxu0
    %v3714 = vadd.f32 %v904, %v3713
    %3715 = vdwg.mxu0
    %3716 = vmatpush.bf16.msra.mxu0 %v2576
    %3717 = vmatpush.bf16.msra.mxu0 %v2568
    %3718 = vmatpush.bf16.msra.mxu0 %v2560
    %3719 = vmatpush.bf16.msra.mxu0 %v2552
    %3720 = vmatpush.bf16.msra.mxu0 %v2544
    %3721 = vmatpush.bf16.msra.mxu0 %v2536
    %3722 = vmatpush.bf16.msra.mxu0 %v2528
    %3723 = vmatpush.bf16.msra.mxu0 %v2520
    %3724 = vmatmul.bf16.gmra.mxu0 %v381
    %v3725 = vpop.f32.mrf.mxu0
    %v3726 = vadd.f32 %v3712, %v3725
    %v3727 = vpop.f32.mrf.mxu0
    %v3728 = vadd.f32 %v3714, %v3727
    %3729 = vdwg.mxu0
    %3730 = vmatpush.bf16.msra.mxu0 %v2640
    %3731 = vmatpush.bf16.msra.mxu0 %v2632
    %3732 = vmatpush.bf16.msra.mxu0 %v2624
    %3733 = vmatpush.bf16.msra.mxu0 %v2616
    %3734 = vmatpush.bf16.msra.mxu0 %v2608
    %3735 = vmatpush.bf16.msra.mxu0 %v2600
    %3736 = vmatpush.bf16.msra.mxu0 %v2592
    %3737 = vmatpush.bf16.msra.mxu0 %v2584
    %3738 = vmatmul.bf16.gmra.mxu0 %v382
    %v3739 = vpop.f32.mrf.mxu0
    %v3740 = vadd.f32 %v3726, %v3739
    %v3741 = vpop.f32.mrf.mxu0
    %v3742 = vadd.f32 %v3728, %v3741
    %3743 = vdwg.mxu0
    %3744 = vmatpush.bf16.msra.mxu0 %v2704
    %3745 = vmatpush.bf16.msra.mxu0 %v2696
    %3746 = vmatpush.bf16.msra.mxu0 %v2688
    %3747 = vmatpush.bf16.msra.mxu0 %v2680
    %3748 = vmatpush.bf16.msra.mxu0 %v2672
    %3749 = vmatpush.bf16.msra.mxu0 %v2664
    %3750 = vmatpush.bf16.msra.mxu0 %v2656
    %3751 = vmatpush.bf16.msra.mxu0 %v2648
    %3752 = vmatmul.bf16.gmra.mxu0 %v383
    %v3753 = vpop.f32.mrf.mxu0
    %v3754 = vadd.f32 %v3740, %v3753
    %v3755 = vpop.f32.mrf.mxu0
    %v3756 = vadd.f32 %v3742, %v3755
    %3757 = vdwg.mxu0
    %3758 = vmatpush.bf16.msra.mxu0 %v2768
    %3759 = vmatpush.bf16.msra.mxu0 %v2760
    %3760 = vmatpush.bf16.msra.mxu0 %v2752
    %3761 = vmatpush.bf16.msra.mxu0 %v2744
    %3762 = vmatpush.bf16.msra.mxu0 %v2736
    %3763 = vmatpush.bf16.msra.mxu0 %v2728
    %3764 = vmatpush.bf16.msra.mxu0 %v2720
    %3765 = vmatpush.bf16.msra.mxu0 %v2712
    %3766 = vmatmul.bf16.gmra.mxu0 %v384
    %v3767 = vpop.f32.mrf.mxu0
    %v3768 = vadd.f32 %v3754, %v3767
    %v3769 = vpop.f32.mrf.mxu0
    %v3770 = vadd.f32 %v3756, %v3769
    %3771 = vdwg.mxu0
    %3772 = vmatpush.bf16.msra.mxu0 %v2832
    %3773 = vmatpush.bf16.msra.mxu0 %v2824
    %3774 = vmatpush.bf16.msra.mxu0 %v2816
    %3775 = vmatpush.bf16.msra.mxu0 %v2808
    %3776 = vmatpush.bf16.msra.mxu0 %v2800
    %3777 = vmatpush.bf16.msra.mxu0 %v2792
    %3778 = vmatpush.bf16.msra.mxu0 %v2784
    %3779 = vmatpush.bf16.msra.mxu0 %v2776
    %3780 = vmatmul.bf16.gmra.mxu0 %v385
    %v3781 = vpop.f32.mrf.mxu0
    %v3782 = vadd.f32 %v3768, %v3781
    %v3783 = vpop.f32.mrf.mxu0
    %v3784 = vadd.f32 %v3770, %v3783
    %3785 = vdwg.mxu0
    %3786 = vmatpush.bf16.msra.mxu0 %v2896
    %3787 = vmatpush.bf16.msra.mxu0 %v2888
    %3788 = vmatpush.bf16.msra.mxu0 %v2880
    %3789 = vmatpush.bf16.msra.mxu0 %v2872
    %3790 = vmatpush.bf16.msra.mxu0 %v2864
    %3791 = vmatpush.bf16.msra.mxu0 %v2856
    %3792 = vmatpush.bf16.msra.mxu0 %v2848
    %3793 = vmatpush.bf16.msra.mxu0 %v2840
    %3794 = vmatmul.bf16.gmra.mxu0 %v386
    %v3795 = vpop.f32.mrf.mxu0
    %v3796 = vadd.f32 %v3782, %v3795
    %v3797 = vpop.f32.mrf.mxu0
    %v3798 = vadd.f32 %v3784, %v3797
    %3799 = vdwg.mxu0
    %3800 = vmatpush.bf16.msra.mxu0 %v2960
    %3801 = vmatpush.bf16.msra.mxu0 %v2952
    %3802 = vmatpush.bf16.msra.mxu0 %v2944
    %3803 = vmatpush.bf16.msra.mxu0 %v2936
    %3804 = vmatpush.bf16.msra.mxu0 %v2928
    %3805 = vmatpush.bf16.msra.mxu0 %v2920
    %3806 = vmatpush.bf16.msra.mxu0 %v2912
    %3807 = vmatpush.bf16.msra.mxu0 %v2904
    %3808 = vmatmul.bf16.gmra.mxu0 %v387
    %v3809 = vpop.f32.mrf.mxu0
    %v3810 = vadd.f32 %v3796, %v3809
    %v3811 = vpop.f32.mrf.mxu0
    %v3812 = vadd.f32 %v3798, %v3811
    %3813 = vdwg.mxu0
    %3814 = vmatpush.bf16.msra.mxu0 %v2513
    %3815 = vmatpush.bf16.msra.mxu0 %v2505
    %3816 = vmatpush.bf16.msra.mxu0 %v2497
    %3817 = vmatpush.bf16.msra.mxu0 %v2489
    %3818 = vmatpush.bf16.msra.mxu0 %v2481
    %3819 = vmatpush.bf16.msra.mxu0 %v2473
    %3820 = vmatpush.bf16.msra.mxu0 %v2465
    %3821 = vmatpush.bf16.msra.mxu0 %v2457
    %3822 = vmatmul.bf16.gmra.mxu0 %v380
    %v3823 = vpop.f32.mrf.mxu0
    %v3824 = vadd.f32 %v905, %v3823
    %v3825 = vpop.f32.mrf.mxu0
    %v3826 = vadd.f32 %v905, %v3825
    %3827 = vdwg.mxu0
    %3828 = vmatpush.bf16.msra.mxu0 %v2577
    %3829 = vmatpush.bf16.msra.mxu0 %v2569
    %3830 = vmatpush.bf16.msra.mxu0 %v2561
    %3831 = vmatpush.bf16.msra.mxu0 %v2553
    %3832 = vmatpush.bf16.msra.mxu0 %v2545
    %3833 = vmatpush.bf16.msra.mxu0 %v2537
    %3834 = vmatpush.bf16.msra.mxu0 %v2529
    %3835 = vmatpush.bf16.msra.mxu0 %v2521
    %3836 = vmatmul.bf16.gmra.mxu0 %v381
    %v3837 = vpop.f32.mrf.mxu0
    %v3838 = vadd.f32 %v3824, %v3837
    %v3839 = vpop.f32.mrf.mxu0
    %v3840 = vadd.f32 %v3826, %v3839
    %3841 = vdwg.mxu0
    %3842 = vmatpush.bf16.msra.mxu0 %v2641
    %3843 = vmatpush.bf16.msra.mxu0 %v2633
    %3844 = vmatpush.bf16.msra.mxu0 %v2625
    %3845 = vmatpush.bf16.msra.mxu0 %v2617
    %3846 = vmatpush.bf16.msra.mxu0 %v2609
    %3847 = vmatpush.bf16.msra.mxu0 %v2601
    %3848 = vmatpush.bf16.msra.mxu0 %v2593
    %3849 = vmatpush.bf16.msra.mxu0 %v2585
    %3850 = vmatmul.bf16.gmra.mxu0 %v382
    %v3851 = vpop.f32.mrf.mxu0
    %v3852 = vadd.f32 %v3838, %v3851
    %v3853 = vpop.f32.mrf.mxu0
    %v3854 = vadd.f32 %v3840, %v3853
    %3855 = vdwg.mxu0
    %3856 = vmatpush.bf16.msra.mxu0 %v2705
    %3857 = vmatpush.bf16.msra.mxu0 %v2697
    %3858 = vmatpush.bf16.msra.mxu0 %v2689
    %3859 = vmatpush.bf16.msra.mxu0 %v2681
    %3860 = vmatpush.bf16.msra.mxu0 %v2673
    %3861 = vmatpush.bf16.msra.mxu0 %v2665
    %3862 = vmatpush.bf16.msra.mxu0 %v2657
    %3863 = vmatpush.bf16.msra.mxu0 %v2649
    %3864 = vmatmul.bf16.gmra.mxu0 %v383
    %v3865 = vpop.f32.mrf.mxu0
    %v3866 = vadd.f32 %v3852, %v3865
    %v3867 = vpop.f32.mrf.mxu0
    %v3868 = vadd.f32 %v3854, %v3867
    %3869 = vdwg.mxu0
    %3870 = vmatpush.bf16.msra.mxu0 %v2769
    %3871 = vmatpush.bf16.msra.mxu0 %v2761
    %3872 = vmatpush.bf16.msra.mxu0 %v2753
    %3873 = vmatpush.bf16.msra.mxu0 %v2745
    %3874 = vmatpush.bf16.msra.mxu0 %v2737
    %3875 = vmatpush.bf16.msra.mxu0 %v2729
    %3876 = vmatpush.bf16.msra.mxu0 %v2721
    %3877 = vmatpush.bf16.msra.mxu0 %v2713
    %3878 = vmatmul.bf16.gmra.mxu0 %v384
    %v3879 = vpop.f32.mrf.mxu0
    %v3880 = vadd.f32 %v3866, %v3879
    %v3881 = vpop.f32.mrf.mxu0
    %v3882 = vadd.f32 %v3868, %v3881
    %3883 = vdwg.mxu0
    %3884 = vmatpush.bf16.msra.mxu0 %v2833
    %3885 = vmatpush.bf16.msra.mxu0 %v2825
    %3886 = vmatpush.bf16.msra.mxu0 %v2817
    %3887 = vmatpush.bf16.msra.mxu0 %v2809
    %3888 = vmatpush.bf16.msra.mxu0 %v2801
    %3889 = vmatpush.bf16.msra.mxu0 %v2793
    %3890 = vmatpush.bf16.msra.mxu0 %v2785
    %3891 = vmatpush.bf16.msra.mxu0 %v2777
    %3892 = vmatmul.bf16.gmra.mxu0 %v385
    %v3893 = vpop.f32.mrf.mxu0
    %v3894 = vadd.f32 %v3880, %v3893
    %v3895 = vpop.f32.mrf.mxu0
    %v3896 = vadd.f32 %v3882, %v3895
    %3897 = vdwg.mxu0
    %3898 = vmatpush.bf16.msra.mxu0 %v2897
    %3899 = vmatpush.bf16.msra.mxu0 %v2889
    %3900 = vmatpush.bf16.msra.mxu0 %v2881
    %3901 = vmatpush.bf16.msra.mxu0 %v2873
    %3902 = vmatpush.bf16.msra.mxu0 %v2865
    %3903 = vmatpush.bf16.msra.mxu0 %v2857
    %3904 = vmatpush.bf16.msra.mxu0 %v2849
    %3905 = vmatpush.bf16.msra.mxu0 %v2841
    %3906 = vmatmul.bf16.gmra.mxu0 %v386
    %v3907 = vpop.f32.mrf.mxu0
    %v3908 = vadd.f32 %v3894, %v3907
    %v3909 = vpop.f32.mrf.mxu0
    %v3910 = vadd.f32 %v3896, %v3909
    %3911 = vdwg.mxu0
    %3912 = vmatpush.bf16.msra.mxu0 %v2961
    %3913 = vmatpush.bf16.msra.mxu0 %v2953
    %3914 = vmatpush.bf16.msra.mxu0 %v2945
    %3915 = vmatpush.bf16.msra.mxu0 %v2937
    %3916 = vmatpush.bf16.msra.mxu0 %v2929
    %3917 = vmatpush.bf16.msra.mxu0 %v2921
    %3918 = vmatpush.bf16.msra.mxu0 %v2913
    %3919 = vmatpush.bf16.msra.mxu0 %v2905
    %3920 = vmatmul.bf16.gmra.mxu0 %v387
    %v3921 = vpop.f32.mrf.mxu0
    %v3922 = vadd.f32 %v3908, %v3921
    %v3923 = vpop.f32.mrf.mxu0
    %v3924 = vadd.f32 %v3910, %v3923
    %3925 = vdwg.mxu0
    %3926 = vmatpush.bf16.msra.mxu0 %v2514
    %3927 = vmatpush.bf16.msra.mxu0 %v2506
    %3928 = vmatpush.bf16.msra.mxu0 %v2498
    %3929 = vmatpush.bf16.msra.mxu0 %v2490
    %3930 = vmatpush.bf16.msra.mxu0 %v2482
    %3931 = vmatpush.bf16.msra.mxu0 %v2474
    %3932 = vmatpush.bf16.msra.mxu0 %v2466
    %3933 = vmatpush.bf16.msra.mxu0 %v2458
    %3934 = vmatmul.bf16.gmra.mxu0 %v380
    %v3935 = vpop.f32.mrf.mxu0
    %v3936 = vadd.f32 %v906, %v3935
    %v3937 = vpop.f32.mrf.mxu0
    %v3938 = vadd.f32 %v906, %v3937
    %3939 = vdwg.mxu0
    %3940 = vmatpush.bf16.msra.mxu0 %v2578
    %3941 = vmatpush.bf16.msra.mxu0 %v2570
    %3942 = vmatpush.bf16.msra.mxu0 %v2562
    %3943 = vmatpush.bf16.msra.mxu0 %v2554
    %3944 = vmatpush.bf16.msra.mxu0 %v2546
    %3945 = vmatpush.bf16.msra.mxu0 %v2538
    %3946 = vmatpush.bf16.msra.mxu0 %v2530
    %3947 = vmatpush.bf16.msra.mxu0 %v2522
    %3948 = vmatmul.bf16.gmra.mxu0 %v381
    %v3949 = vpop.f32.mrf.mxu0
    %v3950 = vadd.f32 %v3936, %v3949
    %v3951 = vpop.f32.mrf.mxu0
    %v3952 = vadd.f32 %v3938, %v3951
    %3953 = vdwg.mxu0
    %3954 = vmatpush.bf16.msra.mxu0 %v2642
    %3955 = vmatpush.bf16.msra.mxu0 %v2634
    %3956 = vmatpush.bf16.msra.mxu0 %v2626
    %3957 = vmatpush.bf16.msra.mxu0 %v2618
    %3958 = vmatpush.bf16.msra.mxu0 %v2610
    %3959 = vmatpush.bf16.msra.mxu0 %v2602
    %3960 = vmatpush.bf16.msra.mxu0 %v2594
    %3961 = vmatpush.bf16.msra.mxu0 %v2586
    %3962 = vmatmul.bf16.gmra.mxu0 %v382
    %v3963 = vpop.f32.mrf.mxu0
    %v3964 = vadd.f32 %v3950, %v3963
    %v3965 = vpop.f32.mrf.mxu0
    %v3966 = vadd.f32 %v3952, %v3965
    %3967 = vdwg.mxu0
    %3968 = vmatpush.bf16.msra.mxu0 %v2706
    %3969 = vmatpush.bf16.msra.mxu0 %v2698
    %3970 = vmatpush.bf16.msra.mxu0 %v2690
    %3971 = vmatpush.bf16.msra.mxu0 %v2682
    %3972 = vmatpush.bf16.msra.mxu0 %v2674
    %3973 = vmatpush.bf16.msra.mxu0 %v2666
    %3974 = vmatpush.bf16.msra.mxu0 %v2658
    %3975 = vmatpush.bf16.msra.mxu0 %v2650
    %3976 = vmatmul.bf16.gmra.mxu0 %v383
    %v3977 = vpop.f32.mrf.mxu0
    %v3978 = vadd.f32 %v3964, %v3977
    %v3979 = vpop.f32.mrf.mxu0
    %v3980 = vadd.f32 %v3966, %v3979
    %3981 = vdwg.mxu0
    %3982 = vmatpush.bf16.msra.mxu0 %v2770
    %3983 = vmatpush.bf16.msra.mxu0 %v2762
    %3984 = vmatpush.bf16.msra.mxu0 %v2754
    %3985 = vmatpush.bf16.msra.mxu0 %v2746
    %3986 = vmatpush.bf16.msra.mxu0 %v2738
    %3987 = vmatpush.bf16.msra.mxu0 %v2730
    %3988 = vmatpush.bf16.msra.mxu0 %v2722
    %3989 = vmatpush.bf16.msra.mxu0 %v2714
    %3990 = vmatmul.bf16.gmra.mxu0 %v384
    %v3991 = vpop.f32.mrf.mxu0
    %v3992 = vadd.f32 %v3978, %v3991
    %v3993 = vpop.f32.mrf.mxu0
    %v3994 = vadd.f32 %v3980, %v3993
    %3995 = vdwg.mxu0
    %3996 = vmatpush.bf16.msra.mxu0 %v2834
    %3997 = vmatpush.bf16.msra.mxu0 %v2826
    %3998 = vmatpush.bf16.msra.mxu0 %v2818
    %3999 = vmatpush.bf16.msra.mxu0 %v2810
    %4000 = vmatpush.bf16.msra.mxu0 %v2802
    %4001 = vmatpush.bf16.msra.mxu0 %v2794
    %4002 = vmatpush.bf16.msra.mxu0 %v2786
    %4003 = vmatpush.bf16.msra.mxu0 %v2778
    %4004 = vmatmul.bf16.gmra.mxu0 %v385
    %v4005 = vpop.f32.mrf.mxu0
    %v4006 = vadd.f32 %v3992, %v4005
    %v4007 = vpop.f32.mrf.mxu0
    %v4008 = vadd.f32 %v3994, %v4007
    %4009 = vdwg.mxu0
    %4010 = vmatpush.bf16.msra.mxu0 %v2898
    %4011 = vmatpush.bf16.msra.mxu0 %v2890
    %4012 = vmatpush.bf16.msra.mxu0 %v2882
    %4013 = vmatpush.bf16.msra.mxu0 %v2874
    %4014 = vmatpush.bf16.msra.mxu0 %v2866
    %4015 = vmatpush.bf16.msra.mxu0 %v2858
    %4016 = vmatpush.bf16.msra.mxu0 %v2850
    %4017 = vmatpush.bf16.msra.mxu0 %v2842
    %4018 = vmatmul.bf16.gmra.mxu0 %v386
    %v4019 = vpop.f32.mrf.mxu0
    %v4020 = vadd.f32 %v4006, %v4019
    %v4021 = vpop.f32.mrf.mxu0
    %v4022 = vadd.f32 %v4008, %v4021
    %4023 = vdwg.mxu0
    %4024 = vmatpush.bf16.msra.mxu0 %v2962
    %4025 = vmatpush.bf16.msra.mxu0 %v2954
    %4026 = vmatpush.bf16.msra.mxu0 %v2946
    %4027 = vmatpush.bf16.msra.mxu0 %v2938
    %4028 = vmatpush.bf16.msra.mxu0 %v2930
    %4029 = vmatpush.bf16.msra.mxu0 %v2922
    %4030 = vmatpush.bf16.msra.mxu0 %v2914
    %4031 = vmatpush.bf16.msra.mxu0 %v2906
    %4032 = vmatmul.bf16.gmra.mxu0 %v387
    %v4033 = vpop.f32.mrf.mxu0
    %v4034 = vadd.f32 %v4020, %v4033
    %v4035 = vpop.f32.mrf.mxu0
    %v4036 = vadd.f32 %v4022, %v4035
    %4037 = vdwg.mxu0
    %4038 = vmatpush.bf16.msra.mxu0 %v2515
    %4039 = vmatpush.bf16.msra.mxu0 %v2507
    %4040 = vmatpush.bf16.msra.mxu0 %v2499
    %4041 = vmatpush.bf16.msra.mxu0 %v2491
    %4042 = vmatpush.bf16.msra.mxu0 %v2483
    %4043 = vmatpush.bf16.msra.mxu0 %v2475
    %4044 = vmatpush.bf16.msra.mxu0 %v2467
    %4045 = vmatpush.bf16.msra.mxu0 %v2459
    %4046 = vmatmul.bf16.gmra.mxu0 %v380
    %v4047 = vpop.f32.mrf.mxu0
    %v4048 = vadd.f32 %v907, %v4047
    %v4049 = vpop.f32.mrf.mxu0
    %v4050 = vadd.f32 %v907, %v4049
    %4051 = vdwg.mxu0
    %4052 = vmatpush.bf16.msra.mxu0 %v2579
    %4053 = vmatpush.bf16.msra.mxu0 %v2571
    %4054 = vmatpush.bf16.msra.mxu0 %v2563
    %4055 = vmatpush.bf16.msra.mxu0 %v2555
    %4056 = vmatpush.bf16.msra.mxu0 %v2547
    %4057 = vmatpush.bf16.msra.mxu0 %v2539
    %4058 = vmatpush.bf16.msra.mxu0 %v2531
    %4059 = vmatpush.bf16.msra.mxu0 %v2523
    %4060 = vmatmul.bf16.gmra.mxu0 %v381
    %v4061 = vpop.f32.mrf.mxu0
    %v4062 = vadd.f32 %v4048, %v4061
    %v4063 = vpop.f32.mrf.mxu0
    %v4064 = vadd.f32 %v4050, %v4063
    %4065 = vdwg.mxu0
    %4066 = vmatpush.bf16.msra.mxu0 %v2643
    %4067 = vmatpush.bf16.msra.mxu0 %v2635
    %4068 = vmatpush.bf16.msra.mxu0 %v2627
    %4069 = vmatpush.bf16.msra.mxu0 %v2619
    %4070 = vmatpush.bf16.msra.mxu0 %v2611
    %4071 = vmatpush.bf16.msra.mxu0 %v2603
    %4072 = vmatpush.bf16.msra.mxu0 %v2595
    %4073 = vmatpush.bf16.msra.mxu0 %v2587
    %4074 = vmatmul.bf16.gmra.mxu0 %v382
    %v4075 = vpop.f32.mrf.mxu0
    %v4076 = vadd.f32 %v4062, %v4075
    %v4077 = vpop.f32.mrf.mxu0
    %v4078 = vadd.f32 %v4064, %v4077
    %4079 = vdwg.mxu0
    %4080 = vmatpush.bf16.msra.mxu0 %v2707
    %4081 = vmatpush.bf16.msra.mxu0 %v2699
    %4082 = vmatpush.bf16.msra.mxu0 %v2691
    %4083 = vmatpush.bf16.msra.mxu0 %v2683
    %4084 = vmatpush.bf16.msra.mxu0 %v2675
    %4085 = vmatpush.bf16.msra.mxu0 %v2667
    %4086 = vmatpush.bf16.msra.mxu0 %v2659
    %4087 = vmatpush.bf16.msra.mxu0 %v2651
    %4088 = vmatmul.bf16.gmra.mxu0 %v383
    %v4089 = vpop.f32.mrf.mxu0
    %v4090 = vadd.f32 %v4076, %v4089
    %v4091 = vpop.f32.mrf.mxu0
    %v4092 = vadd.f32 %v4078, %v4091
    %4093 = vdwg.mxu0
    %4094 = vmatpush.bf16.msra.mxu0 %v2771
    %4095 = vmatpush.bf16.msra.mxu0 %v2763
    %4096 = vmatpush.bf16.msra.mxu0 %v2755
    %4097 = vmatpush.bf16.msra.mxu0 %v2747
    %4098 = vmatpush.bf16.msra.mxu0 %v2739
    %4099 = vmatpush.bf16.msra.mxu0 %v2731
    %4100 = vmatpush.bf16.msra.mxu0 %v2723
    %4101 = vmatpush.bf16.msra.mxu0 %v2715
    %4102 = vmatmul.bf16.gmra.mxu0 %v384
    %v4103 = vpop.f32.mrf.mxu0
    %v4104 = vadd.f32 %v4090, %v4103
    %v4105 = vpop.f32.mrf.mxu0
    %v4106 = vadd.f32 %v4092, %v4105
    %4107 = vdwg.mxu0
    %4108 = vmatpush.bf16.msra.mxu0 %v2835
    %4109 = vmatpush.bf16.msra.mxu0 %v2827
    %4110 = vmatpush.bf16.msra.mxu0 %v2819
    %4111 = vmatpush.bf16.msra.mxu0 %v2811
    %4112 = vmatpush.bf16.msra.mxu0 %v2803
    %4113 = vmatpush.bf16.msra.mxu0 %v2795
    %4114 = vmatpush.bf16.msra.mxu0 %v2787
    %4115 = vmatpush.bf16.msra.mxu0 %v2779
    %4116 = vmatmul.bf16.gmra.mxu0 %v385
    %v4117 = vpop.f32.mrf.mxu0
    %v4118 = vadd.f32 %v4104, %v4117
    %v4119 = vpop.f32.mrf.mxu0
    %v4120 = vadd.f32 %v4106, %v4119
    %4121 = vdwg.mxu0
    %4122 = vmatpush.bf16.msra.mxu0 %v2899
    %4123 = vmatpush.bf16.msra.mxu0 %v2891
    %4124 = vmatpush.bf16.msra.mxu0 %v2883
    %4125 = vmatpush.bf16.msra.mxu0 %v2875
    %4126 = vmatpush.bf16.msra.mxu0 %v2867
    %4127 = vmatpush.bf16.msra.mxu0 %v2859
    %4128 = vmatpush.bf16.msra.mxu0 %v2851
    %4129 = vmatpush.bf16.msra.mxu0 %v2843
    %4130 = vmatmul.bf16.gmra.mxu0 %v386
    %v4131 = vpop.f32.mrf.mxu0
    %v4132 = vadd.f32 %v4118, %v4131
    %v4133 = vpop.f32.mrf.mxu0
    %v4134 = vadd.f32 %v4120, %v4133
    %4135 = vdwg.mxu0
    %4136 = vmatpush.bf16.msra.mxu0 %v2963
    %4137 = vmatpush.bf16.msra.mxu0 %v2955
    %4138 = vmatpush.bf16.msra.mxu0 %v2947
    %4139 = vmatpush.bf16.msra.mxu0 %v2939
    %4140 = vmatpush.bf16.msra.mxu0 %v2931
    %4141 = vmatpush.bf16.msra.mxu0 %v2923
    %4142 = vmatpush.bf16.msra.mxu0 %v2915
    %4143 = vmatpush.bf16.msra.mxu0 %v2907
    %4144 = vmatmul.bf16.gmra.mxu0 %v387
    %v4145 = vpop.f32.mrf.mxu0
    %v4146 = vadd.f32 %v4132, %v4145
    %v4147 = vpop.f32.mrf.mxu0
    %v4148 = vadd.f32 %v4134, %v4147
    %4149 = vdwg.mxu0
    %4150 = vmatpush.bf16.msra.mxu0 %v2516
    %4151 = vmatpush.bf16.msra.mxu0 %v2508
    %4152 = vmatpush.bf16.msra.mxu0 %v2500
    %4153 = vmatpush.bf16.msra.mxu0 %v2492
    %4154 = vmatpush.bf16.msra.mxu0 %v2484
    %4155 = vmatpush.bf16.msra.mxu0 %v2476
    %4156 = vmatpush.bf16.msra.mxu0 %v2468
    %4157 = vmatpush.bf16.msra.mxu0 %v2460
    %4158 = vmatmul.bf16.gmra.mxu0 %v380
    %v4159 = vpop.f32.mrf.mxu0
    %v4160 = vadd.f32 %v908, %v4159
    %v4161 = vpop.f32.mrf.mxu0
    %v4162 = vadd.f32 %v908, %v4161
    %4163 = vdwg.mxu0
    %4164 = vmatpush.bf16.msra.mxu0 %v2580
    %4165 = vmatpush.bf16.msra.mxu0 %v2572
    %4166 = vmatpush.bf16.msra.mxu0 %v2564
    %4167 = vmatpush.bf16.msra.mxu0 %v2556
    %4168 = vmatpush.bf16.msra.mxu0 %v2548
    %4169 = vmatpush.bf16.msra.mxu0 %v2540
    %4170 = vmatpush.bf16.msra.mxu0 %v2532
    %4171 = vmatpush.bf16.msra.mxu0 %v2524
    %4172 = vmatmul.bf16.gmra.mxu0 %v381
    %v4173 = vpop.f32.mrf.mxu0
    %v4174 = vadd.f32 %v4160, %v4173
    %v4175 = vpop.f32.mrf.mxu0
    %v4176 = vadd.f32 %v4162, %v4175
    %4177 = vdwg.mxu0
    %4178 = vmatpush.bf16.msra.mxu0 %v2644
    %4179 = vmatpush.bf16.msra.mxu0 %v2636
    %4180 = vmatpush.bf16.msra.mxu0 %v2628
    %4181 = vmatpush.bf16.msra.mxu0 %v2620
    %4182 = vmatpush.bf16.msra.mxu0 %v2612
    %4183 = vmatpush.bf16.msra.mxu0 %v2604
    %4184 = vmatpush.bf16.msra.mxu0 %v2596
    %4185 = vmatpush.bf16.msra.mxu0 %v2588
    %4186 = vmatmul.bf16.gmra.mxu0 %v382
    %v4187 = vpop.f32.mrf.mxu0
    %v4188 = vadd.f32 %v4174, %v4187
    %v4189 = vpop.f32.mrf.mxu0
    %v4190 = vadd.f32 %v4176, %v4189
    %4191 = vdwg.mxu0
    %4192 = vmatpush.bf16.msra.mxu0 %v2708
    %4193 = vmatpush.bf16.msra.mxu0 %v2700
    %4194 = vmatpush.bf16.msra.mxu0 %v2692
    %4195 = vmatpush.bf16.msra.mxu0 %v2684
    %4196 = vmatpush.bf16.msra.mxu0 %v2676
    %4197 = vmatpush.bf16.msra.mxu0 %v2668
    %4198 = vmatpush.bf16.msra.mxu0 %v2660
    %4199 = vmatpush.bf16.msra.mxu0 %v2652
    %4200 = vmatmul.bf16.gmra.mxu0 %v383
    %v4201 = vpop.f32.mrf.mxu0
    %v4202 = vadd.f32 %v4188, %v4201
    %v4203 = vpop.f32.mrf.mxu0
    %v4204 = vadd.f32 %v4190, %v4203
    %4205 = vdwg.mxu0
    %4206 = vmatpush.bf16.msra.mxu0 %v2772
    %4207 = vmatpush.bf16.msra.mxu0 %v2764
    %4208 = vmatpush.bf16.msra.mxu0 %v2756
    %4209 = vmatpush.bf16.msra.mxu0 %v2748
    %4210 = vmatpush.bf16.msra.mxu0 %v2740
    %4211 = vmatpush.bf16.msra.mxu0 %v2732
    %4212 = vmatpush.bf16.msra.mxu0 %v2724
    %4213 = vmatpush.bf16.msra.mxu0 %v2716
    %4214 = vmatmul.bf16.gmra.mxu0 %v384
    %v4215 = vpop.f32.mrf.mxu0
    %v4216 = vadd.f32 %v4202, %v4215
    %v4217 = vpop.f32.mrf.mxu0
    %v4218 = vadd.f32 %v4204, %v4217
    %4219 = vdwg.mxu0
    %4220 = vmatpush.bf16.msra.mxu0 %v2836
    %4221 = vmatpush.bf16.msra.mxu0 %v2828
    %4222 = vmatpush.bf16.msra.mxu0 %v2820
    %4223 = vmatpush.bf16.msra.mxu0 %v2812
    %4224 = vmatpush.bf16.msra.mxu0 %v2804
    %4225 = vmatpush.bf16.msra.mxu0 %v2796
    %4226 = vmatpush.bf16.msra.mxu0 %v2788
    %4227 = vmatpush.bf16.msra.mxu0 %v2780
    %4228 = vmatmul.bf16.gmra.mxu0 %v385
    %v4229 = vpop.f32.mrf.mxu0
    %v4230 = vadd.f32 %v4216, %v4229
    %v4231 = vpop.f32.mrf.mxu0
    %v4232 = vadd.f32 %v4218, %v4231
    %4233 = vdwg.mxu0
    %4234 = vmatpush.bf16.msra.mxu0 %v2900
    %4235 = vmatpush.bf16.msra.mxu0 %v2892
    %4236 = vmatpush.bf16.msra.mxu0 %v2884
    %4237 = vmatpush.bf16.msra.mxu0 %v2876
    %4238 = vmatpush.bf16.msra.mxu0 %v2868
    %4239 = vmatpush.bf16.msra.mxu0 %v2860
    %4240 = vmatpush.bf16.msra.mxu0 %v2852
    %4241 = vmatpush.bf16.msra.mxu0 %v2844
    %4242 = vmatmul.bf16.gmra.mxu0 %v386
    %v4243 = vpop.f32.mrf.mxu0
    %v4244 = vadd.f32 %v4230, %v4243
    %v4245 = vpop.f32.mrf.mxu0
    %v4246 = vadd.f32 %v4232, %v4245
    %4247 = vdwg.mxu0
    %4248 = vmatpush.bf16.msra.mxu0 %v2964
    %4249 = vmatpush.bf16.msra.mxu0 %v2956
    %4250 = vmatpush.bf16.msra.mxu0 %v2948
    %4251 = vmatpush.bf16.msra.mxu0 %v2940
    %4252 = vmatpush.bf16.msra.mxu0 %v2932
    %4253 = vmatpush.bf16.msra.mxu0 %v2924
    %4254 = vmatpush.bf16.msra.mxu0 %v2916
    %4255 = vmatpush.bf16.msra.mxu0 %v2908
    %4256 = vmatmul.bf16.gmra.mxu0 %v387
    %v4257 = vpop.f32.mrf.mxu0
    %v4258 = vadd.f32 %v4244, %v4257
    %v4259 = vpop.f32.mrf.mxu0
    %v4260 = vadd.f32 %v4246, %v4259
    %4261 = vdwg.mxu0
    %4262 = vmatpush.bf16.msra.mxu0 %v2517
    %4263 = vmatpush.bf16.msra.mxu0 %v2509
    %4264 = vmatpush.bf16.msra.mxu0 %v2501
    %4265 = vmatpush.bf16.msra.mxu0 %v2493
    %4266 = vmatpush.bf16.msra.mxu0 %v2485
    %4267 = vmatpush.bf16.msra.mxu0 %v2477
    %4268 = vmatpush.bf16.msra.mxu0 %v2469
    %4269 = vmatpush.bf16.msra.mxu0 %v2461
    %4270 = vmatmul.bf16.gmra.mxu0 %v380
    %v4271 = vpop.f32.mrf.mxu0
    %v4272 = vadd.f32 %v909, %v4271
    %v4273 = vpop.f32.mrf.mxu0
    %v4274 = vadd.f32 %v909, %v4273
    %4275 = vdwg.mxu0
    %4276 = vmatpush.bf16.msra.mxu0 %v2581
    %4277 = vmatpush.bf16.msra.mxu0 %v2573
    %4278 = vmatpush.bf16.msra.mxu0 %v2565
    %4279 = vmatpush.bf16.msra.mxu0 %v2557
    %4280 = vmatpush.bf16.msra.mxu0 %v2549
    %4281 = vmatpush.bf16.msra.mxu0 %v2541
    %4282 = vmatpush.bf16.msra.mxu0 %v2533
    %4283 = vmatpush.bf16.msra.mxu0 %v2525
    %4284 = vmatmul.bf16.gmra.mxu0 %v381
    %v4285 = vpop.f32.mrf.mxu0
    %v4286 = vadd.f32 %v4272, %v4285
    %v4287 = vpop.f32.mrf.mxu0
    %v4288 = vadd.f32 %v4274, %v4287
    %4289 = vdwg.mxu0
    %4290 = vmatpush.bf16.msra.mxu0 %v2645
    %4291 = vmatpush.bf16.msra.mxu0 %v2637
    %4292 = vmatpush.bf16.msra.mxu0 %v2629
    %4293 = vmatpush.bf16.msra.mxu0 %v2621
    %4294 = vmatpush.bf16.msra.mxu0 %v2613
    %4295 = vmatpush.bf16.msra.mxu0 %v2605
    %4296 = vmatpush.bf16.msra.mxu0 %v2597
    %4297 = vmatpush.bf16.msra.mxu0 %v2589
    %4298 = vmatmul.bf16.gmra.mxu0 %v382
    %v4299 = vpop.f32.mrf.mxu0
    %v4300 = vadd.f32 %v4286, %v4299
    %v4301 = vpop.f32.mrf.mxu0
    %v4302 = vadd.f32 %v4288, %v4301
    %4303 = vdwg.mxu0
    %4304 = vmatpush.bf16.msra.mxu0 %v2709
    %4305 = vmatpush.bf16.msra.mxu0 %v2701
    %4306 = vmatpush.bf16.msra.mxu0 %v2693
    %4307 = vmatpush.bf16.msra.mxu0 %v2685
    %4308 = vmatpush.bf16.msra.mxu0 %v2677
    %4309 = vmatpush.bf16.msra.mxu0 %v2669
    %4310 = vmatpush.bf16.msra.mxu0 %v2661
    %4311 = vmatpush.bf16.msra.mxu0 %v2653
    %4312 = vmatmul.bf16.gmra.mxu0 %v383
    %v4313 = vpop.f32.mrf.mxu0
    %v4314 = vadd.f32 %v4300, %v4313
    %v4315 = vpop.f32.mrf.mxu0
    %v4316 = vadd.f32 %v4302, %v4315
    %4317 = vdwg.mxu0
    %4318 = vmatpush.bf16.msra.mxu0 %v2773
    %4319 = vmatpush.bf16.msra.mxu0 %v2765
    %4320 = vmatpush.bf16.msra.mxu0 %v2757
    %4321 = vmatpush.bf16.msra.mxu0 %v2749
    %4322 = vmatpush.bf16.msra.mxu0 %v2741
    %4323 = vmatpush.bf16.msra.mxu0 %v2733
    %4324 = vmatpush.bf16.msra.mxu0 %v2725
    %4325 = vmatpush.bf16.msra.mxu0 %v2717
    %4326 = vmatmul.bf16.gmra.mxu0 %v384
    %v4327 = vpop.f32.mrf.mxu0
    %v4328 = vadd.f32 %v4314, %v4327
    %v4329 = vpop.f32.mrf.mxu0
    %v4330 = vadd.f32 %v4316, %v4329
    %4331 = vdwg.mxu0
    %4332 = vmatpush.bf16.msra.mxu0 %v2837
    %4333 = vmatpush.bf16.msra.mxu0 %v2829
    %4334 = vmatpush.bf16.msra.mxu0 %v2821
    %4335 = vmatpush.bf16.msra.mxu0 %v2813
    %4336 = vmatpush.bf16.msra.mxu0 %v2805
    %4337 = vmatpush.bf16.msra.mxu0 %v2797
    %4338 = vmatpush.bf16.msra.mxu0 %v2789
    %4339 = vmatpush.bf16.msra.mxu0 %v2781
    %4340 = vmatmul.bf16.gmra.mxu0 %v385
    %v4341 = vpop.f32.mrf.mxu0
    %v4342 = vadd.f32 %v4328, %v4341
    %v4343 = vpop.f32.mrf.mxu0
    %v4344 = vadd.f32 %v4330, %v4343
    %4345 = vdwg.mxu0
    %4346 = vmatpush.bf16.msra.mxu0 %v2901
    %4347 = vmatpush.bf16.msra.mxu0 %v2893
    %4348 = vmatpush.bf16.msra.mxu0 %v2885
    %4349 = vmatpush.bf16.msra.mxu0 %v2877
    %4350 = vmatpush.bf16.msra.mxu0 %v2869
    %4351 = vmatpush.bf16.msra.mxu0 %v2861
    %4352 = vmatpush.bf16.msra.mxu0 %v2853
    %4353 = vmatpush.bf16.msra.mxu0 %v2845
    %4354 = vmatmul.bf16.gmra.mxu0 %v386
    %v4355 = vpop.f32.mrf.mxu0
    %v4356 = vadd.f32 %v4342, %v4355
    %v4357 = vpop.f32.mrf.mxu0
    %v4358 = vadd.f32 %v4344, %v4357
    %4359 = vdwg.mxu0
    %4360 = vmatpush.bf16.msra.mxu0 %v2965
    %4361 = vmatpush.bf16.msra.mxu0 %v2957
    %4362 = vmatpush.bf16.msra.mxu0 %v2949
    %4363 = vmatpush.bf16.msra.mxu0 %v2941
    %4364 = vmatpush.bf16.msra.mxu0 %v2933
    %4365 = vmatpush.bf16.msra.mxu0 %v2925
    %4366 = vmatpush.bf16.msra.mxu0 %v2917
    %4367 = vmatpush.bf16.msra.mxu0 %v2909
    %4368 = vmatmul.bf16.gmra.mxu0 %v387
    %v4369 = vpop.f32.mrf.mxu0
    %v4370 = vadd.f32 %v4356, %v4369
    %v4371 = vpop.f32.mrf.mxu0
    %v4372 = vadd.f32 %v4358, %v4371
    %4373 = vdwg.mxu0
    %v4374 = vmax.f32 %v3586, 0.0
    %v4375 = vmax.f32 %v3698, 0.0
    %v4376 = vmax.f32 %v3810, 0.0
    %v4377 = vmax.f32 %v3922, 0.0
    %v4378 = vmax.f32 %v4034, 0.0
    %v4379 = vmax.f32 %v4146, 0.0
    %v4380 = vmax.f32 %v4258, 0.0
    %v4381 = vmax.f32 %v4370, 0.0
    %v4382 = vmax.f32 %v3588, 0.0
    %v4383 = vmax.f32 %v3700, 0.0
    %v4384 = vmax.f32 %v3812, 0.0
    %v4385 = vmax.f32 %v3924, 0.0
    %v4386 = vmax.f32 %v4036, 0.0
    %v4387 = vmax.f32 %v4148, 0.0
    %v4388 = vmax.f32 %v4260, 0.0
    %v4389 = vmax.f32 %v4372, 0.0
    %v4390 = vpack.c.bf16 %v4382, %v4374
    %v4391 = vpack.c.bf16 %v4383, %v4375
    %v4392 = vpack.c.bf16 %v4384, %v4376
    %v4393 = vpack.c.bf16 %v4385, %v4377
    %v4394 = vpack.c.bf16 %v4386, %v4378
    %v4395 = vpack.c.bf16 %v4387, %v4379
    %v4396 = vpack.c.bf16 %v4388, %v4380
    %v4397 = vpack.c.bf16 %v4389, %v4381
    %v4398 = vld [vmem:[#allocation11] sm:$0xf]
    %v4399 = vld [vmem:[#allocation11 + $0x4] sm:$0xf]
    %v4400 = vld [vmem:[#allocation11 + $0x8] sm:$0xf]
    %v4401 = vld [vmem:[#allocation11 + $0xc] sm:$0xf]
    %v4402 = vld [vmem:[#allocation11 + $0x10] sm:$0xf]
    %v4403 = vld [vmem:[#allocation11 + $0x14] sm:$0xf]
    %v4404 = vld [vmem:[#allocation11 + $0x18] sm:$0xf]
    %v4405 = vld [vmem:[#allocation11 + $0x1c] sm:$0xf]
    %v4406 = vld [vmem:[#allocation11 + $0x20] sm:$0xf]
    %v4407 = vld [vmem:[#allocation11 + $0x24] sm:$0xf]
    %v4408 = vld [vmem:[#allocation11 + $0x28] sm:$0xf]
    %v4409 = vld [vmem:[#allocation11 + $0x2c] sm:$0xf]
    %v4410 = vld [vmem:[#allocation11 + $0x30] sm:$0xf]
    %v4411 = vld [vmem:[#allocation11 + $0x34] sm:$0xf]
    %v4412 = vld [vmem:[#allocation11 + $0x38] sm:$0xf]
    %v4413 = vld [vmem:[#allocation11 + $0x3c] sm:$0xf]
    %v4414 = vld [vmem:[#allocation11 + $0x40] sm:$0xf]
    %v4415 = vld [vmem:[#allocation11 + $0x44] sm:$0xf]
    %v4416 = vld [vmem:[#allocation11 + $0x48] sm:$0xf]
    %v4417 = vld [vmem:[#allocation11 + $0x4c] sm:$0xf]
    %v4418 = vld [vmem:[#allocation11 + $0x50] sm:$0xf]
    %v4419 = vld [vmem:[#allocation11 + $0x54] sm:$0xf]
    %v4420 = vld [vmem:[#allocation11 + $0x58] sm:$0xf]
    %v4421 = vld [vmem:[#allocation11 + $0x5c] sm:$0xf]
    %v4422 = vld [vmem:[#allocation11 + $0x60] sm:$0xf]
    %v4423 = vld [vmem:[#allocation11 + $0x64] sm:$0xf]
    %v4424 = vld [vmem:[#allocation11 + $0x68] sm:$0xf]
    %v4425 = vld [vmem:[#allocation11 + $0x6c] sm:$0xf]
    %v4426 = vld [vmem:[#allocation11 + $0x70] sm:$0xf]
    %v4427 = vld [vmem:[#allocation11 + $0x74] sm:$0xf]
    %v4428 = vld [vmem:[#allocation11 + $0x78] sm:$0xf]
    %v4429 = vld [vmem:[#allocation11 + $0x7c] sm:$0xf]
    %v4430 = vld [vmem:[#allocation11 + $0x80] sm:$0xf]
    %v4431 = vld [vmem:[#allocation11 + $0x84] sm:$0xf]
    %v4432 = vld [vmem:[#allocation11 + $0x88] sm:$0xf]
    %v4433 = vld [vmem:[#allocation11 + $0x8c] sm:$0xf]
    %v4434 = vld [vmem:[#allocation11 + $0x90] sm:$0xf]
    %v4435 = vld [vmem:[#allocation11 + $0x94] sm:$0xf]
    %v4436 = vld [vmem:[#allocation11 + $0x98] sm:$0xf]
    %v4437 = vld [vmem:[#allocation11 + $0x9c] sm:$0xf]
    %v4438 = vld [vmem:[#allocation11 + $0xa0] sm:$0xf]
    %v4439 = vld [vmem:[#allocation11 + $0xa4] sm:$0xf]
    %v4440 = vld [vmem:[#allocation11 + $0xa8] sm:$0xf]
    %v4441 = vld [vmem:[#allocation11 + $0xac] sm:$0xf]
    %v4442 = vld [vmem:[#allocation11 + $0xb0] sm:$0xf]
    %v4443 = vld [vmem:[#allocation11 + $0xb4] sm:$0xf]
    %v4444 = vld [vmem:[#allocation11 + $0xb8] sm:$0xf]
    %v4445 = vld [vmem:[#allocation11 + $0xbc] sm:$0xf]
    %v4446 = vld [vmem:[#allocation11 + $0xc0] sm:$0xf]
    %v4447 = vld [vmem:[#allocation11 + $0xc4] sm:$0xf]
    %v4448 = vld [vmem:[#allocation11 + $0xc8] sm:$0xf]
    %v4449 = vld [vmem:[#allocation11 + $0xcc] sm:$0xf]
    %v4450 = vld [vmem:[#allocation11 + $0xd0] sm:$0xf]
    %v4451 = vld [vmem:[#allocation11 + $0xd4] sm:$0xf]
    %v4452 = vld [vmem:[#allocation11 + $0xd8] sm:$0xf]
    %v4453 = vld [vmem:[#allocation11 + $0xdc] sm:$0xf]
    %v4454 = vld [vmem:[#allocation11 + $0xe0] sm:$0xf]
    %v4455 = vld [vmem:[#allocation11 + $0xe4] sm:$0xf]
    %v4456 = vld [vmem:[#allocation11 + $0xe8] sm:$0xf]
    %v4457 = vld [vmem:[#allocation11 + $0xec] sm:$0xf]
    %v4458 = vld [vmem:[#allocation11 + $0xf0] sm:$0xf]
    %v4459 = vld [vmem:[#allocation11 + $0xf4] sm:$0xf]
    %v4460 = vld [vmem:[#allocation11 + $0xf8] sm:$0xf]
    %v4461 = vld [vmem:[#allocation11 + $0xfc] sm:$0xf]
    %v4462 = vld [vmem:[#allocation11 + $0x100] sm:$0xf]
    %v4463 = vld [vmem:[#allocation11 + $0x104] sm:$0xf]
    %v4464 = vld [vmem:[#allocation11 + $0x108] sm:$0xf]
    %v4465 = vld [vmem:[#allocation11 + $0x10c] sm:$0xf]
    %v4466 = vld [vmem:[#allocation11 + $0x110] sm:$0xf]
    %v4467 = vld [vmem:[#allocation11 + $0x114] sm:$0xf]
    %v4468 = vld [vmem:[#allocation11 + $0x118] sm:$0xf]
    %v4469 = vld [vmem:[#allocation11 + $0x11c] sm:$0xf]
    %v4470 = vld [vmem:[#allocation11 + $0x120] sm:$0xf]
    %v4471 = vld [vmem:[#allocation11 + $0x124] sm:$0xf]
    %v4472 = vld [vmem:[#allocation11 + $0x128] sm:$0xf]
    %v4473 = vld [vmem:[#allocation11 + $0x12c] sm:$0xf]
    %v4474 = vld [vmem:[#allocation11 + $0x130] sm:$0xf]
    %v4475 = vld [vmem:[#allocation11 + $0x134] sm:$0xf]
    %v4476 = vld [vmem:[#allocation11 + $0x138] sm:$0xf]
    %v4477 = vld [vmem:[#allocation11 + $0x13c] sm:$0xf]
    %v4478 = vld [vmem:[#allocation11 + $0x140] sm:$0xf]
    %v4479 = vld [vmem:[#allocation11 + $0x144] sm:$0xf]
    %v4480 = vld [vmem:[#allocation11 + $0x148] sm:$0xf]
    %v4481 = vld [vmem:[#allocation11 + $0x14c] sm:$0xf]
    %v4482 = vld [vmem:[#allocation11 + $0x150] sm:$0xf]
    %v4483 = vld [vmem:[#allocation11 + $0x154] sm:$0xf]
    %v4484 = vld [vmem:[#allocation11 + $0x158] sm:$0xf]
    %v4485 = vld [vmem:[#allocation11 + $0x15c] sm:$0xf]
    %v4486 = vld [vmem:[#allocation11 + $0x160] sm:$0xf]
    %v4487 = vld [vmem:[#allocation11 + $0x164] sm:$0xf]
    %v4488 = vld [vmem:[#allocation11 + $0x168] sm:$0xf]
    %v4489 = vld [vmem:[#allocation11 + $0x16c] sm:$0xf]
    %v4490 = vld [vmem:[#allocation11 + $0x170] sm:$0xf]
    %v4491 = vld [vmem:[#allocation11 + $0x174] sm:$0xf]
    %v4492 = vld [vmem:[#allocation11 + $0x178] sm:$0xf]
    %v4493 = vld [vmem:[#allocation11 + $0x17c] sm:$0xf]
    %v4494 = vld [vmem:[#allocation11 + $0x180] sm:$0xf]
    %v4495 = vld [vmem:[#allocation11 + $0x184] sm:$0xf]
    %v4496 = vld [vmem:[#allocation11 + $0x188] sm:$0xf]
    %v4497 = vld [vmem:[#allocation11 + $0x18c] sm:$0xf]
    %v4498 = vld [vmem:[#allocation11 + $0x190] sm:$0xf]
    %v4499 = vld [vmem:[#allocation11 + $0x194] sm:$0xf]
    %v4500 = vld [vmem:[#allocation11 + $0x198] sm:$0xf]
    %v4501 = vld [vmem:[#allocation11 + $0x19c] sm:$0xf]
    %v4502 = vld [vmem:[#allocation11 + $0x1a0] sm:$0xf]
    %v4503 = vld [vmem:[#allocation11 + $0x1a4] sm:$0xf]
    %v4504 = vld [vmem:[#allocation11 + $0x1a8] sm:$0xf]
    %v4505 = vld [vmem:[#allocation11 + $0x1ac] sm:$0xf]
    %v4506 = vld [vmem:[#allocation11 + $0x1b0] sm:$0xf]
    %v4507 = vld [vmem:[#allocation11 + $0x1b4] sm:$0xf]
    %v4508 = vld [vmem:[#allocation11 + $0x1b8] sm:$0xf]
    %v4509 = vld [vmem:[#allocation11 + $0x1bc] sm:$0xf]
    %v4510 = vld [vmem:[#allocation11 + $0x1c0] sm:$0xf]
    %v4511 = vld [vmem:[#allocation11 + $0x1c4] sm:$0xf]
    %v4512 = vld [vmem:[#allocation11 + $0x1c8] sm:$0xf]
    %v4513 = vld [vmem:[#allocation11 + $0x1cc] sm:$0xf]
    %v4514 = vld [vmem:[#allocation11 + $0x1d0] sm:$0xf]
    %v4515 = vld [vmem:[#allocation11 + $0x1d4] sm:$0xf]
    %v4516 = vld [vmem:[#allocation11 + $0x1d8] sm:$0xf]
    %v4517 = vld [vmem:[#allocation11 + $0x1dc] sm:$0xf]
    %v4518 = vld [vmem:[#allocation11 + $0x1e0] sm:$0xf]
    %v4519 = vld [vmem:[#allocation11 + $0x1e4] sm:$0xf]
    %v4520 = vld [vmem:[#allocation11 + $0x1e8] sm:$0xf]
    %v4521 = vld [vmem:[#allocation11 + $0x1ec] sm:$0xf]
    %v4522 = vld [vmem:[#allocation11 + $0x1f0] sm:$0xf]
    %v4523 = vld [vmem:[#allocation11 + $0x1f4] sm:$0xf]
    %v4524 = vld [vmem:[#allocation11 + $0x1f8] sm:$0xf]
    %v4525 = vld [vmem:[#allocation11 + $0x1fc] sm:$0xf]
    %v4526 = vld [vmem:[#allocation13] sm:$0x1]
    %v4528 = vperm.slane %v4526, 0
    %v4658 = vunpack.c.l.b16 %v4398
    %v4659 = vunpack.c.l.b16 %v4399
    %v4660 = vunpack.c.l.b16 %v4400
    %v4661 = vunpack.c.l.b16 %v4401
    %v4662 = vunpack.c.l.b16 %v4402
    %v4663 = vunpack.c.l.b16 %v4403
    %v4664 = vunpack.c.l.b16 %v4404
    %v4665 = vunpack.c.l.b16 %v4405
    %v4666 = vunpack.c.l.b16 %v4406
    %v4667 = vunpack.c.l.b16 %v4407
    %v4668 = vunpack.c.l.b16 %v4408
    %v4669 = vunpack.c.l.b16 %v4409
    %v4670 = vunpack.c.l.b16 %v4410
    %v4671 = vunpack.c.l.b16 %v4411
    %v4672 = vunpack.c.l.b16 %v4412
    %v4673 = vunpack.c.l.b16 %v4413
    %v4674 = vunpack.c.l.b16 %v4414
    %v4675 = vunpack.c.l.b16 %v4415
    %v4676 = vunpack.c.l.b16 %v4416
    %v4677 = vunpack.c.l.b16 %v4417
    %v4678 = vunpack.c.l.b16 %v4418
    %v4679 = vunpack.c.l.b16 %v4419
    %v4680 = vunpack.c.l.b16 %v4420
    %v4681 = vunpack.c.l.b16 %v4421
    %v4682 = vunpack.c.l.b16 %v4422
    %v4683 = vunpack.c.l.b16 %v4423
    %v4684 = vunpack.c.l.b16 %v4424
    %v4685 = vunpack.c.l.b16 %v4425
    %v4686 = vunpack.c.l.b16 %v4426
    %v4687 = vunpack.c.l.b16 %v4427
    %v4688 = vunpack.c.l.b16 %v4428
    %v4689 = vunpack.c.l.b16 %v4429
    %v4690 = vunpack.c.l.b16 %v4430
    %v4691 = vunpack.c.l.b16 %v4431
    %v4692 = vunpack.c.l.b16 %v4432
    %v4693 = vunpack.c.l.b16 %v4433
    %v4694 = vunpack.c.l.b16 %v4434
    %v4695 = vunpack.c.l.b16 %v4435
    %v4696 = vunpack.c.l.b16 %v4436
    %v4697 = vunpack.c.l.b16 %v4437
    %v4698 = vunpack.c.l.b16 %v4438
    %v4699 = vunpack.c.l.b16 %v4439
    %v4700 = vunpack.c.l.b16 %v4440
    %v4701 = vunpack.c.l.b16 %v4441
    %v4702 = vunpack.c.l.b16 %v4442
    %v4703 = vunpack.c.l.b16 %v4443
    %v4704 = vunpack.c.l.b16 %v4444
    %v4705 = vunpack.c.l.b16 %v4445
    %v4706 = vunpack.c.l.b16 %v4446
    %v4707 = vunpack.c.l.b16 %v4447
    %v4708 = vunpack.c.l.b16 %v4448
    %v4709 = vunpack.c.l.b16 %v4449
    %v4710 = vunpack.c.l.b16 %v4450
    %v4711 = vunpack.c.l.b16 %v4451
    %v4712 = vunpack.c.l.b16 %v4452
    %v4713 = vunpack.c.l.b16 %v4453
    %v4714 = vunpack.c.l.b16 %v4454
    %v4715 = vunpack.c.l.b16 %v4455
    %v4716 = vunpack.c.l.b16 %v4456
    %v4717 = vunpack.c.l.b16 %v4457
    %v4718 = vunpack.c.l.b16 %v4458
    %v4719 = vunpack.c.l.b16 %v4459
    %v4720 = vunpack.c.l.b16 %v4460
    %v4721 = vunpack.c.l.b16 %v4461
    %v4722 = vunpack.c.l.b16 %v4462
    %v4723 = vunpack.c.l.b16 %v4463
    %v4724 = vunpack.c.l.b16 %v4464
    %v4725 = vunpack.c.l.b16 %v4465
    %v4726 = vunpack.c.l.b16 %v4466
    %v4727 = vunpack.c.l.b16 %v4467
    %v4728 = vunpack.c.l.b16 %v4468
    %v4729 = vunpack.c.l.b16 %v4469
    %v4730 = vunpack.c.l.b16 %v4470
    %v4731 = vunpack.c.l.b16 %v4471
    %v4732 = vunpack.c.l.b16 %v4472
    %v4733 = vunpack.c.l.b16 %v4473
    %v4734 = vunpack.c.l.b16 %v4474
    %v4735 = vunpack.c.l.b16 %v4475
    %v4736 = vunpack.c.l.b16 %v4476
    %v4737 = vunpack.c.l.b16 %v4477
    %v4738 = vunpack.c.l.b16 %v4478
    %v4739 = vunpack.c.l.b16 %v4479
    %v4740 = vunpack.c.l.b16 %v4480
    %v4741 = vunpack.c.l.b16 %v4481
    %v4742 = vunpack.c.l.b16 %v4482
    %v4743 = vunpack.c.l.b16 %v4483
    %v4744 = vunpack.c.l.b16 %v4484
    %v4745 = vunpack.c.l.b16 %v4485
    %v4746 = vunpack.c.l.b16 %v4486
    %v4747 = vunpack.c.l.b16 %v4487
    %v4748 = vunpack.c.l.b16 %v4488
    %v4749 = vunpack.c.l.b16 %v4489
    %v4750 = vunpack.c.l.b16 %v4490
    %v4751 = vunpack.c.l.b16 %v4491
    %v4752 = vunpack.c.l.b16 %v4492
    %v4753 = vunpack.c.l.b16 %v4493
    %v4754 = vunpack.c.l.b16 %v4494
    %v4755 = vunpack.c.l.b16 %v4495
    %v4756 = vunpack.c.l.b16 %v4496
    %v4757 = vunpack.c.l.b16 %v4497
    %v4758 = vunpack.c.l.b16 %v4498
    %v4759 = vunpack.c.l.b16 %v4499
    %v4760 = vunpack.c.l.b16 %v4500
    %v4761 = vunpack.c.l.b16 %v4501
    %v4762 = vunpack.c.l.b16 %v4502
    %v4763 = vunpack.c.l.b16 %v4503
    %v4764 = vunpack.c.l.b16 %v4504
    %v4765 = vunpack.c.l.b16 %v4505
    %v4766 = vunpack.c.l.b16 %v4506
    %v4767 = vunpack.c.l.b16 %v4507
    %v4768 = vunpack.c.l.b16 %v4508
    %v4769 = vunpack.c.l.b16 %v4509
    %v4770 = vunpack.c.l.b16 %v4510
    %v4771 = vunpack.c.l.b16 %v4511
    %v4772 = vunpack.c.l.b16 %v4512
    %v4773 = vunpack.c.l.b16 %v4513
    %v4774 = vunpack.c.l.b16 %v4514
    %v4775 = vunpack.c.l.b16 %v4515
    %v4776 = vunpack.c.l.b16 %v4516
    %v4777 = vunpack.c.l.b16 %v4517
    %v4778 = vunpack.c.l.b16 %v4518
    %v4779 = vunpack.c.l.b16 %v4519
    %v4780 = vunpack.c.l.b16 %v4520
    %v4781 = vunpack.c.l.b16 %v4521
    %v4782 = vunpack.c.l.b16 %v4522
    %v4783 = vunpack.c.l.b16 %v4523
    %v4784 = vunpack.c.l.b16 %v4524
    %v4785 = vunpack.c.l.b16 %v4525
    %v4786 = vpack.c.b16 %v4659, %v4658
    %v4787 = vpack.c.b16 %v4661, %v4660
    %v4788 = vpack.c.b16 %v4663, %v4662
    %v4789 = vpack.c.b16 %v4665, %v4664
    %v4790 = vpack.c.b16 %v4667, %v4666
    %v4791 = vpack.c.b16 %v4669, %v4668
    %v4792 = vpack.c.b16 %v4671, %v4670
    %v4793 = vpack.c.b16 %v4673, %v4672
    %v4794 = vpack.c.b16 %v4675, %v4674
    %v4795 = vpack.c.b16 %v4677, %v4676
    %v4796 = vpack.c.b16 %v4679, %v4678
    %v4797 = vpack.c.b16 %v4681, %v4680
    %v4798 = vpack.c.b16 %v4683, %v4682
    %v4799 = vpack.c.b16 %v4685, %v4684
    %v4800 = vpack.c.b16 %v4687, %v4686
    %v4801 = vpack.c.b16 %v4689, %v4688
    %v4802 = vpack.c.b16 %v4691, %v4690
    %v4803 = vpack.c.b16 %v4693, %v4692
    %v4804 = vpack.c.b16 %v4695, %v4694
    %v4805 = vpack.c.b16 %v4697, %v4696
    %v4806 = vpack.c.b16 %v4699, %v4698
    %v4807 = vpack.c.b16 %v4701, %v4700
    %v4808 = vpack.c.b16 %v4703, %v4702
    %v4809 = vpack.c.b16 %v4705, %v4704
    %v4810 = vpack.c.b16 %v4707, %v4706
    %v4811 = vpack.c.b16 %v4709, %v4708
    %v4812 = vpack.c.b16 %v4711, %v4710
    %v4813 = vpack.c.b16 %v4713, %v4712
    %v4814 = vpack.c.b16 %v4715, %v4714
    %v4815 = vpack.c.b16 %v4717, %v4716
    %v4816 = vpack.c.b16 %v4719, %v4718
    %v4817 = vpack.c.b16 %v4721, %v4720
    %v4818 = vpack.c.b16 %v4723, %v4722
    %v4819 = vpack.c.b16 %v4725, %v4724
    %v4820 = vpack.c.b16 %v4727, %v4726
    %v4821 = vpack.c.b16 %v4729, %v4728
    %v4822 = vpack.c.b16 %v4731, %v4730
    %v4823 = vpack.c.b16 %v4733, %v4732
    %v4824 = vpack.c.b16 %v4735, %v4734
    %v4825 = vpack.c.b16 %v4737, %v4736
    %v4826 = vpack.c.b16 %v4739, %v4738
    %v4827 = vpack.c.b16 %v4741, %v4740
    %v4828 = vpack.c.b16 %v4743, %v4742
    %v4829 = vpack.c.b16 %v4745, %v4744
    %v4830 = vpack.c.b16 %v4747, %v4746
    %v4831 = vpack.c.b16 %v4749, %v4748
    %v4832 = vpack.c.b16 %v4751, %v4750
    %v4833 = vpack.c.b16 %v4753, %v4752
    %v4834 = vpack.c.b16 %v4755, %v4754
    %v4835 = vpack.c.b16 %v4757, %v4756
    %v4836 = vpack.c.b16 %v4759, %v4758
    %v4837 = vpack.c.b16 %v4761, %v4760
    %v4838 = vpack.c.b16 %v4763, %v4762
    %v4839 = vpack.c.b16 %v4765, %v4764
    %v4840 = vpack.c.b16 %v4767, %v4766
    %v4841 = vpack.c.b16 %v4769, %v4768
    %v4842 = vpack.c.b16 %v4771, %v4770
    %v4843 = vpack.c.b16 %v4773, %v4772
    %v4844 = vpack.c.b16 %v4775, %v4774
    %v4845 = vpack.c.b16 %v4777, %v4776
    %v4846 = vpack.c.b16 %v4779, %v4778
    %v4847 = vpack.c.b16 %v4781, %v4780
    %v4848 = vpack.c.b16 %v4783, %v4782
    %v4849 = vpack.c.b16 %v4785, %v4784
    %4914 = vmatpush.bf16.msra.mxu0 %v4793
    %4915 = vmatpush.bf16.msra.mxu0 %v4792
    %4916 = vmatpush.bf16.msra.mxu0 %v4791
    %4917 = vmatpush.bf16.msra.mxu0 %v4790
    %4918 = vmatpush.bf16.msra.mxu0 %v4789
    %4919 = vmatpush.bf16.msra.mxu0 %v4788
    %4920 = vmatpush.bf16.msra.mxu0 %v4787
    %4921 = vmatpush.bf16.msra.mxu0 %v4786
    %4922 = vmatmul.bf16.gmra.mxu0 %v4390
    %v4923 = vpop.f32.mrf.mxu0
    %v4924 = vadd.f32 %v4528, %v4923
    %v4925 = vpop.f32.mrf.mxu0
    %v4926 = vadd.f32 %v4528, %v4925
    %4927 = vdwg.mxu0
    %4928 = vmatpush.bf16.msra.mxu0 %v4801
    %4929 = vmatpush.bf16.msra.mxu0 %v4800
    %4930 = vmatpush.bf16.msra.mxu0 %v4799
    %4931 = vmatpush.bf16.msra.mxu0 %v4798
    %4932 = vmatpush.bf16.msra.mxu0 %v4797
    %4933 = vmatpush.bf16.msra.mxu0 %v4796
    %4934 = vmatpush.bf16.msra.mxu0 %v4795
    %4935 = vmatpush.bf16.msra.mxu0 %v4794
    %4936 = vmatmul.bf16.gmra.mxu0 %v4391
    %v4937 = vpop.f32.mrf.mxu0
    %v4938 = vadd.f32 %v4924, %v4937
    %v4939 = vpop.f32.mrf.mxu0
    %v4940 = vadd.f32 %v4926, %v4939
    %4941 = vdwg.mxu0
    %4942 = vmatpush.bf16.msra.mxu0 %v4809
    %4943 = vmatpush.bf16.msra.mxu0 %v4808
    %4944 = vmatpush.bf16.msra.mxu0 %v4807
    %4945 = vmatpush.bf16.msra.mxu0 %v4806
    %4946 = vmatpush.bf16.msra.mxu0 %v4805
    %4947 = vmatpush.bf16.msra.mxu0 %v4804
    %4948 = vmatpush.bf16.msra.mxu0 %v4803
    %4949 = vmatpush.bf16.msra.mxu0 %v4802
    %4950 = vmatmul.bf16.gmra.mxu0 %v4392
    %v4951 = vpop.f32.mrf.mxu0
    %v4952 = vadd.f32 %v4938, %v4951
    %v4953 = vpop.f32.mrf.mxu0
    %v4954 = vadd.f32 %v4940, %v4953
    %4955 = vdwg.mxu0
    %4956 = vmatpush.bf16.msra.mxu0 %v4817
    %4957 = vmatpush.bf16.msra.mxu0 %v4816
    %4958 = vmatpush.bf16.msra.mxu0 %v4815
    %4959 = vmatpush.bf16.msra.mxu0 %v4814
    %4960 = vmatpush.bf16.msra.mxu0 %v4813
    %4961 = vmatpush.bf16.msra.mxu0 %v4812
    %4962 = vmatpush.bf16.msra.mxu0 %v4811
    %4963 = vmatpush.bf16.msra.mxu0 %v4810
    %4964 = vmatmul.bf16.gmra.mxu0 %v4393
    %v4965 = vpop.f32.mrf.mxu0
    %v4966 = vadd.f32 %v4952, %v4965
    %v4967 = vpop.f32.mrf.mxu0
    %v4968 = vadd.f32 %v4954, %v4967
    %4969 = vdwg.mxu0
    %4970 = vmatpush.bf16.msra.mxu0 %v4825
    %4971 = vmatpush.bf16.msra.mxu0 %v4824
    %4972 = vmatpush.bf16.msra.mxu0 %v4823
    %4973 = vmatpush.bf16.msra.mxu0 %v4822
    %4974 = vmatpush.bf16.msra.mxu0 %v4821
    %4975 = vmatpush.bf16.msra.mxu0 %v4820
    %4976 = vmatpush.bf16.msra.mxu0 %v4819
    %4977 = vmatpush.bf16.msra.mxu0 %v4818
    %4978 = vmatmul.bf16.gmra.mxu0 %v4394
    %v4979 = vpop.f32.mrf.mxu0
    %v4980 = vadd.f32 %v4966, %v4979
    %v4981 = vpop.f32.mrf.mxu0
    %v4982 = vadd.f32 %v4968, %v4981
    %4983 = vdwg.mxu0
    %4984 = vmatpush.bf16.msra.mxu0 %v4833
    %4985 = vmatpush.bf16.msra.mxu0 %v4832
    %4986 = vmatpush.bf16.msra.mxu0 %v4831
    %4987 = vmatpush.bf16.msra.mxu0 %v4830
    %4988 = vmatpush.bf16.msra.mxu0 %v4829
    %4989 = vmatpush.bf16.msra.mxu0 %v4828
    %4990 = vmatpush.bf16.msra.mxu0 %v4827
    %4991 = vmatpush.bf16.msra.mxu0 %v4826
    %4992 = vmatmul.bf16.gmra.mxu0 %v4395
    %v4993 = vpop.f32.mrf.mxu0
    %v4994 = vadd.f32 %v4980, %v4993
    %v4995 = vpop.f32.mrf.mxu0
    %v4996 = vadd.f32 %v4982, %v4995
    %4997 = vdwg.mxu0
    %4998 = vmatpush.bf16.msra.mxu0 %v4841
    %4999 = vmatpush.bf16.msra.mxu0 %v4840
    %5000 = vmatpush.bf16.msra.mxu0 %v4839
    %5001 = vmatpush.bf16.msra.mxu0 %v4838
    %5002 = vmatpush.bf16.msra.mxu0 %v4837
    %5003 = vmatpush.bf16.msra.mxu0 %v4836
    %5004 = vmatpush.bf16.msra.mxu0 %v4835
    %5005 = vmatpush.bf16.msra.mxu0 %v4834
    %5006 = vmatmul.bf16.gmra.mxu0 %v4396
    %v5007 = vpop.f32.mrf.mxu0
    %v5008 = vadd.f32 %v4994, %v5007
    %v5009 = vpop.f32.mrf.mxu0
    %v5010 = vadd.f32 %v4996, %v5009
    %5011 = vdwg.mxu0
    %5012 = vmatpush.bf16.msra.mxu0 %v4849
    %5013 = vmatpush.bf16.msra.mxu0 %v4848
    %5014 = vmatpush.bf16.msra.mxu0 %v4847
    %5015 = vmatpush.bf16.msra.mxu0 %v4846
    %5016 = vmatpush.bf16.msra.mxu0 %v4845
    %5017 = vmatpush.bf16.msra.mxu0 %v4844
    %5018 = vmatpush.bf16.msra.mxu0 %v4843
    %5019 = vmatpush.bf16.msra.mxu0 %v4842
    %5020 = vmatmul.bf16.gmra.mxu0 %v4397
    %v5021 = vpop.f32.mrf.mxu0
    %v5022 = vadd.f32 %v5008, %v5021
    %v5023 = vpop.f32.mrf.mxu0
    %v5024 = vadd.f32 %v5010, %v5023
    %5025 = vdwg.mxu0
    %v5026 = vxor.u32 %v5022, 2147483648
    %v5027 = vxor.u32 %v5024, 2147483648
    %v5028 = vmul.f32 %v5026, 1.442695
    %v5029 = vpow.pop %v5028
    %v5030 = vmul.f32 %v5027, 1.442695
    %v5031 = vpow.pop %v5030
    %v5032 = vadd.f32 %v5029, 1.0
    %v5033 = vadd.f32 %v5031, 1.0
    %v5034 = vrcp.pop %v5032
    %v5035 = vmul.f32 %v5032, %v5034
    %v5036 = vsub.f32 1.0, %v5035
    %v5037 = vmul.f32 %v5034, %v5036
    %v5038 = vadd.f32 %v5034, %v5037
    %vm5039 = vweird.f32 %v5032
    %vm5040 = vweird.f32 %v5034
    %vm5041 = vmor %vm5039, %vm5040
    %v5042 = vsel %vm5041, %v5034, %v5038
    %v5043 = vand.u32 2147483647, %v5032
    %vm5044 = vcmp.eq.f32.partialorder %v5043, 8.507059e+37
    %v5045 = vand.u32 %v5032, 2147483648
    %v5046 = vor.u32 1.1754944e-38, %v5045
    %v5047 = vsel %vm5044, %v5046, %v5042
    %v5048 = vmul.f32 1.0, %v5047
    %v5049 = vrcp.pop %v5033
    %v5050 = vmul.f32 %v5033, %v5049
    %v5051 = vsub.f32 1.0, %v5050
    %v5052 = vmul.f32 %v5049, %v5051
    %v5053 = vadd.f32 %v5049, %v5052
    %vm5054 = vweird.f32 %v5033
    %vm5055 = vweird.f32 %v5049
    %vm5056 = vmor %vm5054, %vm5055
    %v5057 = vsel %vm5056, %v5049, %v5053
    %v5058 = vand.u32 2147483647, %v5033
    %vm5059 = vcmp.eq.f32.partialorder %v5058, 8.507059e+37
    %v5060 = vand.u32 %v5033, 2147483648
    %v5061 = vor.u32 1.1754944e-38, %v5060
    %v5062 = vsel %vm5059, %v5061, %v5057
    %v5063 = vmul.f32 1.0, %v5062
    %5064 = vst [vmem:[#allocation14] sm:$0xff] %v5048
    %5065 = vst [vmem:[#allocation14 + $0x8] sm:$0xff] %v5063
    // Predicated region
    $region58: #{tpu_custom_call.1} parent=1 // pred_check
      _
    $region59: #{tpu_custom_call.1} parent=1 // pred_check_branch
      %5067 = sbr.rel (0) target = $region61
    $region60: #{tpu_custom_call.1} parent=1 // pred_region
      %5069 = vsyncadd [#allocation4], 0
      %s5070 = sshll.u32 [#allocation14], 4
      %s5071 = int_to_ptr.vmem [resolvable:$true] %s5070
      %s5072 = sshll.u32 %s7, 4
      %s5073 = int_to_ptr.hbm [resolvable:$true] %s5072
      %5078 = dma.vmem_to_hbm [thread:$0]  %s5071, 256, %s5073, [#allocation4], 128, 128, 8
    $region61: #{tpu_custom_call.1} parent=1 // pred_fallthru
      _
    // Predicated region
    $region62: #{tpu_custom_call.1} parent=1 // pred_check
      _
    $region63: #{tpu_custom_call.1} parent=1 // pred_check_branch
      %5080 = sbr.rel (0) target = $region65
    $region64: #{tpu_custom_call.1} parent=1 // pred_region
      %5082 = dma.done [#allocation4], 256
    $region65: #{tpu_custom_call.1} parent=1 // pred_fallthru
      _
    %5083 = vsyncpa [#allocation3], 1
    %5084 = vsyncpa [#allocation6], 1
    %5085 = vsyncpa [#allocation9], 1
    %5086 = vsyncpa [#allocation12], 1
    %5087 = vsyncpa [#allocation4], 1

</llo_original>
